<compile_context>
chip_gen: v7x
topology: tpu7x:2x2x1
jax: 0.10.0
libtpu: 0.0.40
codegen_flags: <defaults>
</compile_context>

<pallas_src>
import jax
import jax.numpy as jnp
import numpy as np
from jax.experimental import pallas as pl
from jax.experimental.pallas import tpu as pltpu

INPUT_SIZE = 128
HIDDEN_SIZE = 32
NUM_LAYERS = 4
OUTPUT_SIZE = 1


# ----------------------------------------------------------------------------
# Fused Pallas kernel
# ----------------------------------------------------------------------------
def _lstm_cell(gates, c):
    """gates: (B, 4H) pre-activation (order i, f, g, o); c: (B, H)."""
    H = c.shape[-1]
    # One sigmoid pass + one tanh pass over the whole (B, 4H) vreg (EUP slot),
    # then select the tanh lanes (g gate) with a lane-index mask.
    lane = jax.lax.broadcasted_iota(jnp.int32, gates.shape, dimension=1)
    is_g = (lane >= 2 * H) & (lane < 3 * H)
    act = jnp.where(is_g, jnp.tanh(gates), jax.nn.sigmoid(gates))
    i_g = act[:, 0 * H:1 * H]
    f_g = act[:, 1 * H:2 * H]
    g_g = act[:, 2 * H:3 * H]
    o_g = act[:, 3 * H:4 * H]
    c_new = f_g * c + i_g * g_g
    h_new = o_g * jnp.tanh(c_new)
    return h_new, c_new


def fused_lsmt_kernel(x_ref,
                      wih0_ref, whh0_ref, b0_ref,
                      wih1_ref, whh1_ref, b1_ref,
                      wih2_ref, whh2_ref, b2_ref,
                      wih3_ref, whh3_ref, b3_ref,
                      wfc_ref, bfc_ref,
                      out_ref,
                      xg_scr, seq_scr):
    """Whole model in one kernel invocation.

    x_ref:    (B, T, D)      batch_first input (native layout, no transpose)
    wih*_ref: (Din, 4H)      W_ih^T per layer
    whh*_ref: (H, 4H)        W_hh^T per layer
    b*_ref:   (1, 4H)        b_ih + b_hh per layer
    wfc_ref:  (1, H)         FC weight (output_size == 1)
    bfc_ref:  (1, 1)         FC bias
    out_ref:  (B, 1)
    xg_scr:   (T*B, 4H)      VMEM scratch: hoisted input projection of a layer
    seq_scr:  (T*B, H)       VMEM scratch: hidden sequence of a layer (time-major)
    """
    B, T, D = x_ref.shape
    H = HIDDEN_SIZE

    # ---------------- layer 0 ----------------
    # Hoisted input projection for the whole sequence: (B*T, D) @ (D, 4H).
    # Rows are batch-major (row = b*T + t); free reshape of the (B, T, D) load.
    x_flat = x_ref[...].reshape(B * T, D)
    xg_scr[...] = (
        jnp.dot(x_flat, wih0_ref[...], preferred_element_type=jnp.float32)
        + b0_ref[...]
    )

    h = jnp.zeros((B, H), jnp.float32)
    c = jnp.zeros((B, H), jnp.float32)
    for t in range(T):  # static unroll (T = 8); h/c carried as values
        # Rows {b*T + t} for all b: strided sublane read (start=t, stride=T).
        x_t = xg_scr[pl.ds(t, B, stride=T), :]                     # (B, 4H)
        gates = x_t + jnp.dot(h, whh0_ref[...],
                              preferred_element_type=jnp.float32)
        h, c = _lstm_cell(gates, c)
        seq_scr[t * B:(t + 1) * B, :] = h        # time-major hidden sequence

    # ---------------- layers 1..3 ----------------
    upper_layers = ((wih1_ref, whh1_ref, b1_ref),
                    (wih2_ref, whh2_ref, b2_ref),
                    (wih3_ref, whh3_ref, b3_ref))
    for li, (wih_ref, whh_ref, b_ref) in enumerate(upper_layers):
        is_last = li == len(upper_layers) - 1
        # Hoisted input projection over the previous layer's full sequence:
        # (T*B, H) @ (H, 4H); rows are time-major (row = t*B + b).
        seq = seq_scr[...]
        xg_scr[...] = (
            jnp.dot(seq, wih_ref[...], preferred_element_type=jnp.float32)
            + b_ref[...]
        )
        h = jnp.zeros((B, H), jnp.float32)
        c = jnp.zeros((B, H), jnp.float32)
        for t in range(T):
            x_t = xg_scr[t * B:(t + 1) * B, :]                     # (B, 4H)
            gates = x_t + jnp.dot(h, whh_ref[...],
                                  preferred_element_type=jnp.float32)
            h, c = _lstm_cell(gates, c)
            if not is_last:
                seq_scr[t * B:(t + 1) * B, :] = h

    # ---------------- FC head on last timestep ----------------
    # (B, H) * (1, H) -> lane reduce -> (B, 1): VPU + XLU, no 1-wide MXU push.
    out_ref[...] = (
        jnp.sum(h * wfc_ref[...], axis=-1, keepdims=True) + bfc_ref[...]
    )


# ----------------------------------------------------------------------------
# Wrapper
# ----------------------------------------------------------------------------
@jax.jit
def lsmt_model_forward(x, params):
    """x: (B, T, input_size), matching the PyTorch batch_first input."""
    B, T, _ = x.shape
    H = HIDDEN_SIZE

    args = [x]
    for layer in params["lstm"]:
        args += [layer["wih_t"], layer["whh_t"], layer["bias"]]
    args += [params["fc_w"], params["fc_b"]]

    vmem = pl.BlockSpec(memory_space=pltpu.MemorySpace.VMEM)
    return pl.pallas_call(
        fused_lsmt_kernel,
        out_shape=jax.ShapeDtypeStruct((B, OUTPUT_SIZE), jnp.float32),
        in_specs=[vmem] * len(args),
        out_specs=pl.BlockSpec(memory_space=pltpu.MemorySpace.VMEM),
        scratch_shapes=[
            pltpu.VMEM((T * B, 4 * H), jnp.float32),  # hoisted gate projection
            pltpu.VMEM((T * B, H), jnp.float32),      # inter-layer hidden seq
        ],
    )(*args)


# ----------------------------------------------------------------------------
# Deterministic parameter init (PyTorch-style uniform(-1/sqrt(H), 1/sqrt(H)))
# ----------------------------------------------------------------------------
def init_params(key):
    k = 1.0 / np.sqrt(HIDDEN_SIZE)
    layers = []
    for layer_idx in range(NUM_LAYERS):
        in_dim = INPUT_SIZE if layer_idx == 0 else HIDDEN_SIZE
        key, k1, k2, k3, k4 = jax.random.split(key, 5)
        w_ih = jax.random.uniform(k1, (4 * HIDDEN_SIZE, in_dim), jnp.float32, -k, k)
        w_hh = jax.random.uniform(k2, (4 * HIDDEN_SIZE, HIDDEN_SIZE), jnp.float32, -k, k)
        b_ih = jax.random.uniform(k3, (4 * HIDDEN_SIZE,), jnp.float32, -k, k)
        b_hh = jax.random.uniform(k4, (4 * HIDDEN_SIZE,), jnp.float32, -k, k)
        layers.append(
            dict(
                wih_t=jnp.transpose(w_ih),                 # (in_dim, 4H)
                whh_t=jnp.transpose(w_hh),                 # (H, 4H)
                bias=(b_ih + b_hh).reshape(1, 4 * HIDDEN_SIZE),
            )
        )
    key, k5, k6 = jax.random.split(key, 3)
    w_fc = jax.random.uniform(k5, (OUTPUT_SIZE, HIDDEN_SIZE), jnp.float32, -k, k)
    b_fc = jax.random.uniform(k6, (OUTPUT_SIZE,), jnp.float32, -k, k)
    return dict(
        lstm=layers,
        fc_w=w_fc,                                         # (1, H)
        fc_b=b_fc.reshape(1, OUTPUT_SIZE),                 # (1, 1)
    )


# ----------------------------------------------------------------------------
# Pure-JAX reference (same math via lax.scan) for a correctness sanity check
# ----------------------------------------------------------------------------
def reference_forward(x, params):
    x_seq = jnp.transpose(x, (1, 0, 2))   # (T, B, D)
    B = x.shape[0]
    hp = jax.lax.Precision.HIGHEST
    for layer in params["lstm"]:
        def step(carry, x_t, layer=layer):
            h, c = carry
            gates = (jnp.dot(x_t, layer["wih_t"], precision=hp)
                     + jnp.dot(h, layer["whh_t"], precision=hp)
                     + layer["bias"])
            H = HIDDEN_SIZE
            i = jax.nn.sigmoid(gates[:, 0 * H:1 * H])
            f = jax.nn.sigmoid(gates[:, 1 * H:2 * H])
            g = jnp.tanh(gates[:, 2 * H:3 * H])
            o = jax.nn.sigmoid(gates[:, 3 * H:4 * H])
            c = f * c + i * g
            h = o * jnp.tanh(c)
            return (h, c), h

        init = (jnp.zeros((B, HIDDEN_SIZE)), jnp.zeros((B, HIDDEN_SIZE)))
        _, x_seq = jax.lax.scan(step, init, x_seq)
    h_last = x_seq[-1]
    return jnp.sum(h_last * params["fc_w"], axis=-1, keepdims=True) + params["fc_b"]


if __name__ == "__main__":
    key = jax.random.PRNGKey(0)
    pkey, xkey = jax.random.split(key)
    params = init_params(pkey)

    B, T = 2, 8
    x = jax.random.normal(xkey, (B, T, INPUT_SIZE), dtype=jnp.float32)

    out = lsmt_model_forward(x, params)
    out = jax.block_until_ready(out)
    assert out.shape == (B, OUTPUT_SIZE), out.shape

    ref = jax.block_until_ready(reference_forward(x, params))
    np.testing.assert_allclose(np.asarray(out), np.asarray(ref), rtol=2e-5, atol=2e-5)

    print("KERNEL_OK")
</pallas_src>

<mosaic_0001>
module attributes {stable_mosaic.version = 11 : i64} {
  func.func @fused_lsmt_kernel(%arg0: memref<2x8x128xf32, #tpu.memory_space<vmem>>, %arg1: memref<128x128xf32, #tpu.memory_space<vmem>>, %arg2: memref<32x128xf32, #tpu.memory_space<vmem>>, %arg3: memref<1x128xf32, #tpu.memory_space<vmem>>, %arg4: memref<32x128xf32, #tpu.memory_space<vmem>>, %arg5: memref<32x128xf32, #tpu.memory_space<vmem>>, %arg6: memref<1x128xf32, #tpu.memory_space<vmem>>, %arg7: memref<32x128xf32, #tpu.memory_space<vmem>>, %arg8: memref<32x128xf32, #tpu.memory_space<vmem>>, %arg9: memref<1x128xf32, #tpu.memory_space<vmem>>, %arg10: memref<32x128xf32, #tpu.memory_space<vmem>>, %arg11: memref<32x128xf32, #tpu.memory_space<vmem>>, %arg12: memref<1x128xf32, #tpu.memory_space<vmem>>, %arg13: memref<1x32xf32, #tpu.memory_space<vmem>>, %arg14: memref<1x1xf32, #tpu.memory_space<vmem>>, %arg15: memref<2x1xf32, #tpu.memory_space<vmem>>, %arg16: memref<16x128xf32, #tpu.memory_space<vmem>>, %arg17: memref<16x32xf32, #tpu.memory_space<vmem>>) attributes {dimension_semantics = [], scalar_prefetch = 0 : i64, scratch_operands = 2 : i64, tpu.core_type = #tpu.core_type<tc>} {
    %c0 = arith.constant 0 : index
    %c0_0 = arith.constant 0 : index
    %c0_1 = arith.constant 0 : index
    %0 = vector.load %arg0[%c0, %c0_0, %c0_1] : memref<2x8x128xf32, #tpu.memory_space<vmem>>, vector<2x8x128xf32>
    %1 = vector.shape_cast %0 : vector<2x8x128xf32> to vector<16x128xf32>
    %c0_2 = arith.constant 0 : index
    %c0_3 = arith.constant 0 : index
    %2 = vector.load %arg1[%c0_2, %c0_3] : memref<128x128xf32, #tpu.memory_space<vmem>>, vector<128x128xf32>
    %cst = arith.constant dense<0.000000e+00> : vector<16x128xf32>
    %3 = tpu.matmul %1, %2, %cst {dimension_numbers = #tpu.dot_dimension_numbers<[1], [0], [0], [1], [0, 0, 1, 1], [], []>} : vector<16x128xf32>, vector<128x128xf32>, vector<16x128xf32> -> vector<16x128xf32>
    %c0_4 = arith.constant 0 : index
    %c0_5 = arith.constant 0 : index
    %4 = vector.load %arg3[%c0_4, %c0_5] : memref<1x128xf32, #tpu.memory_space<vmem>>, vector<1x128xf32>
    %5 = vector.broadcast %4 : vector<1x128xf32> to vector<16x128xf32>
    %6 = arith.addf %3, %5 : vector<16x128xf32>
    %c0_6 = arith.constant 0 : index
    %c0_7 = arith.constant 0 : index
    %7 = vector.load %arg16[%c0_6, %c0_7] : memref<16x128xf32, #tpu.memory_space<vmem>>, vector<16x128xf32>
    tpu.vector_store %arg16[%c0_6, %c0_7], %6 {strides = array<i32>} : memref<16x128xf32, #tpu.memory_space<vmem>>, vector<16x128xf32>,
    %cst_8 = arith.constant 0.000000e+00 : f32
    %8 = vector.broadcast %cst_8 : f32 to vector<2x32xf32>
    %cst_9 = arith.constant 0.000000e+00 : f32
    %9 = vector.broadcast %cst_9 : f32 to vector<2x32xf32>
    %c0_10 = arith.constant 0 : index
    %c0_11 = arith.constant 0 : index
    %10 = tpu.strided_load %arg16[%c0_10, %c0_11] {strides = array<i32: 8, 1>} : memref<16x128xf32, #tpu.memory_space<vmem>>, vector<2x128xf32>
    %c0_12 = arith.constant 0 : index
    %c0_13 = arith.constant 0 : index
    %11 = vector.load %arg2[%c0_12, %c0_13] : memref<32x128xf32, #tpu.memory_space<vmem>>, vector<32x128xf32>
    %cst_14 = arith.constant dense<0.000000e+00> : vector<2x128xf32>
    %12 = tpu.matmul %8, %11, %cst_14 {dimension_numbers = #tpu.dot_dimension_numbers<[1], [0], [0], [1], [0, 0, 1, 1], [], []>} : vector<2x32xf32>, vector<32x128xf32>, vector<2x128xf32> -> vector<2x128xf32>
    %13 = arith.addf %10, %12 : vector<2x128xf32>
    %14 = tpu.iota {dimensions = array<i32: 1>} : vector<2x128xi32>
    %c64_i32 = arith.constant 64 : i32
    %15 = vector.broadcast %c64_i32 : i32 to vector<2x128xi32>
    %16 = arith.cmpi sge, %14, %15 : vector<2x128xi32>
    %c96_i32 = arith.constant 96 : i32
    %17 = vector.broadcast %c96_i32 : i32 to vector<2x128xi32>
    %18 = arith.cmpi slt, %14, %17 : vector<2x128xi32>
    %19 = arith.andi %16, %18 : vector<2x128xi1>
    %20 = math.tanh %13 : vector<2x128xf32>
    %21 = arith.negf %13 : vector<2x128xf32>
    %22 = math.exp %21 : vector<2x128xf32>
    %cst_15 = arith.constant 1.000000e+00 : f32
    %23 = vector.broadcast %cst_15 : f32 to vector<2x128xf32>
    %24 = arith.addf %23, %22 : vector<2x128xf32>
    %25 = arith.divf %23, %24 : vector<2x128xf32>
    %26 = arith.select %19, %20, %25 : vector<2x128xi1>, vector<2x128xf32>
    %27 = vector.extract_strided_slice %26 {offsets = [0, 0], sizes = [2, 32], strides = [1, 1]} : vector<2x128xf32> to vector<2x32xf32>
    %28 = vector.extract_strided_slice %26 {offsets = [0, 32], sizes = [2, 32], strides = [1, 1]} : vector<2x128xf32> to vector<2x32xf32>
    %29 = vector.extract_strided_slice %26 {offsets = [0, 64], sizes = [2, 32], strides = [1, 1]} : vector<2x128xf32> to vector<2x32xf32>
    %30 = vector.extract_strided_slice %26 {offsets = [0, 96], sizes = [2, 32], strides = [1, 1]} : vector<2x128xf32> to vector<2x32xf32>
    %31 = arith.mulf %28, %9 : vector<2x32xf32>
    %32 = arith.mulf %27, %29 : vector<2x32xf32>
    %33 = arith.addf %31, %32 : vector<2x32xf32>
    %34 = math.tanh %33 : vector<2x32xf32>
    %35 = arith.mulf %30, %34 : vector<2x32xf32>
    %c0_16 = arith.constant 0 : index
    %c0_17 = arith.constant 0 : index
    %36 = vector.load %arg17[%c0_16, %c0_17] : memref<16x32xf32, #tpu.memory_space<vmem>>, vector<2x32xf32>
    tpu.vector_store %arg17[%c0_16, %c0_17], %35 {strides = array<i32>} : memref<16x32xf32, #tpu.memory_space<vmem>>, vector<2x32xf32>,
    %c1 = arith.constant 1 : index
    %c0_18 = arith.constant 0 : index
    %37 = tpu.strided_load %arg16[%c1, %c0_18] {strides = array<i32: 8, 1>} : memref<16x128xf32, #tpu.memory_space<vmem>>, vector<2x128xf32>
    %c0_19 = arith.constant 0 : index
    %c0_20 = arith.constant 0 : index
    %38 = vector.load %arg2[%c0_19, %c0_20] : memref<32x128xf32, #tpu.memory_space<vmem>>, vector<32x128xf32>
    %cst_21 = arith.constant dense<0.000000e+00> : vector<2x128xf32>
    %39 = tpu.matmul %35, %38, %cst_21 {dimension_numbers = #tpu.dot_dimension_numbers<[1], [0], [0], [1], [0, 0, 1, 1], [], []>} : vector<2x32xf32>, vector<32x128xf32>, vector<2x128xf32> -> vector<2x128xf32>
    %40 = arith.addf %37, %39 : vector<2x128xf32>
    %41 = tpu.iota {dimensions = array<i32: 1>} : vector<2x128xi32>
    %c64_i32_22 = arith.constant 64 : i32
    %42 = vector.broadcast %c64_i32_22 : i32 to vector<2x128xi32>
    %43 = arith.cmpi sge, %41, %42 : vector<2x128xi32>
    %c96_i32_23 = arith.constant 96 : i32
    %44 = vector.broadcast %c96_i32_23 : i32 to vector<2x128xi32>
    %45 = arith.cmpi slt, %41, %44 : vector<2x128xi32>
    %46 = arith.andi %43, %45 : vector<2x128xi1>
    %47 = math.tanh %40 : vector<2x128xf32>
    %48 = arith.negf %40 : vector<2x128xf32>
    %49 = math.exp %48 : vector<2x128xf32>
    %cst_24 = arith.constant 1.000000e+00 : f32
    %50 = vector.broadcast %cst_24 : f32 to vector<2x128xf32>
    %51 = arith.addf %50, %49 : vector<2x128xf32>
    %52 = arith.divf %50, %51 : vector<2x128xf32>
    %53 = arith.select %46, %47, %52 : vector<2x128xi1>, vector<2x128xf32>
    %54 = vector.extract_strided_slice %53 {offsets = [0, 0], sizes = [2, 32], strides = [1, 1]} : vector<2x128xf32> to vector<2x32xf32>
    %55 = vector.extract_strided_slice %53 {offsets = [0, 32], sizes = [2, 32], strides = [1, 1]} : vector<2x128xf32> to vector<2x32xf32>
    %56 = vector.extract_strided_slice %53 {offsets = [0, 64], sizes = [2, 32], strides = [1, 1]} : vector<2x128xf32> to vector<2x32xf32>
    %57 = vector.extract_strided_slice %53 {offsets = [0, 96], sizes = [2, 32], strides = [1, 1]} : vector<2x128xf32> to vector<2x32xf32>
    %58 = arith.mulf %55, %33 : vector<2x32xf32>
    %59 = arith.mulf %54, %56 : vector<2x32xf32>
    %60 = arith.addf %58, %59 : vector<2x32xf32>
    %61 = math.tanh %60 : vector<2x32xf32>
    %62 = arith.mulf %57, %61 : vector<2x32xf32>
    %c2 = arith.constant 2 : index
    %c0_25 = arith.constant 0 : index
    %63 = vector.load %arg17[%c2, %c0_25] : memref<16x32xf32, #tpu.memory_space<vmem>>, vector<2x32xf32>
    tpu.vector_store %arg17[%c2, %c0_25], %62 {strides = array<i32>} : memref<16x32xf32, #tpu.memory_space<vmem>>, vector<2x32xf32>,
    %c2_26 = arith.constant 2 : index
    %c0_27 = arith.constant 0 : index
    %64 = tpu.strided_load %arg16[%c2_26, %c0_27] {strides = array<i32: 8, 1>} : memref<16x128xf32, #tpu.memory_space<vmem>>, vector<2x128xf32>
    %c0_28 = arith.constant 0 : index
    %c0_29 = arith.constant 0 : index
    %65 = vector.load %arg2[%c0_28, %c0_29] : memref<32x128xf32, #tpu.memory_space<vmem>>, vector<32x128xf32>
    %cst_30 = arith.constant dense<0.000000e+00> : vector<2x128xf32>
    %66 = tpu.matmul %62, %65, %cst_30 {dimension_numbers = #tpu.dot_dimension_numbers<[1], [0], [0], [1], [0, 0, 1, 1], [], []>} : vector<2x32xf32>, vector<32x128xf32>, vector<2x128xf32> -> vector<2x128xf32>
    %67 = arith.addf %64, %66 : vector<2x128xf32>
    %68 = tpu.iota {dimensions = array<i32: 1>} : vector<2x128xi32>
    %c64_i32_31 = arith.constant 64 : i32
    %69 = vector.broadcast %c64_i32_31 : i32 to vector<2x128xi32>
    %70 = arith.cmpi sge, %68, %69 : vector<2x128xi32>
    %c96_i32_32 = arith.constant 96 : i32
    %71 = vector.broadcast %c96_i32_32 : i32 to vector<2x128xi32>
    %72 = arith.cmpi slt, %68, %71 : vector<2x128xi32>
    %73 = arith.andi %70, %72 : vector<2x128xi1>
    %74 = math.tanh %67 : vector<2x128xf32>
    %75 = arith.negf %67 : vector<2x128xf32>
    %76 = math.exp %75 : vector<2x128xf32>
    %cst_33 = arith.constant 1.000000e+00 : f32
    %77 = vector.broadcast %cst_33 : f32 to vector<2x128xf32>
    %78 = arith.addf %77, %76 : vector<2x128xf32>
    %79 = arith.divf %77, %78 : vector<2x128xf32>
    %80 = arith.select %73, %74, %79 : vector<2x128xi1>, vector<2x128xf32>
    %81 = vector.extract_strided_slice %80 {offsets = [0, 0], sizes = [2, 32], strides = [1, 1]} : vector<2x128xf32> to vector<2x32xf32>
    %82 = vector.extract_strided_slice %80 {offsets = [0, 32], sizes = [2, 32], strides = [1, 1]} : vector<2x128xf32> to vector<2x32xf32>
    %83 = vector.extract_strided_slice %80 {offsets = [0, 64], sizes = [2, 32], strides = [1, 1]} : vector<2x128xf32> to vector<2x32xf32>
    %84 = vector.extract_strided_slice %80 {offsets = [0, 96], sizes = [2, 32], strides = [1, 1]} : vector<2x128xf32> to vector<2x32xf32>
    %85 = arith.mulf %82, %60 : vector<2x32xf32>
    %86 = arith.mulf %81, %83 : vector<2x32xf32>
    %87 = arith.addf %85, %86 : vector<2x32xf32>
    %88 = math.tanh %87 : vector<2x32xf32>
    %89 = arith.mulf %84, %88 : vector<2x32xf32>
    %c4 = arith.constant 4 : index
    %c0_34 = arith.constant 0 : index
    %90 = vector.load %arg17[%c4, %c0_34] : memref<16x32xf32, #tpu.memory_space<vmem>>, vector<2x32xf32>
    tpu.vector_store %arg17[%c4, %c0_34], %89 {strides = array<i32>} : memref<16x32xf32, #tpu.memory_space<vmem>>, vector<2x32xf32>,
    %c3 = arith.constant 3 : index
    %c0_35 = arith.constant 0 : index
    %91 = tpu.strided_load %arg16[%c3, %c0_35] {strides = array<i32: 8, 1>} : memref<16x128xf32, #tpu.memory_space<vmem>>, vector<2x128xf32>
    %c0_36 = arith.constant 0 : index
    %c0_37 = arith.constant 0 : index
    %92 = vector.load %arg2[%c0_36, %c0_37] : memref<32x128xf32, #tpu.memory_space<vmem>>, vector<32x128xf32>
    %cst_38 = arith.constant dense<0.000000e+00> : vector<2x128xf32>
    %93 = tpu.matmul %89, %92, %cst_38 {dimension_numbers = #tpu.dot_dimension_numbers<[1], [0], [0], [1], [0, 0, 1, 1], [], []>} : vector<2x32xf32>, vector<32x128xf32>, vector<2x128xf32> -> vector<2x128xf32>
    %94 = arith.addf %91, %93 : vector<2x128xf32>
    %95 = tpu.iota {dimensions = array<i32: 1>} : vector<2x128xi32>
    %c64_i32_39 = arith.constant 64 : i32
    %96 = vector.broadcast %c64_i32_39 : i32 to vector<2x128xi32>
    %97 = arith.cmpi sge, %95, %96 : vector<2x128xi32>
    %c96_i32_40 = arith.constant 96 : i32
    %98 = vector.broadcast %c96_i32_40 : i32 to vector<2x128xi32>
    %99 = arith.cmpi slt, %95, %98 : vector<2x128xi32>
    %100 = arith.andi %97, %99 : vector<2x128xi1>
    %101 = math.tanh %94 : vector<2x128xf32>
    %102 = arith.negf %94 : vector<2x128xf32>
    %103 = math.exp %102 : vector<2x128xf32>
    %cst_41 = arith.constant 1.000000e+00 : f32
    %104 = vector.broadcast %cst_41 : f32 to vector<2x128xf32>
    %105 = arith.addf %104, %103 : vector<2x128xf32>
    %106 = arith.divf %104, %105 : vector<2x128xf32>
    %107 = arith.select %100, %101, %106 : vector<2x128xi1>, vector<2x128xf32>
    %108 = vector.extract_strided_slice %107 {offsets = [0, 0], sizes = [2, 32], strides = [1, 1]} : vector<2x128xf32> to vector<2x32xf32>
    %109 = vector.extract_strided_slice %107 {offsets = [0, 32], sizes = [2, 32], strides = [1, 1]} : vector<2x128xf32> to vector<2x32xf32>
    %110 = vector.extract_strided_slice %107 {offsets = [0, 64], sizes = [2, 32], strides = [1, 1]} : vector<2x128xf32> to vector<2x32xf32>
    %111 = vector.extract_strided_slice %107 {offsets = [0, 96], sizes = [2, 32], strides = [1, 1]} : vector<2x128xf32> to vector<2x32xf32>
    %112 = arith.mulf %109, %87 : vector<2x32xf32>
    %113 = arith.mulf %108, %110 : vector<2x32xf32>
    %114 = arith.addf %112, %113 : vector<2x32xf32>
    %115 = math.tanh %114 : vector<2x32xf32>
    %116 = arith.mulf %111, %115 : vector<2x32xf32>
    %c6 = arith.constant 6 : index
    %c0_42 = arith.constant 0 : index
    %117 = vector.load %arg17[%c6, %c0_42] : memref<16x32xf32, #tpu.memory_space<vmem>>, vector<2x32xf32>
    tpu.vector_store %arg17[%c6, %c0_42], %116 {strides = array<i32>} : memref<16x32xf32, #tpu.memory_space<vmem>>, vector<2x32xf32>,
    %c4_43 = arith.constant 4 : index
    %c0_44 = arith.constant 0 : index
    %118 = tpu.strided_load %arg16[%c4_43, %c0_44] {strides = array<i32: 8, 1>} : memref<16x128xf32, #tpu.memory_space<vmem>>, vector<2x128xf32>
    %c0_45 = arith.constant 0 : index
    %c0_46 = arith.constant 0 : index
    %119 = vector.load %arg2[%c0_45, %c0_46] : memref<32x128xf32, #tpu.memory_space<vmem>>, vector<32x128xf32>
    %cst_47 = arith.constant dense<0.000000e+00> : vector<2x128xf32>
    %120 = tpu.matmul %116, %119, %cst_47 {dimension_numbers = #tpu.dot_dimension_numbers<[1], [0], [0], [1], [0, 0, 1, 1], [], []>} : vector<2x32xf32>, vector<32x128xf32>, vector<2x128xf32> -> vector<2x128xf32>
    %121 = arith.addf %118, %120 : vector<2x128xf32>
    %122 = tpu.iota {dimensions = array<i32: 1>} : vector<2x128xi32>
    %c64_i32_48 = arith.constant 64 : i32
    %123 = vector.broadcast %c64_i32_48 : i32 to vector<2x128xi32>
    %124 = arith.cmpi sge, %122, %123 : vector<2x128xi32>
    %c96_i32_49 = arith.constant 96 : i32
    %125 = vector.broadcast %c96_i32_49 : i32 to vector<2x128xi32>
    %126 = arith.cmpi slt, %122, %125 : vector<2x128xi32>
    %127 = arith.andi %124, %126 : vector<2x128xi1>
    %128 = math.tanh %121 : vector<2x128xf32>
    %129 = arith.negf %121 : vector<2x128xf32>
    %130 = math.exp %129 : vector<2x128xf32>
    %cst_50 = arith.constant 1.000000e+00 : f32
    %131 = vector.broadcast %cst_50 : f32 to vector<2x128xf32>
    %132 = arith.addf %131, %130 : vector<2x128xf32>
    %133 = arith.divf %131, %132 : vector<2x128xf32>
    %134 = arith.select %127, %128, %133 : vector<2x128xi1>, vector<2x128xf32>
    %135 = vector.extract_strided_slice %134 {offsets = [0, 0], sizes = [2, 32], strides = [1, 1]} : vector<2x128xf32> to vector<2x32xf32>
    %136 = vector.extract_strided_slice %134 {offsets = [0, 32], sizes = [2, 32], strides = [1, 1]} : vector<2x128xf32> to vector<2x32xf32>
    %137 = vector.extract_strided_slice %134 {offsets = [0, 64], sizes = [2, 32], strides = [1, 1]} : vector<2x128xf32> to vector<2x32xf32>
    %138 = vector.extract_strided_slice %134 {offsets = [0, 96], sizes = [2, 32], strides = [1, 1]} : vector<2x128xf32> to vector<2x32xf32>
    %139 = arith.mulf %136, %114 : vector<2x32xf32>
    %140 = arith.mulf %135, %137 : vector<2x32xf32>
    %141 = arith.addf %139, %140 : vector<2x32xf32>
    %142 = math.tanh %141 : vector<2x32xf32>
    %143 = arith.mulf %138, %142 : vector<2x32xf32>
    %c8 = arith.constant 8 : index
    %c0_51 = arith.constant 0 : index
    %144 = vector.load %arg17[%c8, %c0_51] : memref<16x32xf32, #tpu.memory_space<vmem>>, vector<2x32xf32>
    tpu.vector_store %arg17[%c8, %c0_51], %143 {strides = array<i32>} : memref<16x32xf32, #tpu.memory_space<vmem>>, vector<2x32xf32>,
    %c5 = arith.constant 5 : index
    %c0_52 = arith.constant 0 : index
    %145 = tpu.strided_load %arg16[%c5, %c0_52] {strides = array<i32: 8, 1>} : memref<16x128xf32, #tpu.memory_space<vmem>>, vector<2x128xf32>
    %c0_53 = arith.constant 0 : index
    %c0_54 = arith.constant 0 : index
    %146 = vector.load %arg2[%c0_53, %c0_54] : memref<32x128xf32, #tpu.memory_space<vmem>>, vector<32x128xf32>
    %cst_55 = arith.constant dense<0.000000e+00> : vector<2x128xf32>
    %147 = tpu.matmul %143, %146, %cst_55 {dimension_numbers = #tpu.dot_dimension_numbers<[1], [0], [0], [1], [0, 0, 1, 1], [], []>} : vector<2x32xf32>, vector<32x128xf32>, vector<2x128xf32> -> vector<2x128xf32>
    %148 = arith.addf %145, %147 : vector<2x128xf32>
    %149 = tpu.iota {dimensions = array<i32: 1>} : vector<2x128xi32>
    %c64_i32_56 = arith.constant 64 : i32
    %150 = vector.broadcast %c64_i32_56 : i32 to vector<2x128xi32>
    %151 = arith.cmpi sge, %149, %150 : vector<2x128xi32>
    %c96_i32_57 = arith.constant 96 : i32
    %152 = vector.broadcast %c96_i32_57 : i32 to vector<2x128xi32>
    %153 = arith.cmpi slt, %149, %152 : vector<2x128xi32>
    %154 = arith.andi %151, %153 : vector<2x128xi1>
    %155 = math.tanh %148 : vector<2x128xf32>
    %156 = arith.negf %148 : vector<2x128xf32>
    %157 = math.exp %156 : vector<2x128xf32>
    %cst_58 = arith.constant 1.000000e+00 : f32
    %158 = vector.broadcast %cst_58 : f32 to vector<2x128xf32>
    %159 = arith.addf %158, %157 : vector<2x128xf32>
    %160 = arith.divf %158, %159 : vector<2x128xf32>
    %161 = arith.select %154, %155, %160 : vector<2x128xi1>, vector<2x128xf32>
    %162 = vector.extract_strided_slice %161 {offsets = [0, 0], sizes = [2, 32], strides = [1, 1]} : vector<2x128xf32> to vector<2x32xf32>
    %163 = vector.extract_strided_slice %161 {offsets = [0, 32], sizes = [2, 32], strides = [1, 1]} : vector<2x128xf32> to vector<2x32xf32>
    %164 = vector.extract_strided_slice %161 {offsets = [0, 64], sizes = [2, 32], strides = [1, 1]} : vector<2x128xf32> to vector<2x32xf32>
    %165 = vector.extract_strided_slice %161 {offsets = [0, 96], sizes = [2, 32], strides = [1, 1]} : vector<2x128xf32> to vector<2x32xf32>
    %166 = arith.mulf %163, %141 : vector<2x32xf32>
    %167 = arith.mulf %162, %164 : vector<2x32xf32>
    %168 = arith.addf %166, %167 : vector<2x32xf32>
    %169 = math.tanh %168 : vector<2x32xf32>
    %170 = arith.mulf %165, %169 : vector<2x32xf32>
    %c10 = arith.constant 10 : index
    %c0_59 = arith.constant 0 : index
    %171 = vector.load %arg17[%c10, %c0_59] : memref<16x32xf32, #tpu.memory_space<vmem>>, vector<2x32xf32>
    tpu.vector_store %arg17[%c10, %c0_59], %170 {strides = array<i32>} : memref<16x32xf32, #tpu.memory_space<vmem>>, vector<2x32xf32>,
    %c6_60 = arith.constant 6 : index
    %c0_61 = arith.constant 0 : index
    %172 = tpu.strided_load %arg16[%c6_60, %c0_61] {strides = array<i32: 8, 1>} : memref<16x128xf32, #tpu.memory_space<vmem>>, vector<2x128xf32>
    %c0_62 = arith.constant 0 : index
    %c0_63 = arith.constant 0 : index
    %173 = vector.load %arg2[%c0_62, %c0_63] : memref<32x128xf32, #tpu.memory_space<vmem>>, vector<32x128xf32>
    %cst_64 = arith.constant dense<0.000000e+00> : vector<2x128xf32>
    %174 = tpu.matmul %170, %173, %cst_64 {dimension_numbers = #tpu.dot_dimension_numbers<[1], [0], [0], [1], [0, 0, 1, 1], [], []>} : vector<2x32xf32>, vector<32x128xf32>, vector<2x128xf32> -> vector<2x128xf32>
    %175 = arith.addf %172, %174 : vector<2x128xf32>
    %176 = tpu.iota {dimensions = array<i32: 1>} : vector<2x128xi32>
    %c64_i32_65 = arith.constant 64 : i32
    %177 = vector.broadcast %c64_i32_65 : i32 to vector<2x128xi32>
    %178 = arith.cmpi sge, %176, %177 : vector<2x128xi32>
    %c96_i32_66 = arith.constant 96 : i32
    %179 = vector.broadcast %c96_i32_66 : i32 to vector<2x128xi32>
    %180 = arith.cmpi slt, %176, %179 : vector<2x128xi32>
    %181 = arith.andi %178, %180 : vector<2x128xi1>
    %182 = math.tanh %175 : vector<2x128xf32>
    %183 = arith.negf %175 : vector<2x128xf32>
    %184 = math.exp %183 : vector<2x128xf32>
    %cst_67 = arith.constant 1.000000e+00 : f32
    %185 = vector.broadcast %cst_67 : f32 to vector<2x128xf32>
    %186 = arith.addf %185, %184 : vector<2x128xf32>
    %187 = arith.divf %185, %186 : vector<2x128xf32>
    %188 = arith.select %181, %182, %187 : vector<2x128xi1>, vector<2x128xf32>
    %189 = vector.extract_strided_slice %188 {offsets = [0, 0], sizes = [2, 32], strides = [1, 1]} : vector<2x128xf32> to vector<2x32xf32>
    %190 = vector.extract_strided_slice %188 {offsets = [0, 32], sizes = [2, 32], strides = [1, 1]} : vector<2x128xf32> to vector<2x32xf32>
    %191 = vector.extract_strided_slice %188 {offsets = [0, 64], sizes = [2, 32], strides = [1, 1]} : vector<2x128xf32> to vector<2x32xf32>
    %192 = vector.extract_strided_slice %188 {offsets = [0, 96], sizes = [2, 32], strides = [1, 1]} : vector<2x128xf32> to vector<2x32xf32>
    %193 = arith.mulf %190, %168 : vector<2x32xf32>
    %194 = arith.mulf %189, %191 : vector<2x32xf32>
    %195 = arith.addf %193, %194 : vector<2x32xf32>
    %196 = math.tanh %195 : vector<2x32xf32>
    %197 = arith.mulf %192, %196 : vector<2x32xf32>
    %c12 = arith.constant 12 : index
    %c0_68 = arith.constant 0 : index
    %198 = vector.load %arg17[%c12, %c0_68] : memref<16x32xf32, #tpu.memory_space<vmem>>, vector<2x32xf32>
    tpu.vector_store %arg17[%c12, %c0_68], %197 {strides = array<i32>} : memref<16x32xf32, #tpu.memory_space<vmem>>, vector<2x32xf32>,
    %c7 = arith.constant 7 : index
    %c0_69 = arith.constant 0 : index
    %199 = tpu.strided_load %arg16[%c7, %c0_69] {strides = array<i32: 8, 1>} : memref<16x128xf32, #tpu.memory_space<vmem>>, vector<2x128xf32>
    %c0_70 = arith.constant 0 : index
    %c0_71 = arith.constant 0 : index
    %200 = vector.load %arg2[%c0_70, %c0_71] : memref<32x128xf32, #tpu.memory_space<vmem>>, vector<32x128xf32>
    %cst_72 = arith.constant dense<0.000000e+00> : vector<2x128xf32>
    %201 = tpu.matmul %197, %200, %cst_72 {dimension_numbers = #tpu.dot_dimension_numbers<[1], [0], [0], [1], [0, 0, 1, 1], [], []>} : vector<2x32xf32>, vector<32x128xf32>, vector<2x128xf32> -> vector<2x128xf32>
    %202 = arith.addf %199, %201 : vector<2x128xf32>
    %203 = tpu.iota {dimensions = array<i32: 1>} : vector<2x128xi32>
    %c64_i32_73 = arith.constant 64 : i32
    %204 = vector.broadcast %c64_i32_73 : i32 to vector<2x128xi32>
    %205 = arith.cmpi sge, %203, %204 : vector<2x128xi32>
    %c96_i32_74 = arith.constant 96 : i32
    %206 = vector.broadcast %c96_i32_74 : i32 to vector<2x128xi32>
    %207 = arith.cmpi slt, %203, %206 : vector<2x128xi32>
    %208 = arith.andi %205, %207 : vector<2x128xi1>
    %209 = math.tanh %202 : vector<2x128xf32>
    %210 = arith.negf %202 : vector<2x128xf32>
    %211 = math.exp %210 : vector<2x128xf32>
    %cst_75 = arith.constant 1.000000e+00 : f32
    %212 = vector.broadcast %cst_75 : f32 to vector<2x128xf32>
    %213 = arith.addf %212, %211 : vector<2x128xf32>
    %214 = arith.divf %212, %213 : vector<2x128xf32>
    %215 = arith.select %208, %209, %214 : vector<2x128xi1>, vector<2x128xf32>
    %216 = vector.extract_strided_slice %215 {offsets = [0, 0], sizes = [2, 32], strides = [1, 1]} : vector<2x128xf32> to vector<2x32xf32>
    %217 = vector.extract_strided_slice %215 {offsets = [0, 32], sizes = [2, 32], strides = [1, 1]} : vector<2x128xf32> to vector<2x32xf32>
    %218 = vector.extract_strided_slice %215 {offsets = [0, 64], sizes = [2, 32], strides = [1, 1]} : vector<2x128xf32> to vector<2x32xf32>
    %219 = vector.extract_strided_slice %215 {offsets = [0, 96], sizes = [2, 32], strides = [1, 1]} : vector<2x128xf32> to vector<2x32xf32>
    %220 = arith.mulf %217, %195 : vector<2x32xf32>
    %221 = arith.mulf %216, %218 : vector<2x32xf32>
    %222 = arith.addf %220, %221 : vector<2x32xf32>
    %223 = math.tanh %222 : vector<2x32xf32>
    %224 = arith.mulf %219, %223 : vector<2x32xf32>
    %c14 = arith.constant 14 : index
    %c0_76 = arith.constant 0 : index
    %225 = vector.load %arg17[%c14, %c0_76] : memref<16x32xf32, #tpu.memory_space<vmem>>, vector<2x32xf32>
    tpu.vector_store %arg17[%c14, %c0_76], %224 {strides = array<i32>} : memref<16x32xf32, #tpu.memory_space<vmem>>, vector<2x32xf32>,
    %c0_77 = arith.constant 0 : index
    %c0_78 = arith.constant 0 : index
    %226 = vector.load %arg17[%c0_77, %c0_78] : memref<16x32xf32, #tpu.memory_space<vmem>>, vector<16x32xf32>
    %c0_79 = arith.constant 0 : index
    %c0_80 = arith.constant 0 : index
    %227 = vector.load %arg4[%c0_79, %c0_80] : memref<32x128xf32, #tpu.memory_space<vmem>>, vector<32x128xf32>
    %cst_81 = arith.constant dense<0.000000e+00> : vector<16x128xf32>
    %228 = tpu.matmul %226, %227, %cst_81 {dimension_numbers = #tpu.dot_dimension_numbers<[1], [0], [0], [1], [0, 0, 1, 1], [], []>} : vector<16x32xf32>, vector<32x128xf32>, vector<16x128xf32> -> vector<16x128xf32>
    %c0_82 = arith.constant 0 : index
    %c0_83 = arith.constant 0 : index
    %229 = vector.load %arg6[%c0_82, %c0_83] : memref<1x128xf32, #tpu.memory_space<vmem>>, vector<1x128xf32>
    %230 = vector.broadcast %229 : vector<1x128xf32> to vector<16x128xf32>
    %231 = arith.addf %228, %230 : vector<16x128xf32>
    %c0_84 = arith.constant 0 : index
    %c0_85 = arith.constant 0 : index
    %232 = vector.load %arg16[%c0_84, %c0_85] : memref<16x128xf32, #tpu.memory_space<vmem>>, vector<16x128xf32>
    tpu.vector_store %arg16[%c0_84, %c0_85], %231 {strides = array<i32>} : memref<16x128xf32, #tpu.memory_space<vmem>>, vector<16x128xf32>,
    %cst_86 = arith.constant 0.000000e+00 : f32
    %233 = vector.broadcast %cst_86 : f32 to vector<2x32xf32>
    %cst_87 = arith.constant 0.000000e+00 : f32
    %234 = vector.broadcast %cst_87 : f32 to vector<2x32xf32>
    %c0_88 = arith.constant 0 : index
    %c0_89 = arith.constant 0 : index
    %235 = vector.load %arg16[%c0_88, %c0_89] : memref<16x128xf32, #tpu.memory_space<vmem>>, vector<2x128xf32>
    %c0_90 = arith.constant 0 : index
    %c0_91 = arith.constant 0 : index
    %236 = vector.load %arg5[%c0_90, %c0_91] : memref<32x128xf32, #tpu.memory_space<vmem>>, vector<32x128xf32>
    %cst_92 = arith.constant dense<0.000000e+00> : vector<2x128xf32>
    %237 = tpu.matmul %233, %236, %cst_92 {dimension_numbers = #tpu.dot_dimension_numbers<[1], [0], [0], [1], [0, 0, 1, 1], [], []>} : vector<2x32xf32>, vector<32x128xf32>, vector<2x128xf32> -> vector<2x128xf32>
    %238 = arith.addf %235, %237 : vector<2x128xf32>
    %239 = tpu.iota {dimensions = array<i32: 1>} : vector<2x128xi32>
    %c64_i32_93 = arith.constant 64 : i32
    %240 = vector.broadcast %c64_i32_93 : i32 to vector<2x128xi32>
    %241 = arith.cmpi sge, %239, %240 : vector<2x128xi32>
    %c96_i32_94 = arith.constant 96 : i32
    %242 = vector.broadcast %c96_i32_94 : i32 to vector<2x128xi32>
    %243 = arith.cmpi slt, %239, %242 : vector<2x128xi32>
    %244 = arith.andi %241, %243 : vector<2x128xi1>
    %245 = math.tanh %238 : vector<2x128xf32>
    %246 = arith.negf %238 : vector<2x128xf32>
    %247 = math.exp %246 : vector<2x128xf32>
    %cst_95 = arith.constant 1.000000e+00 : f32
    %248 = vector.broadcast %cst_95 : f32 to vector<2x128xf32>
    %249 = arith.addf %248, %247 : vector<2x128xf32>
    %250 = arith.divf %248, %249 : vector<2x128xf32>
    %251 = arith.select %244, %245, %250 : vector<2x128xi1>, vector<2x128xf32>
    %252 = vector.extract_strided_slice %251 {offsets = [0, 0], sizes = [2, 32], strides = [1, 1]} : vector<2x128xf32> to vector<2x32xf32>
    %253 = vector.extract_strided_slice %251 {offsets = [0, 32], sizes = [2, 32], strides = [1, 1]} : vector<2x128xf32> to vector<2x32xf32>
    %254 = vector.extract_strided_slice %251 {offsets = [0, 64], sizes = [2, 32], strides = [1, 1]} : vector<2x128xf32> to vector<2x32xf32>
    %255 = vector.extract_strided_slice %251 {offsets = [0, 96], sizes = [2, 32], strides = [1, 1]} : vector<2x128xf32> to vector<2x32xf32>
    %256 = arith.mulf %253, %234 : vector<2x32xf32>
    %257 = arith.mulf %252, %254 : vector<2x32xf32>
    %258 = arith.addf %256, %257 : vector<2x32xf32>
    %259 = math.tanh %258 : vector<2x32xf32>
    %260 = arith.mulf %255, %259 : vector<2x32xf32>
    %c0_96 = arith.constant 0 : index
    %c0_97 = arith.constant 0 : index
    %261 = vector.load %arg17[%c0_96, %c0_97] : memref<16x32xf32, #tpu.memory_space<vmem>>, vector<2x32xf32>
    tpu.vector_store %arg17[%c0_96, %c0_97], %260 {strides = array<i32>} : memref<16x32xf32, #tpu.memory_space<vmem>>, vector<2x32xf32>,
    %c2_98 = arith.constant 2 : index
    %c0_99 = arith.constant 0 : index
    %262 = vector.load %arg16[%c2_98, %c0_99] : memref<16x128xf32, #tpu.memory_space<vmem>>, vector<2x128xf32>
    %c0_100 = arith.constant 0 : index
    %c0_101 = arith.constant 0 : index
    %263 = vector.load %arg5[%c0_100, %c0_101] : memref<32x128xf32, #tpu.memory_space<vmem>>, vector<32x128xf32>
    %cst_102 = arith.constant dense<0.000000e+00> : vector<2x128xf32>
    %264 = tpu.matmul %260, %263, %cst_102 {dimension_numbers = #tpu.dot_dimension_numbers<[1], [0], [0], [1], [0, 0, 1, 1], [], []>} : vector<2x32xf32>, vector<32x128xf32>, vector<2x128xf32> -> vector<2x128xf32>
    %265 = arith.addf %262, %264 : vector<2x128xf32>
    %266 = tpu.iota {dimensions = array<i32: 1>} : vector<2x128xi32>
    %c64_i32_103 = arith.constant 64 : i32
    %267 = vector.broadcast %c64_i32_103 : i32 to vector<2x128xi32>
    %268 = arith.cmpi sge, %266, %267 : vector<2x128xi32>
    %c96_i32_104 = arith.constant 96 : i32
    %269 = vector.broadcast %c96_i32_104 : i32 to vector<2x128xi32>
    %270 = arith.cmpi slt, %266, %269 : vector<2x128xi32>
    %271 = arith.andi %268, %270 : vector<2x128xi1>
    %272 = math.tanh %265 : vector<2x128xf32>
    %273 = arith.negf %265 : vector<2x128xf32>
    %274 = math.exp %273 : vector<2x128xf32>
    %cst_105 = arith.constant 1.000000e+00 : f32
    %275 = vector.broadcast %cst_105 : f32 to vector<2x128xf32>
    %276 = arith.addf %275, %274 : vector<2x128xf32>
    %277 = arith.divf %275, %276 : vector<2x128xf32>
    %278 = arith.select %271, %272, %277 : vector<2x128xi1>, vector<2x128xf32>
    %279 = vector.extract_strided_slice %278 {offsets = [0, 0], sizes = [2, 32], strides = [1, 1]} : vector<2x128xf32> to vector<2x32xf32>
    %280 = vector.extract_strided_slice %278 {offsets = [0, 32], sizes = [2, 32], strides = [1, 1]} : vector<2x128xf32> to vector<2x32xf32>
    %281 = vector.extract_strided_slice %278 {offsets = [0, 64], sizes = [2, 32], strides = [1, 1]} : vector<2x128xf32> to vector<2x32xf32>
    %282 = vector.extract_strided_slice %278 {offsets = [0, 96], sizes = [2, 32], strides = [1, 1]} : vector<2x128xf32> to vector<2x32xf32>
    %283 = arith.mulf %280, %258 : vector<2x32xf32>
    %284 = arith.mulf %279, %281 : vector<2x32xf32>
    %285 = arith.addf %283, %284 : vector<2x32xf32>
    %286 = math.tanh %285 : vector<2x32xf32>
    %287 = arith.mulf %282, %286 : vector<2x32xf32>
    %c2_106 = arith.constant 2 : index
    %c0_107 = arith.constant 0 : index
    %288 = vector.load %arg17[%c2_106, %c0_107] : memref<16x32xf32, #tpu.memory_space<vmem>>, vector<2x32xf32>
    tpu.vector_store %arg17[%c2_106, %c0_107], %287 {strides = array<i32>} : memref<16x32xf32, #tpu.memory_space<vmem>>, vector<2x32xf32>,
    %c4_108 = arith.constant 4 : index
    %c0_109 = arith.constant 0 : index
    %289 = vector.load %arg16[%c4_108, %c0_109] : memref<16x128xf32, #tpu.memory_space<vmem>>, vector<2x128xf32>
    %c0_110 = arith.constant 0 : index
    %c0_111 = arith.constant 0 : index
    %290 = vector.load %arg5[%c0_110, %c0_111] : memref<32x128xf32, #tpu.memory_space<vmem>>, vector<32x128xf32>
    %cst_112 = arith.constant dense<0.000000e+00> : vector<2x128xf32>
    %291 = tpu.matmul %287, %290, %cst_112 {dimension_numbers = #tpu.dot_dimension_numbers<[1], [0], [0], [1], [0, 0, 1, 1], [], []>} : vector<2x32xf32>, vector<32x128xf32>, vector<2x128xf32> -> vector<2x128xf32>
    %292 = arith.addf %289, %291 : vector<2x128xf32>
    %293 = tpu.iota {dimensions = array<i32: 1>} : vector<2x128xi32>
    %c64_i32_113 = arith.constant 64 : i32
    %294 = vector.broadcast %c64_i32_113 : i32 to vector<2x128xi32>
    %295 = arith.cmpi sge, %293, %294 : vector<2x128xi32>
    %c96_i32_114 = arith.constant 96 : i32
    %296 = vector.broadcast %c96_i32_114 : i32 to vector<2x128xi32>
    %297 = arith.cmpi slt, %293, %296 : vector<2x128xi32>
    %298 = arith.andi %295, %297 : vector<2x128xi1>
    %299 = math.tanh %292 : vector<2x128xf32>
    %300 = arith.negf %292 : vector<2x128xf32>
    %301 = math.exp %300 : vector<2x128xf32>
    %cst_115 = arith.constant 1.000000e+00 : f32
    %302 = vector.broadcast %cst_115 : f32 to vector<2x128xf32>
    %303 = arith.addf %302, %301 : vector<2x128xf32>
    %304 = arith.divf %302, %303 : vector<2x128xf32>
    %305 = arith.select %298, %299, %304 : vector<2x128xi1>, vector<2x128xf32>
    %306 = vector.extract_strided_slice %305 {offsets = [0, 0], sizes = [2, 32], strides = [1, 1]} : vector<2x128xf32> to vector<2x32xf32>
    %307 = vector.extract_strided_slice %305 {offsets = [0, 32], sizes = [2, 32], strides = [1, 1]} : vector<2x128xf32> to vector<2x32xf32>
    %308 = vector.extract_strided_slice %305 {offsets = [0, 64], sizes = [2, 32], strides = [1, 1]} : vector<2x128xf32> to vector<2x32xf32>
    %309 = vector.extract_strided_slice %305 {offsets = [0, 96], sizes = [2, 32], strides = [1, 1]} : vector<2x128xf32> to vector<2x32xf32>
    %310 = arith.mulf %307, %285 : vector<2x32xf32>
    %311 = arith.mulf %306, %308 : vector<2x32xf32>
    %312 = arith.addf %310, %311 : vector<2x32xf32>
    %313 = math.tanh %312 : vector<2x32xf32>
    %314 = arith.mulf %309, %313 : vector<2x32xf32>
    %c4_116 = arith.constant 4 : index
    %c0_117 = arith.constant 0 : index
    %315 = vector.load %arg17[%c4_116, %c0_117] : memref<16x32xf32, #tpu.memory_space<vmem>>, vector<2x32xf32>
    tpu.vector_store %arg17[%c4_116, %c0_117], %314 {strides = array<i32>} : memref<16x32xf32, #tpu.memory_space<vmem>>, vector<2x32xf32>,
    %c6_118 = arith.constant 6 : index
    %c0_119 = arith.constant 0 : index
    %316 = vector.load %arg16[%c6_118, %c0_119] : memref<16x128xf32, #tpu.memory_space<vmem>>, vector<2x128xf32>
    %c0_120 = arith.constant 0 : index
    %c0_121 = arith.constant 0 : index
    %317 = vector.load %arg5[%c0_120, %c0_121] : memref<32x128xf32, #tpu.memory_space<vmem>>, vector<32x128xf32>
    %cst_122 = arith.constant dense<0.000000e+00> : vector<2x128xf32>
    %318 = tpu.matmul %314, %317, %cst_122 {dimension_numbers = #tpu.dot_dimension_numbers<[1], [0], [0], [1], [0, 0, 1, 1], [], []>} : vector<2x32xf32>, vector<32x128xf32>, vector<2x128xf32> -> vector<2x128xf32>
    %319 = arith.addf %316, %318 : vector<2x128xf32>
    %320 = tpu.iota {dimensions = array<i32: 1>} : vector<2x128xi32>
    %c64_i32_123 = arith.constant 64 : i32
    %321 = vector.broadcast %c64_i32_123 : i32 to vector<2x128xi32>
    %322 = arith.cmpi sge, %320, %321 : vector<2x128xi32>
    %c96_i32_124 = arith.constant 96 : i32
    %323 = vector.broadcast %c96_i32_124 : i32 to vector<2x128xi32>
    %324 = arith.cmpi slt, %320, %323 : vector<2x128xi32>
    %325 = arith.andi %322, %324 : vector<2x128xi1>
    %326 = math.tanh %319 : vector<2x128xf32>
    %327 = arith.negf %319 : vector<2x128xf32>
    %328 = math.exp %327 : vector<2x128xf32>
    %cst_125 = arith.constant 1.000000e+00 : f32
    %329 = vector.broadcast %cst_125 : f32 to vector<2x128xf32>
    %330 = arith.addf %329, %328 : vector<2x128xf32>
    %331 = arith.divf %329, %330 : vector<2x128xf32>
    %332 = arith.select %325, %326, %331 : vector<2x128xi1>, vector<2x128xf32>
    %333 = vector.extract_strided_slice %332 {offsets = [0, 0], sizes = [2, 32], strides = [1, 1]} : vector<2x128xf32> to vector<2x32xf32>
    %334 = vector.extract_strided_slice %332 {offsets = [0, 32], sizes = [2, 32], strides = [1, 1]} : vector<2x128xf32> to vector<2x32xf32>
    %335 = vector.extract_strided_slice %332 {offsets = [0, 64], sizes = [2, 32], strides = [1, 1]} : vector<2x128xf32> to vector<2x32xf32>
    %336 = vector.extract_strided_slice %332 {offsets = [0, 96], sizes = [2, 32], strides = [1, 1]} : vector<2x128xf32> to vector<2x32xf32>
    %337 = arith.mulf %334, %312 : vector<2x32xf32>
    %338 = arith.mulf %333, %335 : vector<2x32xf32>
    %339 = arith.addf %337, %338 : vector<2x32xf32>
    %340 = math.tanh %339 : vector<2x32xf32>
    %341 = arith.mulf %336, %340 : vector<2x32xf32>
    %c6_126 = arith.constant 6 : index
    %c0_127 = arith.constant 0 : index
    %342 = vector.load %arg17[%c6_126, %c0_127] : memref<16x32xf32, #tpu.memory_space<vmem>>, vector<2x32xf32>
    tpu.vector_store %arg17[%c6_126, %c0_127], %341 {strides = array<i32>} : memref<16x32xf32, #tpu.memory_space<vmem>>, vector<2x32xf32>,
    %c8_128 = arith.constant 8 : index
    %c0_129 = arith.constant 0 : index
    %343 = vector.load %arg16[%c8_128, %c0_129] : memref<16x128xf32, #tpu.memory_space<vmem>>, vector<2x128xf32>
    %c0_130 = arith.constant 0 : index
    %c0_131 = arith.constant 0 : index
    %344 = vector.load %arg5[%c0_130, %c0_131] : memref<32x128xf32, #tpu.memory_space<vmem>>, vector<32x128xf32>
    %cst_132 = arith.constant dense<0.000000e+00> : vector<2x128xf32>
    %345 = tpu.matmul %341, %344, %cst_132 {dimension_numbers = #tpu.dot_dimension_numbers<[1], [0], [0], [1], [0, 0, 1, 1], [], []>} : vector<2x32xf32>, vector<32x128xf32>, vector<2x128xf32> -> vector<2x128xf32>
    %346 = arith.addf %343, %345 : vector<2x128xf32>
    %347 = tpu.iota {dimensions = array<i32: 1>} : vector<2x128xi32>
    %c64_i32_133 = arith.constant 64 : i32
    %348 = vector.broadcast %c64_i32_133 : i32 to vector<2x128xi32>
    %349 = arith.cmpi sge, %347, %348 : vector<2x128xi32>
    %c96_i32_134 = arith.constant 96 : i32
    %350 = vector.broadcast %c96_i32_134 : i32 to vector<2x128xi32>
    %351 = arith.cmpi slt, %347, %350 : vector<2x128xi32>
    %352 = arith.andi %349, %351 : vector<2x128xi1>
    %353 = math.tanh %346 : vector<2x128xf32>
    %354 = arith.negf %346 : vector<2x128xf32>
    %355 = math.exp %354 : vector<2x128xf32>
    %cst_135 = arith.constant 1.000000e+00 : f32
    %356 = vector.broadcast %cst_135 : f32 to vector<2x128xf32>
    %357 = arith.addf %356, %355 : vector<2x128xf32>
    %358 = arith.divf %356, %357 : vector<2x128xf32>
    %359 = arith.select %352, %353, %358 : vector<2x128xi1>, vector<2x128xf32>
    %360 = vector.extract_strided_slice %359 {offsets = [0, 0], sizes = [2, 32], strides = [1, 1]} : vector<2x128xf32> to vector<2x32xf32>
    %361 = vector.extract_strided_slice %359 {offsets = [0, 32], sizes = [2, 32], strides = [1, 1]} : vector<2x128xf32> to vector<2x32xf32>
    %362 = vector.extract_strided_slice %359 {offsets = [0, 64], sizes = [2, 32], strides = [1, 1]} : vector<2x128xf32> to vector<2x32xf32>
    %363 = vector.extract_strided_slice %359 {offsets = [0, 96], sizes = [2, 32], strides = [1, 1]} : vector<2x128xf32> to vector<2x32xf32>
    %364 = arith.mulf %361, %339 : vector<2x32xf32>
    %365 = arith.mulf %360, %362 : vector<2x32xf32>
    %366 = arith.addf %364, %365 : vector<2x32xf32>
    %367 = math.tanh %366 : vector<2x32xf32>
    %368 = arith.mulf %363, %367 : vector<2x32xf32>
    %c8_136 = arith.constant 8 : index
    %c0_137 = arith.constant 0 : index
    %369 = vector.load %arg17[%c8_136, %c0_137] : memref<16x32xf32, #tpu.memory_space<vmem>>, vector<2x32xf32>
    tpu.vector_store %arg17[%c8_136, %c0_137], %368 {strides = array<i32>} : memref<16x32xf32, #tpu.memory_space<vmem>>, vector<2x32xf32>,
    %c10_138 = arith.constant 10 : index
    %c0_139 = arith.constant 0 : index
    %370 = vector.load %arg16[%c10_138, %c0_139] : memref<16x128xf32, #tpu.memory_space<vmem>>, vector<2x128xf32>
    %c0_140 = arith.constant 0 : index
    %c0_141 = arith.constant 0 : index
    %371 = vector.load %arg5[%c0_140, %c0_141] : memref<32x128xf32, #tpu.memory_space<vmem>>, vector<32x128xf32>
    %cst_142 = arith.constant dense<0.000000e+00> : vector<2x128xf32>
    %372 = tpu.matmul %368, %371, %cst_142 {dimension_numbers = #tpu.dot_dimension_numbers<[1], [0], [0], [1], [0, 0, 1, 1], [], []>} : vector<2x32xf32>, vector<32x128xf32>, vector<2x128xf32> -> vector<2x128xf32>
    %373 = arith.addf %370, %372 : vector<2x128xf32>
    %374 = tpu.iota {dimensions = array<i32: 1>} : vector<2x128xi32>
    %c64_i32_143 = arith.constant 64 : i32
    %375 = vector.broadcast %c64_i32_143 : i32 to vector<2x128xi32>
    %376 = arith.cmpi sge, %374, %375 : vector<2x128xi32>
    %c96_i32_144 = arith.constant 96 : i32
    %377 = vector.broadcast %c96_i32_144 : i32 to vector<2x128xi32>
    %378 = arith.cmpi slt, %374, %377 : vector<2x128xi32>
    %379 = arith.andi %376, %378 : vector<2x128xi1>
    %380 = math.tanh %373 : vector<2x128xf32>
    %381 = arith.negf %373 : vector<2x128xf32>
    %382 = math.exp %381 : vector<2x128xf32>
    %cst_145 = arith.constant 1.000000e+00 : f32
    %383 = vector.broadcast %cst_145 : f32 to vector<2x128xf32>
    %384 = arith.addf %383, %382 : vector<2x128xf32>
    %385 = arith.divf %383, %384 : vector<2x128xf32>
    %386 = arith.select %379, %380, %385 : vector<2x128xi1>, vector<2x128xf32>
    %387 = vector.extract_strided_slice %386 {offsets = [0, 0], sizes = [2, 32], strides = [1, 1]} : vector<2x128xf32> to vector<2x32xf32>
    %388 = vector.extract_strided_slice %386 {offsets = [0, 32], sizes = [2, 32], strides = [1, 1]} : vector<2x128xf32> to vector<2x32xf32>
    %389 = vector.extract_strided_slice %386 {offsets = [0, 64], sizes = [2, 32], strides = [1, 1]} : vector<2x128xf32> to vector<2x32xf32>
    %390 = vector.extract_strided_slice %386 {offsets = [0, 96], sizes = [2, 32], strides = [1, 1]} : vector<2x128xf32> to vector<2x32xf32>
    %391 = arith.mulf %388, %366 : vector<2x32xf32>
    %392 = arith.mulf %387, %389 : vector<2x32xf32>
    %393 = arith.addf %391, %392 : vector<2x32xf32>
    %394 = math.tanh %393 : vector<2x32xf32>
    %395 = arith.mulf %390, %394 : vector<2x32xf32>
    %c10_146 = arith.constant 10 : index
    %c0_147 = arith.constant 0 : index
    %396 = vector.load %arg17[%c10_146, %c0_147] : memref<16x32xf32, #tpu.memory_space<vmem>>, vector<2x32xf32>
    tpu.vector_store %arg17[%c10_146, %c0_147], %395 {strides = array<i32>} : memref<16x32xf32, #tpu.memory_space<vmem>>, vector<2x32xf32>,
    %c12_148 = arith.constant 12 : index
    %c0_149 = arith.constant 0 : index
    %397 = vector.load %arg16[%c12_148, %c0_149] : memref<16x128xf32, #tpu.memory_space<vmem>>, vector<2x128xf32>
    %c0_150 = arith.constant 0 : index
    %c0_151 = arith.constant 0 : index
    %398 = vector.load %arg5[%c0_150, %c0_151] : memref<32x128xf32, #tpu.memory_space<vmem>>, vector<32x128xf32>
    %cst_152 = arith.constant dense<0.000000e+00> : vector<2x128xf32>
    %399 = tpu.matmul %395, %398, %cst_152 {dimension_numbers = #tpu.dot_dimension_numbers<[1], [0], [0], [1], [0, 0, 1, 1], [], []>} : vector<2x32xf32>, vector<32x128xf32>, vector<2x128xf32> -> vector<2x128xf32>
    %400 = arith.addf %397, %399 : vector<2x128xf32>
    %401 = tpu.iota {dimensions = array<i32: 1>} : vector<2x128xi32>
    %c64_i32_153 = arith.constant 64 : i32
    %402 = vector.broadcast %c64_i32_153 : i32 to vector<2x128xi32>
    %403 = arith.cmpi sge, %401, %402 : vector<2x128xi32>
    %c96_i32_154 = arith.constant 96 : i32
    %404 = vector.broadcast %c96_i32_154 : i32 to vector<2x128xi32>
    %405 = arith.cmpi slt, %401, %404 : vector<2x128xi32>
    %406 = arith.andi %403, %405 : vector<2x128xi1>
    %407 = math.tanh %400 : vector<2x128xf32>
    %408 = arith.negf %400 : vector<2x128xf32>
    %409 = math.exp %408 : vector<2x128xf32>
    %cst_155 = arith.constant 1.000000e+00 : f32
    %410 = vector.broadcast %cst_155 : f32 to vector<2x128xf32>
    %411 = arith.addf %410, %409 : vector<2x128xf32>
    %412 = arith.divf %410, %411 : vector<2x128xf32>
    %413 = arith.select %406, %407, %412 : vector<2x128xi1>, vector<2x128xf32>
    %414 = vector.extract_strided_slice %413 {offsets = [0, 0], sizes = [2, 32], strides = [1, 1]} : vector<2x128xf32> to vector<2x32xf32>
    %415 = vector.extract_strided_slice %413 {offsets = [0, 32], sizes = [2, 32], strides = [1, 1]} : vector<2x128xf32> to vector<2x32xf32>
    %416 = vector.extract_strided_slice %413 {offsets = [0, 64], sizes = [2, 32], strides = [1, 1]} : vector<2x128xf32> to vector<2x32xf32>
    %417 = vector.extract_strided_slice %413 {offsets = [0, 96], sizes = [2, 32], strides = [1, 1]} : vector<2x128xf32> to vector<2x32xf32>
    %418 = arith.mulf %415, %393 : vector<2x32xf32>
    %419 = arith.mulf %414, %416 : vector<2x32xf32>
    %420 = arith.addf %418, %419 : vector<2x32xf32>
    %421 = math.tanh %420 : vector<2x32xf32>
    %422 = arith.mulf %417, %421 : vector<2x32xf32>
    %c12_156 = arith.constant 12 : index
    %c0_157 = arith.constant 0 : index
    %423 = vector.load %arg17[%c12_156, %c0_157] : memref<16x32xf32, #tpu.memory_space<vmem>>, vector<2x32xf32>
    tpu.vector_store %arg17[%c12_156, %c0_157], %422 {strides = array<i32>} : memref<16x32xf32, #tpu.memory_space<vmem>>, vector<2x32xf32>,
    %c14_158 = arith.constant 14 : index
    %c0_159 = arith.constant 0 : index
    %424 = vector.load %arg16[%c14_158, %c0_159] : memref<16x128xf32, #tpu.memory_space<vmem>>, vector<2x128xf32>
    %c0_160 = arith.constant 0 : index
    %c0_161 = arith.constant 0 : index
    %425 = vector.load %arg5[%c0_160, %c0_161] : memref<32x128xf32, #tpu.memory_space<vmem>>, vector<32x128xf32>
    %cst_162 = arith.constant dense<0.000000e+00> : vector<2x128xf32>
    %426 = tpu.matmul %422, %425, %cst_162 {dimension_numbers = #tpu.dot_dimension_numbers<[1], [0], [0], [1], [0, 0, 1, 1], [], []>} : vector<2x32xf32>, vector<32x128xf32>, vector<2x128xf32> -> vector<2x128xf32>
    %427 = arith.addf %424, %426 : vector<2x128xf32>
    %428 = tpu.iota {dimensions = array<i32: 1>} : vector<2x128xi32>
    %c64_i32_163 = arith.constant 64 : i32
    %429 = vector.broadcast %c64_i32_163 : i32 to vector<2x128xi32>
    %430 = arith.cmpi sge, %428, %429 : vector<2x128xi32>
    %c96_i32_164 = arith.constant 96 : i32
    %431 = vector.broadcast %c96_i32_164 : i32 to vector<2x128xi32>
    %432 = arith.cmpi slt, %428, %431 : vector<2x128xi32>
    %433 = arith.andi %430, %432 : vector<2x128xi1>
    %434 = math.tanh %427 : vector<2x128xf32>
    %435 = arith.negf %427 : vector<2x128xf32>
    %436 = math.exp %435 : vector<2x128xf32>
    %cst_165 = arith.constant 1.000000e+00 : f32
    %437 = vector.broadcast %cst_165 : f32 to vector<2x128xf32>
    %438 = arith.addf %437, %436 : vector<2x128xf32>
    %439 = arith.divf %437, %438 : vector<2x128xf32>
    %440 = arith.select %433, %434, %439 : vector<2x128xi1>, vector<2x128xf32>
    %441 = vector.extract_strided_slice %440 {offsets = [0, 0], sizes = [2, 32], strides = [1, 1]} : vector<2x128xf32> to vector<2x32xf32>
    %442 = vector.extract_strided_slice %440 {offsets = [0, 32], sizes = [2, 32], strides = [1, 1]} : vector<2x128xf32> to vector<2x32xf32>
    %443 = vector.extract_strided_slice %440 {offsets = [0, 64], sizes = [2, 32], strides = [1, 1]} : vector<2x128xf32> to vector<2x32xf32>
    %444 = vector.extract_strided_slice %440 {offsets = [0, 96], sizes = [2, 32], strides = [1, 1]} : vector<2x128xf32> to vector<2x32xf32>
    %445 = arith.mulf %442, %420 : vector<2x32xf32>
    %446 = arith.mulf %441, %443 : vector<2x32xf32>
    %447 = arith.addf %445, %446 : vector<2x32xf32>
    %448 = math.tanh %447 : vector<2x32xf32>
    %449 = arith.mulf %444, %448 : vector<2x32xf32>
    %c14_166 = arith.constant 14 : index
    %c0_167 = arith.constant 0 : index
    %450 = vector.load %arg17[%c14_166, %c0_167] : memref<16x32xf32, #tpu.memory_space<vmem>>, vector<2x32xf32>
    tpu.vector_store %arg17[%c14_166, %c0_167], %449 {strides = array<i32>} : memref<16x32xf32, #tpu.memory_space<vmem>>, vector<2x32xf32>,
    %c0_168 = arith.constant 0 : index
    %c0_169 = arith.constant 0 : index
    %451 = vector.load %arg17[%c0_168, %c0_169] : memref<16x32xf32, #tpu.memory_space<vmem>>, vector<16x32xf32>
    %c0_170 = arith.constant 0 : index
    %c0_171 = arith.constant 0 : index
    %452 = vector.load %arg7[%c0_170, %c0_171] : memref<32x128xf32, #tpu.memory_space<vmem>>, vector<32x128xf32>
    %cst_172 = arith.constant dense<0.000000e+00> : vector<16x128xf32>
    %453 = tpu.matmul %451, %452, %cst_172 {dimension_numbers = #tpu.dot_dimension_numbers<[1], [0], [0], [1], [0, 0, 1, 1], [], []>} : vector<16x32xf32>, vector<32x128xf32>, vector<16x128xf32> -> vector<16x128xf32>
    %c0_173 = arith.constant 0 : index
    %c0_174 = arith.constant 0 : index
    %454 = vector.load %arg9[%c0_173, %c0_174] : memref<1x128xf32, #tpu.memory_space<vmem>>, vector<1x128xf32>
    %455 = vector.broadcast %454 : vector<1x128xf32> to vector<16x128xf32>
    %456 = arith.addf %453, %455 : vector<16x128xf32>
    %c0_175 = arith.constant 0 : index
    %c0_176 = arith.constant 0 : index
    %457 = vector.load %arg16[%c0_175, %c0_176] : memref<16x128xf32, #tpu.memory_space<vmem>>, vector<16x128xf32>
    tpu.vector_store %arg16[%c0_175, %c0_176], %456 {strides = array<i32>} : memref<16x128xf32, #tpu.memory_space<vmem>>, vector<16x128xf32>,
    %cst_177 = arith.constant 0.000000e+00 : f32
    %458 = vector.broadcast %cst_177 : f32 to vector<2x32xf32>
    %cst_178 = arith.constant 0.000000e+00 : f32
    %459 = vector.broadcast %cst_178 : f32 to vector<2x32xf32>
    %c0_179 = arith.constant 0 : index
    %c0_180 = arith.constant 0 : index
    %460 = vector.load %arg16[%c0_179, %c0_180] : memref<16x128xf32, #tpu.memory_space<vmem>>, vector<2x128xf32>
    %c0_181 = arith.constant 0 : index
    %c0_182 = arith.constant 0 : index
    %461 = vector.load %arg8[%c0_181, %c0_182] : memref<32x128xf32, #tpu.memory_space<vmem>>, vector<32x128xf32>
    %cst_183 = arith.constant dense<0.000000e+00> : vector<2x128xf32>
    %462 = tpu.matmul %458, %461, %cst_183 {dimension_numbers = #tpu.dot_dimension_numbers<[1], [0], [0], [1], [0, 0, 1, 1], [], []>} : vector<2x32xf32>, vector<32x128xf32>, vector<2x128xf32> -> vector<2x128xf32>
    %463 = arith.addf %460, %462 : vector<2x128xf32>
    %464 = tpu.iota {dimensions = array<i32: 1>} : vector<2x128xi32>
    %c64_i32_184 = arith.constant 64 : i32
    %465 = vector.broadcast %c64_i32_184 : i32 to vector<2x128xi32>
    %466 = arith.cmpi sge, %464, %465 : vector<2x128xi32>
    %c96_i32_185 = arith.constant 96 : i32
    %467 = vector.broadcast %c96_i32_185 : i32 to vector<2x128xi32>
    %468 = arith.cmpi slt, %464, %467 : vector<2x128xi32>
    %469 = arith.andi %466, %468 : vector<2x128xi1>
    %470 = math.tanh %463 : vector<2x128xf32>
    %471 = arith.negf %463 : vector<2x128xf32>
    %472 = math.exp %471 : vector<2x128xf32>
    %cst_186 = arith.constant 1.000000e+00 : f32
    %473 = vector.broadcast %cst_186 : f32 to vector<2x128xf32>
    %474 = arith.addf %473, %472 : vector<2x128xf32>
    %475 = arith.divf %473, %474 : vector<2x128xf32>
    %476 = arith.select %469, %470, %475 : vector<2x128xi1>, vector<2x128xf32>
    %477 = vector.extract_strided_slice %476 {offsets = [0, 0], sizes = [2, 32], strides = [1, 1]} : vector<2x128xf32> to vector<2x32xf32>
    %478 = vector.extract_strided_slice %476 {offsets = [0, 32], sizes = [2, 32], strides = [1, 1]} : vector<2x128xf32> to vector<2x32xf32>
    %479 = vector.extract_strided_slice %476 {offsets = [0, 64], sizes = [2, 32], strides = [1, 1]} : vector<2x128xf32> to vector<2x32xf32>
    %480 = vector.extract_strided_slice %476 {offsets = [0, 96], sizes = [2, 32], strides = [1, 1]} : vector<2x128xf32> to vector<2x32xf32>
    %481 = arith.mulf %478, %459 : vector<2x32xf32>
    %482 = arith.mulf %477, %479 : vector<2x32xf32>
    %483 = arith.addf %481, %482 : vector<2x32xf32>
    %484 = math.tanh %483 : vector<2x32xf32>
    %485 = arith.mulf %480, %484 : vector<2x32xf32>
    %c0_187 = arith.constant 0 : index
    %c0_188 = arith.constant 0 : index
    %486 = vector.load %arg17[%c0_187, %c0_188] : memref<16x32xf32, #tpu.memory_space<vmem>>, vector<2x32xf32>
    tpu.vector_store %arg17[%c0_187, %c0_188], %485 {strides = array<i32>} : memref<16x32xf32, #tpu.memory_space<vmem>>, vector<2x32xf32>,
    %c2_189 = arith.constant 2 : index
    %c0_190 = arith.constant 0 : index
    %487 = vector.load %arg16[%c2_189, %c0_190] : memref<16x128xf32, #tpu.memory_space<vmem>>, vector<2x128xf32>
    %c0_191 = arith.constant 0 : index
    %c0_192 = arith.constant 0 : index
    %488 = vector.load %arg8[%c0_191, %c0_192] : memref<32x128xf32, #tpu.memory_space<vmem>>, vector<32x128xf32>
    %cst_193 = arith.constant dense<0.000000e+00> : vector<2x128xf32>
    %489 = tpu.matmul %485, %488, %cst_193 {dimension_numbers = #tpu.dot_dimension_numbers<[1], [0], [0], [1], [0, 0, 1, 1], [], []>} : vector<2x32xf32>, vector<32x128xf32>, vector<2x128xf32> -> vector<2x128xf32>
    %490 = arith.addf %487, %489 : vector<2x128xf32>
    %491 = tpu.iota {dimensions = array<i32: 1>} : vector<2x128xi32>
    %c64_i32_194 = arith.constant 64 : i32
    %492 = vector.broadcast %c64_i32_194 : i32 to vector<2x128xi32>
    %493 = arith.cmpi sge, %491, %492 : vector<2x128xi32>
    %c96_i32_195 = arith.constant 96 : i32
    %494 = vector.broadcast %c96_i32_195 : i32 to vector<2x128xi32>
    %495 = arith.cmpi slt, %491, %494 : vector<2x128xi32>
    %496 = arith.andi %493, %495 : vector<2x128xi1>
    %497 = math.tanh %490 : vector<2x128xf32>
    %498 = arith.negf %490 : vector<2x128xf32>
    %499 = math.exp %498 : vector<2x128xf32>
    %cst_196 = arith.constant 1.000000e+00 : f32
    %500 = vector.broadcast %cst_196 : f32 to vector<2x128xf32>
    %501 = arith.addf %500, %499 : vector<2x128xf32>
    %502 = arith.divf %500, %501 : vector<2x128xf32>
    %503 = arith.select %496, %497, %502 : vector<2x128xi1>, vector<2x128xf32>
    %504 = vector.extract_strided_slice %503 {offsets = [0, 0], sizes = [2, 32], strides = [1, 1]} : vector<2x128xf32> to vector<2x32xf32>
    %505 = vector.extract_strided_slice %503 {offsets = [0, 32], sizes = [2, 32], strides = [1, 1]} : vector<2x128xf32> to vector<2x32xf32>
    %506 = vector.extract_strided_slice %503 {offsets = [0, 64], sizes = [2, 32], strides = [1, 1]} : vector<2x128xf32> to vector<2x32xf32>
    %507 = vector.extract_strided_slice %503 {offsets = [0, 96], sizes = [2, 32], strides = [1, 1]} : vector<2x128xf32> to vector<2x32xf32>
    %508 = arith.mulf %505, %483 : vector<2x32xf32>
    %509 = arith.mulf %504, %506 : vector<2x32xf32>
    %510 = arith.addf %508, %509 : vector<2x32xf32>
    %511 = math.tanh %510 : vector<2x32xf32>
    %512 = arith.mulf %507, %511 : vector<2x32xf32>
    %c2_197 = arith.constant 2 : index
    %c0_198 = arith.constant 0 : index
    %513 = vector.load %arg17[%c2_197, %c0_198] : memref<16x32xf32, #tpu.memory_space<vmem>>, vector<2x32xf32>
    tpu.vector_store %arg17[%c2_197, %c0_198], %512 {strides = array<i32>} : memref<16x32xf32, #tpu.memory_space<vmem>>, vector<2x32xf32>,
    %c4_199 = arith.constant 4 : index
    %c0_200 = arith.constant 0 : index
    %514 = vector.load %arg16[%c4_199, %c0_200] : memref<16x128xf32, #tpu.memory_space<vmem>>, vector<2x128xf32>
    %c0_201 = arith.constant 0 : index
    %c0_202 = arith.constant 0 : index
    %515 = vector.load %arg8[%c0_201, %c0_202] : memref<32x128xf32, #tpu.memory_space<vmem>>, vector<32x128xf32>
    %cst_203 = arith.constant dense<0.000000e+00> : vector<2x128xf32>
    %516 = tpu.matmul %512, %515, %cst_203 {dimension_numbers = #tpu.dot_dimension_numbers<[1], [0], [0], [1], [0, 0, 1, 1], [], []>} : vector<2x32xf32>, vector<32x128xf32>, vector<2x128xf32> -> vector<2x128xf32>
    %517 = arith.addf %514, %516 : vector<2x128xf32>
    %518 = tpu.iota {dimensions = array<i32: 1>} : vector<2x128xi32>
    %c64_i32_204 = arith.constant 64 : i32
    %519 = vector.broadcast %c64_i32_204 : i32 to vector<2x128xi32>
    %520 = arith.cmpi sge, %518, %519 : vector<2x128xi32>
    %c96_i32_205 = arith.constant 96 : i32
    %521 = vector.broadcast %c96_i32_205 : i32 to vector<2x128xi32>
    %522 = arith.cmpi slt, %518, %521 : vector<2x128xi32>
    %523 = arith.andi %520, %522 : vector<2x128xi1>
    %524 = math.tanh %517 : vector<2x128xf32>
    %525 = arith.negf %517 : vector<2x128xf32>
    %526 = math.exp %525 : vector<2x128xf32>
    %cst_206 = arith.constant 1.000000e+00 : f32
    %527 = vector.broadcast %cst_206 : f32 to vector<2x128xf32>
    %528 = arith.addf %527, %526 : vector<2x128xf32>
    %529 = arith.divf %527, %528 : vector<2x128xf32>
    %530 = arith.select %523, %524, %529 : vector<2x128xi1>, vector<2x128xf32>
    %531 = vector.extract_strided_slice %530 {offsets = [0, 0], sizes = [2, 32], strides = [1, 1]} : vector<2x128xf32> to vector<2x32xf32>
    %532 = vector.extract_strided_slice %530 {offsets = [0, 32], sizes = [2, 32], strides = [1, 1]} : vector<2x128xf32> to vector<2x32xf32>
    %533 = vector.extract_strided_slice %530 {offsets = [0, 64], sizes = [2, 32], strides = [1, 1]} : vector<2x128xf32> to vector<2x32xf32>
    %534 = vector.extract_strided_slice %530 {offsets = [0, 96], sizes = [2, 32], strides = [1, 1]} : vector<2x128xf32> to vector<2x32xf32>
    %535 = arith.mulf %532, %510 : vector<2x32xf32>
    %536 = arith.mulf %531, %533 : vector<2x32xf32>
    %537 = arith.addf %535, %536 : vector<2x32xf32>
    %538 = math.tanh %537 : vector<2x32xf32>
    %539 = arith.mulf %534, %538 : vector<2x32xf32>
    %c4_207 = arith.constant 4 : index
    %c0_208 = arith.constant 0 : index
    %540 = vector.load %arg17[%c4_207, %c0_208] : memref<16x32xf32, #tpu.memory_space<vmem>>, vector<2x32xf32>
    tpu.vector_store %arg17[%c4_207, %c0_208], %539 {strides = array<i32>} : memref<16x32xf32, #tpu.memory_space<vmem>>, vector<2x32xf32>,
    %c6_209 = arith.constant 6 : index
    %c0_210 = arith.constant 0 : index
    %541 = vector.load %arg16[%c6_209, %c0_210] : memref<16x128xf32, #tpu.memory_space<vmem>>, vector<2x128xf32>
    %c0_211 = arith.constant 0 : index
    %c0_212 = arith.constant 0 : index
    %542 = vector.load %arg8[%c0_211, %c0_212] : memref<32x128xf32, #tpu.memory_space<vmem>>, vector<32x128xf32>
    %cst_213 = arith.constant dense<0.000000e+00> : vector<2x128xf32>
    %543 = tpu.matmul %539, %542, %cst_213 {dimension_numbers = #tpu.dot_dimension_numbers<[1], [0], [0], [1], [0, 0, 1, 1], [], []>} : vector<2x32xf32>, vector<32x128xf32>, vector<2x128xf32> -> vector<2x128xf32>
    %544 = arith.addf %541, %543 : vector<2x128xf32>
    %545 = tpu.iota {dimensions = array<i32: 1>} : vector<2x128xi32>
    %c64_i32_214 = arith.constant 64 : i32
    %546 = vector.broadcast %c64_i32_214 : i32 to vector<2x128xi32>
    %547 = arith.cmpi sge, %545, %546 : vector<2x128xi32>
    %c96_i32_215 = arith.constant 96 : i32
    %548 = vector.broadcast %c96_i32_215 : i32 to vector<2x128xi32>
    %549 = arith.cmpi slt, %545, %548 : vector<2x128xi32>
    %550 = arith.andi %547, %549 : vector<2x128xi1>
    %551 = math.tanh %544 : vector<2x128xf32>
    %552 = arith.negf %544 : vector<2x128xf32>
    %553 = math.exp %552 : vector<2x128xf32>
    %cst_216 = arith.constant 1.000000e+00 : f32
    %554 = vector.broadcast %cst_216 : f32 to vector<2x128xf32>
    %555 = arith.addf %554, %553 : vector<2x128xf32>
    %556 = arith.divf %554, %555 : vector<2x128xf32>
    %557 = arith.select %550, %551, %556 : vector<2x128xi1>, vector<2x128xf32>
    %558 = vector.extract_strided_slice %557 {offsets = [0, 0], sizes = [2, 32], strides = [1, 1]} : vector<2x128xf32> to vector<2x32xf32>
    %559 = vector.extract_strided_slice %557 {offsets = [0, 32], sizes = [2, 32], strides = [1, 1]} : vector<2x128xf32> to vector<2x32xf32>
    %560 = vector.extract_strided_slice %557 {offsets = [0, 64], sizes = [2, 32], strides = [1, 1]} : vector<2x128xf32> to vector<2x32xf32>
    %561 = vector.extract_strided_slice %557 {offsets = [0, 96], sizes = [2, 32], strides = [1, 1]} : vector<2x128xf32> to vector<2x32xf32>
    %562 = arith.mulf %559, %537 : vector<2x32xf32>
    %563 = arith.mulf %558, %560 : vector<2x32xf32>
    %564 = arith.addf %562, %563 : vector<2x32xf32>
    %565 = math.tanh %564 : vector<2x32xf32>
    %566 = arith.mulf %561, %565 : vector<2x32xf32>
    %c6_217 = arith.constant 6 : index
    %c0_218 = arith.constant 0 : index
    %567 = vector.load %arg17[%c6_217, %c0_218] : memref<16x32xf32, #tpu.memory_space<vmem>>, vector<2x32xf32>
    tpu.vector_store %arg17[%c6_217, %c0_218], %566 {strides = array<i32>} : memref<16x32xf32, #tpu.memory_space<vmem>>, vector<2x32xf32>,
    %c8_219 = arith.constant 8 : index
    %c0_220 = arith.constant 0 : index
    %568 = vector.load %arg16[%c8_219, %c0_220] : memref<16x128xf32, #tpu.memory_space<vmem>>, vector<2x128xf32>
    %c0_221 = arith.constant 0 : index
    %c0_222 = arith.constant 0 : index
    %569 = vector.load %arg8[%c0_221, %c0_222] : memref<32x128xf32, #tpu.memory_space<vmem>>, vector<32x128xf32>
    %cst_223 = arith.constant dense<0.000000e+00> : vector<2x128xf32>
    %570 = tpu.matmul %566, %569, %cst_223 {dimension_numbers = #tpu.dot_dimension_numbers<[1], [0], [0], [1], [0, 0, 1, 1], [], []>} : vector<2x32xf32>, vector<32x128xf32>, vector<2x128xf32> -> vector<2x128xf32>
    %571 = arith.addf %568, %570 : vector<2x128xf32>
    %572 = tpu.iota {dimensions = array<i32: 1>} : vector<2x128xi32>
    %c64_i32_224 = arith.constant 64 : i32
    %573 = vector.broadcast %c64_i32_224 : i32 to vector<2x128xi32>
    %574 = arith.cmpi sge, %572, %573 : vector<2x128xi32>
    %c96_i32_225 = arith.constant 96 : i32
    %575 = vector.broadcast %c96_i32_225 : i32 to vector<2x128xi32>
    %576 = arith.cmpi slt, %572, %575 : vector<2x128xi32>
    %577 = arith.andi %574, %576 : vector<2x128xi1>
    %578 = math.tanh %571 : vector<2x128xf32>
    %579 = arith.negf %571 : vector<2x128xf32>
    %580 = math.exp %579 : vector<2x128xf32>
    %cst_226 = arith.constant 1.000000e+00 : f32
    %581 = vector.broadcast %cst_226 : f32 to vector<2x128xf32>
    %582 = arith.addf %581, %580 : vector<2x128xf32>
    %583 = arith.divf %581, %582 : vector<2x128xf32>
    %584 = arith.select %577, %578, %583 : vector<2x128xi1>, vector<2x128xf32>
    %585 = vector.extract_strided_slice %584 {offsets = [0, 0], sizes = [2, 32], strides = [1, 1]} : vector<2x128xf32> to vector<2x32xf32>
    %586 = vector.extract_strided_slice %584 {offsets = [0, 32], sizes = [2, 32], strides = [1, 1]} : vector<2x128xf32> to vector<2x32xf32>
    %587 = vector.extract_strided_slice %584 {offsets = [0, 64], sizes = [2, 32], strides = [1, 1]} : vector<2x128xf32> to vector<2x32xf32>
    %588 = vector.extract_strided_slice %584 {offsets = [0, 96], sizes = [2, 32], strides = [1, 1]} : vector<2x128xf32> to vector<2x32xf32>
    %589 = arith.mulf %586, %564 : vector<2x32xf32>
    %590 = arith.mulf %585, %587 : vector<2x32xf32>
    %591 = arith.addf %589, %590 : vector<2x32xf32>
    %592 = math.tanh %591 : vector<2x32xf32>
    %593 = arith.mulf %588, %592 : vector<2x32xf32>
    %c8_227 = arith.constant 8 : index
    %c0_228 = arith.constant 0 : index
    %594 = vector.load %arg17[%c8_227, %c0_228] : memref<16x32xf32, #tpu.memory_space<vmem>>, vector<2x32xf32>
    tpu.vector_store %arg17[%c8_227, %c0_228], %593 {strides = array<i32>} : memref<16x32xf32, #tpu.memory_space<vmem>>, vector<2x32xf32>,
    %c10_229 = arith.constant 10 : index
    %c0_230 = arith.constant 0 : index
    %595 = vector.load %arg16[%c10_229, %c0_230] : memref<16x128xf32, #tpu.memory_space<vmem>>, vector<2x128xf32>
    %c0_231 = arith.constant 0 : index
    %c0_232 = arith.constant 0 : index
    %596 = vector.load %arg8[%c0_231, %c0_232] : memref<32x128xf32, #tpu.memory_space<vmem>>, vector<32x128xf32>
    %cst_233 = arith.constant dense<0.000000e+00> : vector<2x128xf32>
    %597 = tpu.matmul %593, %596, %cst_233 {dimension_numbers = #tpu.dot_dimension_numbers<[1], [0], [0], [1], [0, 0, 1, 1], [], []>} : vector<2x32xf32>, vector<32x128xf32>, vector<2x128xf32> -> vector<2x128xf32>
    %598 = arith.addf %595, %597 : vector<2x128xf32>
    %599 = tpu.iota {dimensions = array<i32: 1>} : vector<2x128xi32>
    %c64_i32_234 = arith.constant 64 : i32
    %600 = vector.broadcast %c64_i32_234 : i32 to vector<2x128xi32>
    %601 = arith.cmpi sge, %599, %600 : vector<2x128xi32>
    %c96_i32_235 = arith.constant 96 : i32
    %602 = vector.broadcast %c96_i32_235 : i32 to vector<2x128xi32>
    %603 = arith.cmpi slt, %599, %602 : vector<2x128xi32>
    %604 = arith.andi %601, %603 : vector<2x128xi1>
    %605 = math.tanh %598 : vector<2x128xf32>
    %606 = arith.negf %598 : vector<2x128xf32>
    %607 = math.exp %606 : vector<2x128xf32>
    %cst_236 = arith.constant 1.000000e+00 : f32
    %608 = vector.broadcast %cst_236 : f32 to vector<2x128xf32>
    %609 = arith.addf %608, %607 : vector<2x128xf32>
    %610 = arith.divf %608, %609 : vector<2x128xf32>
    %611 = arith.select %604, %605, %610 : vector<2x128xi1>, vector<2x128xf32>
    %612 = vector.extract_strided_slice %611 {offsets = [0, 0], sizes = [2, 32], strides = [1, 1]} : vector<2x128xf32> to vector<2x32xf32>
    %613 = vector.extract_strided_slice %611 {offsets = [0, 32], sizes = [2, 32], strides = [1, 1]} : vector<2x128xf32> to vector<2x32xf32>
    %614 = vector.extract_strided_slice %611 {offsets = [0, 64], sizes = [2, 32], strides = [1, 1]} : vector<2x128xf32> to vector<2x32xf32>
    %615 = vector.extract_strided_slice %611 {offsets = [0, 96], sizes = [2, 32], strides = [1, 1]} : vector<2x128xf32> to vector<2x32xf32>
    %616 = arith.mulf %613, %591 : vector<2x32xf32>
    %617 = arith.mulf %612, %614 : vector<2x32xf32>
    %618 = arith.addf %616, %617 : vector<2x32xf32>
    %619 = math.tanh %618 : vector<2x32xf32>
    %620 = arith.mulf %615, %619 : vector<2x32xf32>
    %c10_237 = arith.constant 10 : index
    %c0_238 = arith.constant 0 : index
    %621 = vector.load %arg17[%c10_237, %c0_238] : memref<16x32xf32, #tpu.memory_space<vmem>>, vector<2x32xf32>
    tpu.vector_store %arg17[%c10_237, %c0_238], %620 {strides = array<i32>} : memref<16x32xf32, #tpu.memory_space<vmem>>, vector<2x32xf32>,
    %c12_239 = arith.constant 12 : index
    %c0_240 = arith.constant 0 : index
    %622 = vector.load %arg16[%c12_239, %c0_240] : memref<16x128xf32, #tpu.memory_space<vmem>>, vector<2x128xf32>
    %c0_241 = arith.constant 0 : index
    %c0_242 = arith.constant 0 : index
    %623 = vector.load %arg8[%c0_241, %c0_242] : memref<32x128xf32, #tpu.memory_space<vmem>>, vector<32x128xf32>
    %cst_243 = arith.constant dense<0.000000e+00> : vector<2x128xf32>
    %624 = tpu.matmul %620, %623, %cst_243 {dimension_numbers = #tpu.dot_dimension_numbers<[1], [0], [0], [1], [0, 0, 1, 1], [], []>} : vector<2x32xf32>, vector<32x128xf32>, vector<2x128xf32> -> vector<2x128xf32>
    %625 = arith.addf %622, %624 : vector<2x128xf32>
    %626 = tpu.iota {dimensions = array<i32: 1>} : vector<2x128xi32>
    %c64_i32_244 = arith.constant 64 : i32
    %627 = vector.broadcast %c64_i32_244 : i32 to vector<2x128xi32>
    %628 = arith.cmpi sge, %626, %627 : vector<2x128xi32>
    %c96_i32_245 = arith.constant 96 : i32
    %629 = vector.broadcast %c96_i32_245 : i32 to vector<2x128xi32>
    %630 = arith.cmpi slt, %626, %629 : vector<2x128xi32>
    %631 = arith.andi %628, %630 : vector<2x128xi1>
    %632 = math.tanh %625 : vector<2x128xf32>
    %633 = arith.negf %625 : vector<2x128xf32>
    %634 = math.exp %633 : vector<2x128xf32>
    %cst_246 = arith.constant 1.000000e+00 : f32
    %635 = vector.broadcast %cst_246 : f32 to vector<2x128xf32>
    %636 = arith.addf %635, %634 : vector<2x128xf32>
    %637 = arith.divf %635, %636 : vector<2x128xf32>
    %638 = arith.select %631, %632, %637 : vector<2x128xi1>, vector<2x128xf32>
    %639 = vector.extract_strided_slice %638 {offsets = [0, 0], sizes = [2, 32], strides = [1, 1]} : vector<2x128xf32> to vector<2x32xf32>
    %640 = vector.extract_strided_slice %638 {offsets = [0, 32], sizes = [2, 32], strides = [1, 1]} : vector<2x128xf32> to vector<2x32xf32>
    %641 = vector.extract_strided_slice %638 {offsets = [0, 64], sizes = [2, 32], strides = [1, 1]} : vector<2x128xf32> to vector<2x32xf32>
    %642 = vector.extract_strided_slice %638 {offsets = [0, 96], sizes = [2, 32], strides = [1, 1]} : vector<2x128xf32> to vector<2x32xf32>
    %643 = arith.mulf %640, %618 : vector<2x32xf32>
    %644 = arith.mulf %639, %641 : vector<2x32xf32>
    %645 = arith.addf %643, %644 : vector<2x32xf32>
    %646 = math.tanh %645 : vector<2x32xf32>
    %647 = arith.mulf %642, %646 : vector<2x32xf32>
    %c12_247 = arith.constant 12 : index
    %c0_248 = arith.constant 0 : index
    %648 = vector.load %arg17[%c12_247, %c0_248] : memref<16x32xf32, #tpu.memory_space<vmem>>, vector<2x32xf32>
    tpu.vector_store %arg17[%c12_247, %c0_248], %647 {strides = array<i32>} : memref<16x32xf32, #tpu.memory_space<vmem>>, vector<2x32xf32>,
    %c14_249 = arith.constant 14 : index
    %c0_250 = arith.constant 0 : index
    %649 = vector.load %arg16[%c14_249, %c0_250] : memref<16x128xf32, #tpu.memory_space<vmem>>, vector<2x128xf32>
    %c0_251 = arith.constant 0 : index
    %c0_252 = arith.constant 0 : index
    %650 = vector.load %arg8[%c0_251, %c0_252] : memref<32x128xf32, #tpu.memory_space<vmem>>, vector<32x128xf32>
    %cst_253 = arith.constant dense<0.000000e+00> : vector<2x128xf32>
    %651 = tpu.matmul %647, %650, %cst_253 {dimension_numbers = #tpu.dot_dimension_numbers<[1], [0], [0], [1], [0, 0, 1, 1], [], []>} : vector<2x32xf32>, vector<32x128xf32>, vector<2x128xf32> -> vector<2x128xf32>
    %652 = arith.addf %649, %651 : vector<2x128xf32>
    %653 = tpu.iota {dimensions = array<i32: 1>} : vector<2x128xi32>
    %c64_i32_254 = arith.constant 64 : i32
    %654 = vector.broadcast %c64_i32_254 : i32 to vector<2x128xi32>
    %655 = arith.cmpi sge, %653, %654 : vector<2x128xi32>
    %c96_i32_255 = arith.constant 96 : i32
    %656 = vector.broadcast %c96_i32_255 : i32 to vector<2x128xi32>
    %657 = arith.cmpi slt, %653, %656 : vector<2x128xi32>
    %658 = arith.andi %655, %657 : vector<2x128xi1>
    %659 = math.tanh %652 : vector<2x128xf32>
    %660 = arith.negf %652 : vector<2x128xf32>
    %661 = math.exp %660 : vector<2x128xf32>
    %cst_256 = arith.constant 1.000000e+00 : f32
    %662 = vector.broadcast %cst_256 : f32 to vector<2x128xf32>
    %663 = arith.addf %662, %661 : vector<2x128xf32>
    %664 = arith.divf %662, %663 : vector<2x128xf32>
    %665 = arith.select %658, %659, %664 : vector<2x128xi1>, vector<2x128xf32>
    %666 = vector.extract_strided_slice %665 {offsets = [0, 0], sizes = [2, 32], strides = [1, 1]} : vector<2x128xf32> to vector<2x32xf32>
    %667 = vector.extract_strided_slice %665 {offsets = [0, 32], sizes = [2, 32], strides = [1, 1]} : vector<2x128xf32> to vector<2x32xf32>
    %668 = vector.extract_strided_slice %665 {offsets = [0, 64], sizes = [2, 32], strides = [1, 1]} : vector<2x128xf32> to vector<2x32xf32>
    %669 = vector.extract_strided_slice %665 {offsets = [0, 96], sizes = [2, 32], strides = [1, 1]} : vector<2x128xf32> to vector<2x32xf32>
    %670 = arith.mulf %667, %645 : vector<2x32xf32>
    %671 = arith.mulf %666, %668 : vector<2x32xf32>
    %672 = arith.addf %670, %671 : vector<2x32xf32>
    %673 = math.tanh %672 : vector<2x32xf32>
    %674 = arith.mulf %669, %673 : vector<2x32xf32>
    %c14_257 = arith.constant 14 : index
    %c0_258 = arith.constant 0 : index
    %675 = vector.load %arg17[%c14_257, %c0_258] : memref<16x32xf32, #tpu.memory_space<vmem>>, vector<2x32xf32>
    tpu.vector_store %arg17[%c14_257, %c0_258], %674 {strides = array<i32>} : memref<16x32xf32, #tpu.memory_space<vmem>>, vector<2x32xf32>,
    %c0_259 = arith.constant 0 : index
    %c0_260 = arith.constant 0 : index
    %676 = vector.load %arg17[%c0_259, %c0_260] : memref<16x32xf32, #tpu.memory_space<vmem>>, vector<16x32xf32>
    %c0_261 = arith.constant 0 : index
    %c0_262 = arith.constant 0 : index
    %677 = vector.load %arg10[%c0_261, %c0_262] : memref<32x128xf32, #tpu.memory_space<vmem>>, vector<32x128xf32>
    %cst_263 = arith.constant dense<0.000000e+00> : vector<16x128xf32>
    %678 = tpu.matmul %676, %677, %cst_263 {dimension_numbers = #tpu.dot_dimension_numbers<[1], [0], [0], [1], [0, 0, 1, 1], [], []>} : vector<16x32xf32>, vector<32x128xf32>, vector<16x128xf32> -> vector<16x128xf32>
    %c0_264 = arith.constant 0 : index
    %c0_265 = arith.constant 0 : index
    %679 = vector.load %arg12[%c0_264, %c0_265] : memref<1x128xf32, #tpu.memory_space<vmem>>, vector<1x128xf32>
    %680 = vector.broadcast %679 : vector<1x128xf32> to vector<16x128xf32>
    %681 = arith.addf %678, %680 : vector<16x128xf32>
    %c0_266 = arith.constant 0 : index
    %c0_267 = arith.constant 0 : index
    %682 = vector.load %arg16[%c0_266, %c0_267] : memref<16x128xf32, #tpu.memory_space<vmem>>, vector<16x128xf32>
    tpu.vector_store %arg16[%c0_266, %c0_267], %681 {strides = array<i32>} : memref<16x128xf32, #tpu.memory_space<vmem>>, vector<16x128xf32>,
    %cst_268 = arith.constant 0.000000e+00 : f32
    %683 = vector.broadcast %cst_268 : f32 to vector<2x32xf32>
    %cst_269 = arith.constant 0.000000e+00 : f32
    %684 = vector.broadcast %cst_269 : f32 to vector<2x32xf32>
    %c0_270 = arith.constant 0 : index
    %c0_271 = arith.constant 0 : index
    %685 = vector.load %arg16[%c0_270, %c0_271] : memref<16x128xf32, #tpu.memory_space<vmem>>, vector<2x128xf32>
    %c0_272 = arith.constant 0 : index
    %c0_273 = arith.constant 0 : index
    %686 = vector.load %arg11[%c0_272, %c0_273] : memref<32x128xf32, #tpu.memory_space<vmem>>, vector<32x128xf32>
    %cst_274 = arith.constant dense<0.000000e+00> : vector<2x128xf32>
    %687 = tpu.matmul %683, %686, %cst_274 {dimension_numbers = #tpu.dot_dimension_numbers<[1], [0], [0], [1], [0, 0, 1, 1], [], []>} : vector<2x32xf32>, vector<32x128xf32>, vector<2x128xf32> -> vector<2x128xf32>
    %688 = arith.addf %685, %687 : vector<2x128xf32>
    %689 = tpu.iota {dimensions = array<i32: 1>} : vector<2x128xi32>
    %c64_i32_275 = arith.constant 64 : i32
    %690 = vector.broadcast %c64_i32_275 : i32 to vector<2x128xi32>
    %691 = arith.cmpi sge, %689, %690 : vector<2x128xi32>
    %c96_i32_276 = arith.constant 96 : i32
    %692 = vector.broadcast %c96_i32_276 : i32 to vector<2x128xi32>
    %693 = arith.cmpi slt, %689, %692 : vector<2x128xi32>
    %694 = arith.andi %691, %693 : vector<2x128xi1>
    %695 = math.tanh %688 : vector<2x128xf32>
    %696 = arith.negf %688 : vector<2x128xf32>
    %697 = math.exp %696 : vector<2x128xf32>
    %cst_277 = arith.constant 1.000000e+00 : f32
    %698 = vector.broadcast %cst_277 : f32 to vector<2x128xf32>
    %699 = arith.addf %698, %697 : vector<2x128xf32>
    %700 = arith.divf %698, %699 : vector<2x128xf32>
    %701 = arith.select %694, %695, %700 : vector<2x128xi1>, vector<2x128xf32>
    %702 = vector.extract_strided_slice %701 {offsets = [0, 0], sizes = [2, 32], strides = [1, 1]} : vector<2x128xf32> to vector<2x32xf32>
    %703 = vector.extract_strided_slice %701 {offsets = [0, 32], sizes = [2, 32], strides = [1, 1]} : vector<2x128xf32> to vector<2x32xf32>
    %704 = vector.extract_strided_slice %701 {offsets = [0, 64], sizes = [2, 32], strides = [1, 1]} : vector<2x128xf32> to vector<2x32xf32>
    %705 = vector.extract_strided_slice %701 {offsets = [0, 96], sizes = [2, 32], strides = [1, 1]} : vector<2x128xf32> to vector<2x32xf32>
    %706 = arith.mulf %703, %684 : vector<2x32xf32>
    %707 = arith.mulf %702, %704 : vector<2x32xf32>
    %708 = arith.addf %706, %707 : vector<2x32xf32>
    %709 = math.tanh %708 : vector<2x32xf32>
    %710 = arith.mulf %705, %709 : vector<2x32xf32>
    %c2_278 = arith.constant 2 : index
    %c0_279 = arith.constant 0 : index
    %711 = vector.load %arg16[%c2_278, %c0_279] : memref<16x128xf32, #tpu.memory_space<vmem>>, vector<2x128xf32>
    %c0_280 = arith.constant 0 : index
    %c0_281 = arith.constant 0 : index
    %712 = vector.load %arg11[%c0_280, %c0_281] : memref<32x128xf32, #tpu.memory_space<vmem>>, vector<32x128xf32>
    %cst_282 = arith.constant dense<0.000000e+00> : vector<2x128xf32>
    %713 = tpu.matmul %710, %712, %cst_282 {dimension_numbers = #tpu.dot_dimension_numbers<[1], [0], [0], [1], [0, 0, 1, 1], [], []>} : vector<2x32xf32>, vector<32x128xf32>, vector<2x128xf32> -> vector<2x128xf32>
    %714 = arith.addf %711, %713 : vector<2x128xf32>
    %715 = tpu.iota {dimensions = array<i32: 1>} : vector<2x128xi32>
    %c64_i32_283 = arith.constant 64 : i32
    %716 = vector.broadcast %c64_i32_283 : i32 to vector<2x128xi32>
    %717 = arith.cmpi sge, %715, %716 : vector<2x128xi32>
    %c96_i32_284 = arith.constant 96 : i32
    %718 = vector.broadcast %c96_i32_284 : i32 to vector<2x128xi32>
    %719 = arith.cmpi slt, %715, %718 : vector<2x128xi32>
    %720 = arith.andi %717, %719 : vector<2x128xi1>
    %721 = math.tanh %714 : vector<2x128xf32>
    %722 = arith.negf %714 : vector<2x128xf32>
    %723 = math.exp %722 : vector<2x128xf32>
    %cst_285 = arith.constant 1.000000e+00 : f32
    %724 = vector.broadcast %cst_285 : f32 to vector<2x128xf32>
    %725 = arith.addf %724, %723 : vector<2x128xf32>
    %726 = arith.divf %724, %725 : vector<2x128xf32>
    %727 = arith.select %720, %721, %726 : vector<2x128xi1>, vector<2x128xf32>
    %728 = vector.extract_strided_slice %727 {offsets = [0, 0], sizes = [2, 32], strides = [1, 1]} : vector<2x128xf32> to vector<2x32xf32>
    %729 = vector.extract_strided_slice %727 {offsets = [0, 32], sizes = [2, 32], strides = [1, 1]} : vector<2x128xf32> to vector<2x32xf32>
    %730 = vector.extract_strided_slice %727 {offsets = [0, 64], sizes = [2, 32], strides = [1, 1]} : vector<2x128xf32> to vector<2x32xf32>
    %731 = vector.extract_strided_slice %727 {offsets = [0, 96], sizes = [2, 32], strides = [1, 1]} : vector<2x128xf32> to vector<2x32xf32>
    %732 = arith.mulf %729, %708 : vector<2x32xf32>
    %733 = arith.mulf %728, %730 : vector<2x32xf32>
    %734 = arith.addf %732, %733 : vector<2x32xf32>
    %735 = math.tanh %734 : vector<2x32xf32>
    %736 = arith.mulf %731, %735 : vector<2x32xf32>
    %c4_286 = arith.constant 4 : index
    %c0_287 = arith.constant 0 : index
    %737 = vector.load %arg16[%c4_286, %c0_287] : memref<16x128xf32, #tpu.memory_space<vmem>>, vector<2x128xf32>
    %c0_288 = arith.constant 0 : index
    %c0_289 = arith.constant 0 : index
    %738 = vector.load %arg11[%c0_288, %c0_289] : memref<32x128xf32, #tpu.memory_space<vmem>>, vector<32x128xf32>
    %cst_290 = arith.constant dense<0.000000e+00> : vector<2x128xf32>
    %739 = tpu.matmul %736, %738, %cst_290 {dimension_numbers = #tpu.dot_dimension_numbers<[1], [0], [0], [1], [0, 0, 1, 1], [], []>} : vector<2x32xf32>, vector<32x128xf32>, vector<2x128xf32> -> vector<2x128xf32>
    %740 = arith.addf %737, %739 : vector<2x128xf32>
    %741 = tpu.iota {dimensions = array<i32: 1>} : vector<2x128xi32>
    %c64_i32_291 = arith.constant 64 : i32
    %742 = vector.broadcast %c64_i32_291 : i32 to vector<2x128xi32>
    %743 = arith.cmpi sge, %741, %742 : vector<2x128xi32>
    %c96_i32_292 = arith.constant 96 : i32
    %744 = vector.broadcast %c96_i32_292 : i32 to vector<2x128xi32>
    %745 = arith.cmpi slt, %741, %744 : vector<2x128xi32>
    %746 = arith.andi %743, %745 : vector<2x128xi1>
    %747 = math.tanh %740 : vector<2x128xf32>
    %748 = arith.negf %740 : vector<2x128xf32>
    %749 = math.exp %748 : vector<2x128xf32>
    %cst_293 = arith.constant 1.000000e+00 : f32
    %750 = vector.broadcast %cst_293 : f32 to vector<2x128xf32>
    %751 = arith.addf %750, %749 : vector<2x128xf32>
    %752 = arith.divf %750, %751 : vector<2x128xf32>
    %753 = arith.select %746, %747, %752 : vector<2x128xi1>, vector<2x128xf32>
    %754 = vector.extract_strided_slice %753 {offsets = [0, 0], sizes = [2, 32], strides = [1, 1]} : vector<2x128xf32> to vector<2x32xf32>
    %755 = vector.extract_strided_slice %753 {offsets = [0, 32], sizes = [2, 32], strides = [1, 1]} : vector<2x128xf32> to vector<2x32xf32>
    %756 = vector.extract_strided_slice %753 {offsets = [0, 64], sizes = [2, 32], strides = [1, 1]} : vector<2x128xf32> to vector<2x32xf32>
    %757 = vector.extract_strided_slice %753 {offsets = [0, 96], sizes = [2, 32], strides = [1, 1]} : vector<2x128xf32> to vector<2x32xf32>
    %758 = arith.mulf %755, %734 : vector<2x32xf32>
    %759 = arith.mulf %754, %756 : vector<2x32xf32>
    %760 = arith.addf %758, %759 : vector<2x32xf32>
    %761 = math.tanh %760 : vector<2x32xf32>
    %762 = arith.mulf %757, %761 : vector<2x32xf32>
    %c6_294 = arith.constant 6 : index
    %c0_295 = arith.constant 0 : index
    %763 = vector.load %arg16[%c6_294, %c0_295] : memref<16x128xf32, #tpu.memory_space<vmem>>, vector<2x128xf32>
    %c0_296 = arith.constant 0 : index
    %c0_297 = arith.constant 0 : index
    %764 = vector.load %arg11[%c0_296, %c0_297] : memref<32x128xf32, #tpu.memory_space<vmem>>, vector<32x128xf32>
    %cst_298 = arith.constant dense<0.000000e+00> : vector<2x128xf32>
    %765 = tpu.matmul %762, %764, %cst_298 {dimension_numbers = #tpu.dot_dimension_numbers<[1], [0], [0], [1], [0, 0, 1, 1], [], []>} : vector<2x32xf32>, vector<32x128xf32>, vector<2x128xf32> -> vector<2x128xf32>
    %766 = arith.addf %763, %765 : vector<2x128xf32>
    %767 = tpu.iota {dimensions = array<i32: 1>} : vector<2x128xi32>
    %c64_i32_299 = arith.constant 64 : i32
    %768 = vector.broadcast %c64_i32_299 : i32 to vector<2x128xi32>
    %769 = arith.cmpi sge, %767, %768 : vector<2x128xi32>
    %c96_i32_300 = arith.constant 96 : i32
    %770 = vector.broadcast %c96_i32_300 : i32 to vector<2x128xi32>
    %771 = arith.cmpi slt, %767, %770 : vector<2x128xi32>
    %772 = arith.andi %769, %771 : vector<2x128xi1>
    %773 = math.tanh %766 : vector<2x128xf32>
    %774 = arith.negf %766 : vector<2x128xf32>
    %775 = math.exp %774 : vector<2x128xf32>
    %cst_301 = arith.constant 1.000000e+00 : f32
    %776 = vector.broadcast %cst_301 : f32 to vector<2x128xf32>
    %777 = arith.addf %776, %775 : vector<2x128xf32>
    %778 = arith.divf %776, %777 : vector<2x128xf32>
    %779 = arith.select %772, %773, %778 : vector<2x128xi1>, vector<2x128xf32>
    %780 = vector.extract_strided_slice %779 {offsets = [0, 0], sizes = [2, 32], strides = [1, 1]} : vector<2x128xf32> to vector<2x32xf32>
    %781 = vector.extract_strided_slice %779 {offsets = [0, 32], sizes = [2, 32], strides = [1, 1]} : vector<2x128xf32> to vector<2x32xf32>
    %782 = vector.extract_strided_slice %779 {offsets = [0, 64], sizes = [2, 32], strides = [1, 1]} : vector<2x128xf32> to vector<2x32xf32>
    %783 = vector.extract_strided_slice %779 {offsets = [0, 96], sizes = [2, 32], strides = [1, 1]} : vector<2x128xf32> to vector<2x32xf32>
    %784 = arith.mulf %781, %760 : vector<2x32xf32>
    %785 = arith.mulf %780, %782 : vector<2x32xf32>
    %786 = arith.addf %784, %785 : vector<2x32xf32>
    %787 = math.tanh %786 : vector<2x32xf32>
    %788 = arith.mulf %783, %787 : vector<2x32xf32>
    %c8_302 = arith.constant 8 : index
    %c0_303 = arith.constant 0 : index
    %789 = vector.load %arg16[%c8_302, %c0_303] : memref<16x128xf32, #tpu.memory_space<vmem>>, vector<2x128xf32>
    %c0_304 = arith.constant 0 : index
    %c0_305 = arith.constant 0 : index
    %790 = vector.load %arg11[%c0_304, %c0_305] : memref<32x128xf32, #tpu.memory_space<vmem>>, vector<32x128xf32>
    %cst_306 = arith.constant dense<0.000000e+00> : vector<2x128xf32>
    %791 = tpu.matmul %788, %790, %cst_306 {dimension_numbers = #tpu.dot_dimension_numbers<[1], [0], [0], [1], [0, 0, 1, 1], [], []>} : vector<2x32xf32>, vector<32x128xf32>, vector<2x128xf32> -> vector<2x128xf32>
    %792 = arith.addf %789, %791 : vector<2x128xf32>
    %793 = tpu.iota {dimensions = array<i32: 1>} : vector<2x128xi32>
    %c64_i32_307 = arith.constant 64 : i32
    %794 = vector.broadcast %c64_i32_307 : i32 to vector<2x128xi32>
    %795 = arith.cmpi sge, %793, %794 : vector<2x128xi32>
    %c96_i32_308 = arith.constant 96 : i32
    %796 = vector.broadcast %c96_i32_308 : i32 to vector<2x128xi32>
    %797 = arith.cmpi slt, %793, %796 : vector<2x128xi32>
    %798 = arith.andi %795, %797 : vector<2x128xi1>
    %799 = math.tanh %792 : vector<2x128xf32>
    %800 = arith.negf %792 : vector<2x128xf32>
    %801 = math.exp %800 : vector<2x128xf32>
    %cst_309 = arith.constant 1.000000e+00 : f32
    %802 = vector.broadcast %cst_309 : f32 to vector<2x128xf32>
    %803 = arith.addf %802, %801 : vector<2x128xf32>
    %804 = arith.divf %802, %803 : vector<2x128xf32>
    %805 = arith.select %798, %799, %804 : vector<2x128xi1>, vector<2x128xf32>
    %806 = vector.extract_strided_slice %805 {offsets = [0, 0], sizes = [2, 32], strides = [1, 1]} : vector<2x128xf32> to vector<2x32xf32>
    %807 = vector.extract_strided_slice %805 {offsets = [0, 32], sizes = [2, 32], strides = [1, 1]} : vector<2x128xf32> to vector<2x32xf32>
    %808 = vector.extract_strided_slice %805 {offsets = [0, 64], sizes = [2, 32], strides = [1, 1]} : vector<2x128xf32> to vector<2x32xf32>
    %809 = vector.extract_strided_slice %805 {offsets = [0, 96], sizes = [2, 32], strides = [1, 1]} : vector<2x128xf32> to vector<2x32xf32>
    %810 = arith.mulf %807, %786 : vector<2x32xf32>
    %811 = arith.mulf %806, %808 : vector<2x32xf32>
    %812 = arith.addf %810, %811 : vector<2x32xf32>
    %813 = math.tanh %812 : vector<2x32xf32>
    %814 = arith.mulf %809, %813 : vector<2x32xf32>
    %c10_310 = arith.constant 10 : index
    %c0_311 = arith.constant 0 : index
    %815 = vector.load %arg16[%c10_310, %c0_311] : memref<16x128xf32, #tpu.memory_space<vmem>>, vector<2x128xf32>
    %c0_312 = arith.constant 0 : index
    %c0_313 = arith.constant 0 : index
    %816 = vector.load %arg11[%c0_312, %c0_313] : memref<32x128xf32, #tpu.memory_space<vmem>>, vector<32x128xf32>
    %cst_314 = arith.constant dense<0.000000e+00> : vector<2x128xf32>
    %817 = tpu.matmul %814, %816, %cst_314 {dimension_numbers = #tpu.dot_dimension_numbers<[1], [0], [0], [1], [0, 0, 1, 1], [], []>} : vector<2x32xf32>, vector<32x128xf32>, vector<2x128xf32> -> vector<2x128xf32>
    %818 = arith.addf %815, %817 : vector<2x128xf32>
    %819 = tpu.iota {dimensions = array<i32: 1>} : vector<2x128xi32>
    %c64_i32_315 = arith.constant 64 : i32
    %820 = vector.broadcast %c64_i32_315 : i32 to vector<2x128xi32>
    %821 = arith.cmpi sge, %819, %820 : vector<2x128xi32>
    %c96_i32_316 = arith.constant 96 : i32
    %822 = vector.broadcast %c96_i32_316 : i32 to vector<2x128xi32>
    %823 = arith.cmpi slt, %819, %822 : vector<2x128xi32>
    %824 = arith.andi %821, %823 : vector<2x128xi1>
    %825 = math.tanh %818 : vector<2x128xf32>
    %826 = arith.negf %818 : vector<2x128xf32>
    %827 = math.exp %826 : vector<2x128xf32>
    %cst_317 = arith.constant 1.000000e+00 : f32
    %828 = vector.broadcast %cst_317 : f32 to vector<2x128xf32>
    %829 = arith.addf %828, %827 : vector<2x128xf32>
    %830 = arith.divf %828, %829 : vector<2x128xf32>
    %831 = arith.select %824, %825, %830 : vector<2x128xi1>, vector<2x128xf32>
    %832 = vector.extract_strided_slice %831 {offsets = [0, 0], sizes = [2, 32], strides = [1, 1]} : vector<2x128xf32> to vector<2x32xf32>
    %833 = vector.extract_strided_slice %831 {offsets = [0, 32], sizes = [2, 32], strides = [1, 1]} : vector<2x128xf32> to vector<2x32xf32>
    %834 = vector.extract_strided_slice %831 {offsets = [0, 64], sizes = [2, 32], strides = [1, 1]} : vector<2x128xf32> to vector<2x32xf32>
    %835 = vector.extract_strided_slice %831 {offsets = [0, 96], sizes = [2, 32], strides = [1, 1]} : vector<2x128xf32> to vector<2x32xf32>
    %836 = arith.mulf %833, %812 : vector<2x32xf32>
    %837 = arith.mulf %832, %834 : vector<2x32xf32>
    %838 = arith.addf %836, %837 : vector<2x32xf32>
    %839 = math.tanh %838 : vector<2x32xf32>
    %840 = arith.mulf %835, %839 : vector<2x32xf32>
    %c12_318 = arith.constant 12 : index
    %c0_319 = arith.constant 0 : index
    %841 = vector.load %arg16[%c12_318, %c0_319] : memref<16x128xf32, #tpu.memory_space<vmem>>, vector<2x128xf32>
    %c0_320 = arith.constant 0 : index
    %c0_321 = arith.constant 0 : index
    %842 = vector.load %arg11[%c0_320, %c0_321] : memref<32x128xf32, #tpu.memory_space<vmem>>, vector<32x128xf32>
    %cst_322 = arith.constant dense<0.000000e+00> : vector<2x128xf32>
    %843 = tpu.matmul %840, %842, %cst_322 {dimension_numbers = #tpu.dot_dimension_numbers<[1], [0], [0], [1], [0, 0, 1, 1], [], []>} : vector<2x32xf32>, vector<32x128xf32>, vector<2x128xf32> -> vector<2x128xf32>
    %844 = arith.addf %841, %843 : vector<2x128xf32>
    %845 = tpu.iota {dimensions = array<i32: 1>} : vector<2x128xi32>
    %c64_i32_323 = arith.constant 64 : i32
    %846 = vector.broadcast %c64_i32_323 : i32 to vector<2x128xi32>
    %847 = arith.cmpi sge, %845, %846 : vector<2x128xi32>
    %c96_i32_324 = arith.constant 96 : i32
    %848 = vector.broadcast %c96_i32_324 : i32 to vector<2x128xi32>
    %849 = arith.cmpi slt, %845, %848 : vector<2x128xi32>
    %850 = arith.andi %847, %849 : vector<2x128xi1>
    %851 = math.tanh %844 : vector<2x128xf32>
    %852 = arith.negf %844 : vector<2x128xf32>
    %853 = math.exp %852 : vector<2x128xf32>
    %cst_325 = arith.constant 1.000000e+00 : f32
    %854 = vector.broadcast %cst_325 : f32 to vector<2x128xf32>
    %855 = arith.addf %854, %853 : vector<2x128xf32>
    %856 = arith.divf %854, %855 : vector<2x128xf32>
    %857 = arith.select %850, %851, %856 : vector<2x128xi1>, vector<2x128xf32>
    %858 = vector.extract_strided_slice %857 {offsets = [0, 0], sizes = [2, 32], strides = [1, 1]} : vector<2x128xf32> to vector<2x32xf32>
    %859 = vector.extract_strided_slice %857 {offsets = [0, 32], sizes = [2, 32], strides = [1, 1]} : vector<2x128xf32> to vector<2x32xf32>
    %860 = vector.extract_strided_slice %857 {offsets = [0, 64], sizes = [2, 32], strides = [1, 1]} : vector<2x128xf32> to vector<2x32xf32>
    %861 = vector.extract_strided_slice %857 {offsets = [0, 96], sizes = [2, 32], strides = [1, 1]} : vector<2x128xf32> to vector<2x32xf32>
    %862 = arith.mulf %859, %838 : vector<2x32xf32>
    %863 = arith.mulf %858, %860 : vector<2x32xf32>
    %864 = arith.addf %862, %863 : vector<2x32xf32>
    %865 = math.tanh %864 : vector<2x32xf32>
    %866 = arith.mulf %861, %865 : vector<2x32xf32>
    %c14_326 = arith.constant 14 : index
    %c0_327 = arith.constant 0 : index
    %867 = vector.load %arg16[%c14_326, %c0_327] : memref<16x128xf32, #tpu.memory_space<vmem>>, vector<2x128xf32>
    %c0_328 = arith.constant 0 : index
    %c0_329 = arith.constant 0 : index
    %868 = vector.load %arg11[%c0_328, %c0_329] : memref<32x128xf32, #tpu.memory_space<vmem>>, vector<32x128xf32>
    %cst_330 = arith.constant dense<0.000000e+00> : vector<2x128xf32>
    %869 = tpu.matmul %866, %868, %cst_330 {dimension_numbers = #tpu.dot_dimension_numbers<[1], [0], [0], [1], [0, 0, 1, 1], [], []>} : vector<2x32xf32>, vector<32x128xf32>, vector<2x128xf32> -> vector<2x128xf32>
    %870 = arith.addf %867, %869 : vector<2x128xf32>
    %871 = tpu.iota {dimensions = array<i32: 1>} : vector<2x128xi32>
    %c64_i32_331 = arith.constant 64 : i32
    %872 = vector.broadcast %c64_i32_331 : i32 to vector<2x128xi32>
    %873 = arith.cmpi sge, %871, %872 : vector<2x128xi32>
    %c96_i32_332 = arith.constant 96 : i32
    %874 = vector.broadcast %c96_i32_332 : i32 to vector<2x128xi32>
    %875 = arith.cmpi slt, %871, %874 : vector<2x128xi32>
    %876 = arith.andi %873, %875 : vector<2x128xi1>
    %877 = math.tanh %870 : vector<2x128xf32>
    %878 = arith.negf %870 : vector<2x128xf32>
    %879 = math.exp %878 : vector<2x128xf32>
    %cst_333 = arith.constant 1.000000e+00 : f32
    %880 = vector.broadcast %cst_333 : f32 to vector<2x128xf32>
    %881 = arith.addf %880, %879 : vector<2x128xf32>
    %882 = arith.divf %880, %881 : vector<2x128xf32>
    %883 = arith.select %876, %877, %882 : vector<2x128xi1>, vector<2x128xf32>
    %884 = vector.extract_strided_slice %883 {offsets = [0, 0], sizes = [2, 32], strides = [1, 1]} : vector<2x128xf32> to vector<2x32xf32>
    %885 = vector.extract_strided_slice %883 {offsets = [0, 32], sizes = [2, 32], strides = [1, 1]} : vector<2x128xf32> to vector<2x32xf32>
    %886 = vector.extract_strided_slice %883 {offsets = [0, 64], sizes = [2, 32], strides = [1, 1]} : vector<2x128xf32> to vector<2x32xf32>
    %887 = vector.extract_strided_slice %883 {offsets = [0, 96], sizes = [2, 32], strides = [1, 1]} : vector<2x128xf32> to vector<2x32xf32>
    %888 = arith.mulf %885, %864 : vector<2x32xf32>
    %889 = arith.mulf %884, %886 : vector<2x32xf32>
    %890 = arith.addf %888, %889 : vector<2x32xf32>
    %891 = math.tanh %890 : vector<2x32xf32>
    %892 = arith.mulf %887, %891 : vector<2x32xf32>
    %c0_334 = arith.constant 0 : index
    %c0_335 = arith.constant 0 : index
    %893 = vector.load %arg13[%c0_334, %c0_335] : memref<1x32xf32, #tpu.memory_space<vmem>>, vector<1x32xf32>
    %894 = vector.broadcast %893 : vector<1x32xf32> to vector<2x32xf32>
    %895 = arith.mulf %892, %894 : vector<2x32xf32>
    %cst_336 = arith.constant dense<0.000000e+00> : vector<2xf32>
    %896 = vector.multi_reduction <add>, %895, %cst_336 [1] : vector<2x32xf32> to vector<2xf32>
    %897 = vector.shape_cast %896 : vector<2xf32> to vector<2x1xf32>
    %c0_337 = arith.constant 0 : index
    %c0_338 = arith.constant 0 : index
    %898 = vector.load %arg14[%c0_337, %c0_338] : memref<1x1xf32, #tpu.memory_space<vmem>>, vector<1x1xf32>
    %899 = vector.broadcast %898 : vector<1x1xf32> to vector<2x1xf32>
    %900 = arith.addf %897, %899 : vector<2x1xf32>
    %c0_339 = arith.constant 0 : index
    %c0_340 = arith.constant 0 : index
    %901 = vector.load %arg15[%c0_339, %c0_340] : memref<2x1xf32, #tpu.memory_space<vmem>>, vector<2x1xf32>
    tpu.vector_store %arg15[%c0_339, %c0_340], %900 {strides = array<i32>} : memref<2x1xf32, #tpu.memory_space<vmem>>, vector<2x1xf32>,
    return
  }
}

</mosaic_0001>

<llo_original>
// kernel: lsmt_model_forward.1
$region0: #{lsmt_model_forward.1}
  #allocation0 [shape = 'u32[]', space=smem, size = 0x4, offset = 0x4, fixed_abs, tag = 'smem constant byte address 0x4 - core index']
  #allocation1 [shape = 'u32[144,128]{1,0:T(1,128)}', space=vmem, size = 0x12000, scoped, tag = 'internal scratch']
  #allocation2 [shape = 'f32[16,128]{1,0:T(8,128)}', space=vmem, size = 0x2000, scoped, tag = 'scratch operand']
  #allocation3 [shape = 'f32[16,32]{1,0:T(8,128)}', space=vmem, size = 0x2000, scoped, tag = 'scratch operand']
  #allocation4 [shape = 'f32[1,1]{1,0:T(1,128)S(1)}', space=vmem, size = 0x200, scoped, tag = 'scoped memory for lsmt_model_forward.1']
  %s0 = inlined_call_operand.hbm [shape: f32[2,8,128], index: 0, kind: input, shape index: {}]
  %s1 = inlined_call_operand.hbm [shape: f32[128,128], index: 1, kind: input, shape index: {}]
  %s2 = inlined_call_operand.hbm [shape: f32[32,128], index: 2, kind: input, shape index: {}]
  %s3 = inlined_call_operand.vmem [shape: f32[1,128], index: 3, kind: input, shape index: {}]
  %s4 = inlined_call_operand.hbm [shape: f32[32,128], index: 4, kind: input, shape index: {}]
  %s5 = inlined_call_operand.hbm [shape: f32[32,128], index: 5, kind: input, shape index: {}]
  %s6 = inlined_call_operand.vmem [shape: f32[1,128], index: 6, kind: input, shape index: {}]
  %s7 = inlined_call_operand.vmem [shape: f32[32,128], index: 7, kind: input, shape index: {}]
  %s8 = inlined_call_operand.hbm [shape: f32[32,128], index: 8, kind: input, shape index: {}]
  %s9 = inlined_call_operand.vmem [shape: f32[1,128], index: 9, kind: input, shape index: {}]
  %s10 = inlined_call_operand.hbm [shape: f32[32,128], index: 10, kind: input, shape index: {}]
  %s11 = inlined_call_operand.hbm [shape: f32[32,128], index: 11, kind: input, shape index: {}]
  %s12 = inlined_call_operand.vmem [shape: f32[1,128], index: 12, kind: input, shape index: {}]
  %s13 = inlined_call_operand.vmem [shape: f32[1,32], index: 13, kind: input, shape index: {}]
  %s14 = inlined_call_operand.<no memory space> [shape: f32[1,1], index: 14, kind: input, shape index: {}]
  %s15 = inlined_call_operand.vmem [shape: f32[2,1], index: 15, kind: output, shape index: {}]
  %s16 = sld [smem:[#allocation0]]
  $region102: #{lsmt_model_forward.1} parent=0
    _
  %s18 = ssub.s32 1, %s16
  %s19 = scalar_select 0, %s18, %s16
  %v20 = vstv %s14
  %21 = vst [vmem:[#allocation4] sm:$0x1] %v20
  $region1: #{lsmt_model_forward.1} parent=0
    #allocation5 [shape = 'u8[8192]{0}', space=vmem, size = 0x2000, scoped, tag = 'input window, operand 0, single buffered']
    #allocation6 [shape = 's32[1]{0}', space=sflag, size = 0x4, scoped, tag = 'scoped memory for lsmt_model_forward.1']
    #allocation7 [shape = 'u8[65536]{0}', space=vmem, size = 0x10000, scoped, tag = 'input window, operand 1, single buffered']
    #allocation8 [shape = 's32[1]{0}', space=sflag, size = 0x4, scoped, tag = 'scoped memory for lsmt_model_forward.1']
    #allocation9 [shape = 'u8[16384]{0}', space=vmem, size = 0x4000, scoped, tag = 'input window, operand 2, single buffered']
    #allocation10 [shape = 'u8[16384]{0}', space=vmem, size = 0x4000, scoped, tag = 'input window, operand 4, single buffered']
    #allocation11 [shape = 's32[1]{0}', space=sflag, size = 0x4, scoped, tag = 'scoped memory for lsmt_model_forward.1']
    #allocation12 [shape = 'u8[16384]{0}', space=vmem, size = 0x4000, scoped, tag = 'input window, operand 5, single buffered']
    #allocation13 [shape = 'u8[16384]{0}', space=vmem, size = 0x4000, scoped, tag = 'input window, operand 8, single buffered']
    #allocation14 [shape = 's32[1]{0}', space=sflag, size = 0x4, scoped, tag = 'scoped memory for lsmt_model_forward.1']
    #allocation15 [shape = 'u8[16384]{0}', space=vmem, size = 0x4000, scoped, tag = 'input window, operand 10, single buffered']
    #allocation16 [shape = 'u8[16384]{0}', space=vmem, size = 0x4000, scoped, tag = 'input window, operand 11, single buffered']
    #allocation17 [shape = 's32[1]{0}', space=sflag, size = 0x4, scoped, tag = 'scoped memory for lsmt_model_forward.1']
    %22 = vsyncpa [#allocation6], 0
    %23 = vsyncpa [#allocation8], 0
    %24 = vsyncpa [#allocation11], 0
    %25 = vsyncpa [#allocation14], 0
    %26 = vsyncpa [#allocation17], 0
    // Predicated region
    $region2: #{lsmt_model_forward.1} parent=1 // pred_check
      _
    $region3: #{lsmt_model_forward.1} parent=1 // pred_check_branch
      %28 = sbr.rel (0) target = $region5
    $region4: #{lsmt_model_forward.1} parent=1 // pred_region
      %s30 = ssub.s32 256, 256
      %31 = vsyncadd [#allocation6], %s30
      %s32 = sshll.u32 [#allocation5], 4
      %s33 = int_to_ptr.vmem [resolvable:$true] %s32
      %38 = dma.hbm_to_vmem [thread:$0]  %s0, 256, %s33, [#allocation6], 128, 128, 8
    $region5: #{lsmt_model_forward.1} parent=1 // pred_fallthru
      _
    // Predicated region
    $region6: #{lsmt_model_forward.1} parent=1 // pred_check
      _
    $region7: #{lsmt_model_forward.1} parent=1 // pred_check_branch
      %40 = sbr.rel (0) target = $region9
    $region8: #{lsmt_model_forward.1} parent=1 // pred_region
      %s42 = ssub.s32 2048, 2048
      %43 = vsyncadd [#allocation8], %s42
      %s44 = sshll.u32 [#allocation7], 4
      %s45 = int_to_ptr.vmem [resolvable:$true] %s44
      %50 = dma.hbm_to_vmem [thread:$0]  %s1, 2048, %s45, [#allocation8], 128, 128, 8
    $region9: #{lsmt_model_forward.1} parent=1 // pred_fallthru
      _
    // Predicated region
    $region10: #{lsmt_model_forward.1} parent=1 // pred_check
      _
    $region11: #{lsmt_model_forward.1} parent=1 // pred_check_branch
      %52 = sbr.rel (0) target = $region13
    $region12: #{lsmt_model_forward.1} parent=1 // pred_region
      %s54 = ssub.s32 512, 512
      %55 = vsyncadd [#allocation8], %s54
      %s56 = sshll.u32 [#allocation9], 4
      %s57 = int_to_ptr.vmem [resolvable:$true] %s56
      %62 = dma.hbm_to_vmem [thread:$0]  %s2, 512, %s57, [#allocation8], 128, 128, 8
    $region13: #{lsmt_model_forward.1} parent=1 // pred_fallthru
      _
    // Predicated region
    $region14: #{lsmt_model_forward.1} parent=1 // pred_check
      _
    $region15: #{lsmt_model_forward.1} parent=1 // pred_check_branch
      %64 = sbr.rel (0) target = $region17
    $region16: #{lsmt_model_forward.1} parent=1 // pred_region
      _
    $region17: #{lsmt_model_forward.1} parent=1 // pred_fallthru
      _
    // Predicated region
    $region18: #{lsmt_model_forward.1} parent=1 // pred_check
      _
    $region19: #{lsmt_model_forward.1} parent=1 // pred_check_branch
      %66 = sbr.rel (0) target = $region21
    $region20: #{lsmt_model_forward.1} parent=1 // pred_region
      %s68 = ssub.s32 512, 512
      %69 = vsyncadd [#allocation11], %s68
      %s70 = sshll.u32 [#allocation10], 4
      %s71 = int_to_ptr.vmem [resolvable:$true] %s70
      %76 = dma.hbm_to_vmem [thread:$0]  %s4, 512, %s71, [#allocation11], 128, 128, 8
    $region21: #{lsmt_model_forward.1} parent=1 // pred_fallthru
      _
    // Predicated region
    $region22: #{lsmt_model_forward.1} parent=1 // pred_check
      _
    $region23: #{lsmt_model_forward.1} parent=1 // pred_check_branch
      %78 = sbr.rel (0) target = $region25
    $region24: #{lsmt_model_forward.1} parent=1 // pred_region
      %s80 = ssub.s32 512, 512
      %81 = vsyncadd [#allocation11], %s80
      %s82 = sshll.u32 [#allocation12], 4
      %s83 = int_to_ptr.vmem [resolvable:$true] %s82
      %88 = dma.hbm_to_vmem [thread:$0]  %s5, 512, %s83, [#allocation11], 128, 128, 8
    $region25: #{lsmt_model_forward.1} parent=1 // pred_fallthru
      _
    // Predicated region
    $region26: #{lsmt_model_forward.1} parent=1 // pred_check
      _
    $region27: #{lsmt_model_forward.1} parent=1 // pred_check_branch
      %90 = sbr.rel (0) target = $region29
    $region28: #{lsmt_model_forward.1} parent=1 // pred_region
      _
    $region29: #{lsmt_model_forward.1} parent=1 // pred_fallthru
      _
    // Predicated region
    $region30: #{lsmt_model_forward.1} parent=1 // pred_check
      _
    $region31: #{lsmt_model_forward.1} parent=1 // pred_check_branch
      %92 = sbr.rel (0) target = $region33
    $region32: #{lsmt_model_forward.1} parent=1 // pred_region
      _
    $region33: #{lsmt_model_forward.1} parent=1 // pred_fallthru
      _
    // Predicated region
    $region34: #{lsmt_model_forward.1} parent=1 // pred_check
      _
    $region35: #{lsmt_model_forward.1} parent=1 // pred_check_branch
      %94 = sbr.rel (0) target = $region37
    $region36: #{lsmt_model_forward.1} parent=1 // pred_region
      %s96 = ssub.s32 512, 512
      %97 = vsyncadd [#allocation14], %s96
      %s98 = sshll.u32 [#allocation13], 4
      %s99 = int_to_ptr.vmem [resolvable:$true] %s98
      %104 = dma.hbm_to_vmem [thread:$0]  %s8, 512, %s99, [#allocation14], 128, 128, 8
    $region37: #{lsmt_model_forward.1} parent=1 // pred_fallthru
      _
    // Predicated region
    $region38: #{lsmt_model_forward.1} parent=1 // pred_check
      _
    $region39: #{lsmt_model_forward.1} parent=1 // pred_check_branch
      %106 = sbr.rel (0) target = $region41
    $region40: #{lsmt_model_forward.1} parent=1 // pred_region
      _
    $region41: #{lsmt_model_forward.1} parent=1 // pred_fallthru
      _
    // Predicated region
    $region42: #{lsmt_model_forward.1} parent=1 // pred_check
      _
    $region43: #{lsmt_model_forward.1} parent=1 // pred_check_branch
      %108 = sbr.rel (0) target = $region45
    $region44: #{lsmt_model_forward.1} parent=1 // pred_region
      %s110 = ssub.s32 512, 512
      %111 = vsyncadd [#allocation14], %s110
      %s112 = sshll.u32 [#allocation15], 4
      %s113 = int_to_ptr.vmem [resolvable:$true] %s112
      %118 = dma.hbm_to_vmem [thread:$0]  %s10, 512, %s113, [#allocation14], 128, 128, 8
    $region45: #{lsmt_model_forward.1} parent=1 // pred_fallthru
      _
    // Predicated region
    $region46: #{lsmt_model_forward.1} parent=1 // pred_check
      _
    $region47: #{lsmt_model_forward.1} parent=1 // pred_check_branch
      %120 = sbr.rel (0) target = $region49
    $region48: #{lsmt_model_forward.1} parent=1 // pred_region
      %s122 = ssub.s32 512, 512
      %123 = vsyncadd [#allocation17], %s122
      %s124 = sshll.u32 [#allocation16], 4
      %s125 = int_to_ptr.vmem [resolvable:$true] %s124
      %130 = dma.hbm_to_vmem [thread:$0]  %s11, 512, %s125, [#allocation17], 128, 128, 8
    $region49: #{lsmt_model_forward.1} parent=1 // pred_fallthru
      _
    // Predicated region
    $region50: #{lsmt_model_forward.1} parent=1 // pred_check
      _
    $region51: #{lsmt_model_forward.1} parent=1 // pred_check_branch
      %132 = sbr.rel (0) target = $region53
    $region52: #{lsmt_model_forward.1} parent=1 // pred_region
      _
    $region53: #{lsmt_model_forward.1} parent=1 // pred_fallthru
      _
    // Predicated region
    $region54: #{lsmt_model_forward.1} parent=1 // pred_check
      _
    $region55: #{lsmt_model_forward.1} parent=1 // pred_check_branch
      %134 = sbr.rel (0) target = $region57
    $region56: #{lsmt_model_forward.1} parent=1 // pred_region
      _
    $region57: #{lsmt_model_forward.1} parent=1 // pred_fallthru
      _
    // Predicated region
    $region58: #{lsmt_model_forward.1} parent=1 // pred_check
      _
    $region59: #{lsmt_model_forward.1} parent=1 // pred_check_branch
      %136 = sbr.rel (0) target = $region61
    $region60: #{lsmt_model_forward.1} parent=1 // pred_region
      _
    $region61: #{lsmt_model_forward.1} parent=1 // pred_fallthru
      _
    // Predicated region
    $region62: #{lsmt_model_forward.1} parent=1 // pred_check
      _
    $region63: #{lsmt_model_forward.1} parent=1 // pred_check_branch
      %138 = sbr.rel (0) target = $region65
    $region64: #{lsmt_model_forward.1} parent=1 // pred_region
      %139 = dma.done [#allocation6], 256
    $region65: #{lsmt_model_forward.1} parent=1 // pred_fallthru
      _
    // Predicated region
    $region66: #{lsmt_model_forward.1} parent=1 // pred_check
      _
    $region67: #{lsmt_model_forward.1} parent=1 // pred_check_branch
      %141 = sbr.rel (0) target = $region69
    $region68: #{lsmt_model_forward.1} parent=1 // pred_region
      %142 = dma.done [#allocation8], 2048
    $region69: #{lsmt_model_forward.1} parent=1 // pred_fallthru
      _
    // Predicated region
    $region70: #{lsmt_model_forward.1} parent=1 // pred_check
      _
    $region71: #{lsmt_model_forward.1} parent=1 // pred_check_branch
      %144 = sbr.rel (0) target = $region73
    $region72: #{lsmt_model_forward.1} parent=1 // pred_region
      %145 = dma.done [#allocation8], 512
    $region73: #{lsmt_model_forward.1} parent=1 // pred_fallthru
      _
    // Predicated region
    $region74: #{lsmt_model_forward.1} parent=1 // pred_check
      _
    $region75: #{lsmt_model_forward.1} parent=1 // pred_check_branch
      %147 = sbr.rel (0) target = $region77
    $region76: #{lsmt_model_forward.1} parent=1 // pred_region
      %148 = dma.done [#allocation11], 512
    $region77: #{lsmt_model_forward.1} parent=1 // pred_fallthru
      _
    // Predicated region
    $region78: #{lsmt_model_forward.1} parent=1 // pred_check
      _
    $region79: #{lsmt_model_forward.1} parent=1 // pred_check_branch
      %150 = sbr.rel (0) target = $region81
    $region80: #{lsmt_model_forward.1} parent=1 // pred_region
      %151 = dma.done [#allocation11], 512
    $region81: #{lsmt_model_forward.1} parent=1 // pred_fallthru
      _
    // Predicated region
    $region82: #{lsmt_model_forward.1} parent=1 // pred_check
      _
    $region83: #{lsmt_model_forward.1} parent=1 // pred_check_branch
      %153 = sbr.rel (0) target = $region85
    $region84: #{lsmt_model_forward.1} parent=1 // pred_region
      %154 = dma.done [#allocation14], 512
    $region85: #{lsmt_model_forward.1} parent=1 // pred_fallthru
      _
    // Predicated region
    $region86: #{lsmt_model_forward.1} parent=1 // pred_check
      _
    $region87: #{lsmt_model_forward.1} parent=1 // pred_check_branch
      %156 = sbr.rel (0) target = $region89
    $region88: #{lsmt_model_forward.1} parent=1 // pred_region
      %157 = dma.done [#allocation14], 512
    $region89: #{lsmt_model_forward.1} parent=1 // pred_fallthru
      _
    // Predicated region
    $region90: #{lsmt_model_forward.1} parent=1 // pred_check
      _
    $region91: #{lsmt_model_forward.1} parent=1 // pred_check_branch
      %159 = sbr.rel (0) target = $region93
    $region92: #{lsmt_model_forward.1} parent=1 // pred_region
      %160 = dma.done [#allocation17], 512
    $region93: #{lsmt_model_forward.1} parent=1 // pred_fallthru
      _
    %v161 = vld [vmem:[#allocation5] sm:$0xff]
    %v162 = vld [vmem:[#allocation5 + $0x8] sm:$0xff]
    %v163 = vld [vmem:[#allocation7] sm:$0xff]
    %v164 = vld [vmem:[#allocation7 + $0x8] sm:$0xff]
    %v165 = vld [vmem:[#allocation7 + $0x10] sm:$0xff]
    %v166 = vld [vmem:[#allocation7 + $0x18] sm:$0xff]
    %v167 = vld [vmem:[#allocation7 + $0x20] sm:$0xff]
    %v168 = vld [vmem:[#allocation7 + $0x28] sm:$0xff]
    %v169 = vld [vmem:[#allocation7 + $0x30] sm:$0xff]
    %v170 = vld [vmem:[#allocation7 + $0x38] sm:$0xff]
    %v171 = vld [vmem:[#allocation7 + $0x40] sm:$0xff]
    %v172 = vld [vmem:[#allocation7 + $0x48] sm:$0xff]
    %v173 = vld [vmem:[#allocation7 + $0x50] sm:$0xff]
    %v174 = vld [vmem:[#allocation7 + $0x58] sm:$0xff]
    %v175 = vld [vmem:[#allocation7 + $0x60] sm:$0xff]
    %v176 = vld [vmem:[#allocation7 + $0x68] sm:$0xff]
    %v177 = vld [vmem:[#allocation7 + $0x70] sm:$0xff]
    %v178 = vld [vmem:[#allocation7 + $0x78] sm:$0xff]
    %v179 = vld [vmem:[%s3] sm:$0x1]
    %v181 = vlaneseq
    %v182 = vshrl.u32 %v181, 7
    %v183 = vsub.s32 0, %v182
    %v184 = vrot.slane %v179, %v183
    %186 = vmatprep.subr.mxu0 0.0
    %187 = vmatpush1.msra.mxu0 %v163
    %188 = vmatprep.subr.mxu0 0.0
    %189 = vmatpush1.msra.mxu0 %v164
    %190 = vmatprep.subr.mxu0 0.0
    %191 = vmatpush1.msra.mxu0 %v165
    %192 = vmatprep.subr.mxu0 0.0
    %193 = vmatpush1.msra.mxu0 %v166
    %194 = vmatprep.subr.mxu0 0.0
    %195 = vmatpush1.msra.mxu0 %v167
    %196 = vmatprep.subr.mxu0 0.0
    %197 = vmatpush1.msra.mxu0 %v168
    %198 = vmatprep.subr.mxu0 0.0
    %199 = vmatpush1.msra.mxu0 %v169
    %200 = vmatprep.subr.mxu0 0.0
    %201 = vmatpush1.msra.mxu0 %v170
    %202 = vmatprep.subr.mxu0 0.0
    %203 = vmatpush1.msra.mxu0 %v171
    %204 = vmatprep.subr.mxu0 0.0
    %205 = vmatpush1.msra.mxu0 %v172
    %206 = vmatprep.subr.mxu0 0.0
    %207 = vmatpush1.msra.mxu0 %v173
    %208 = vmatprep.subr.mxu0 0.0
    %209 = vmatpush1.msra.mxu0 %v174
    %210 = vmatprep.subr.mxu0 0.0
    %211 = vmatpush1.msra.mxu0 %v175
    %212 = vmatprep.subr.mxu0 0.0
    %213 = vmatpush1.msra.mxu0 %v176
    %214 = vmatprep.subr.mxu0 0.0
    %215 = vmatpush1.msra.mxu0 %v177
    %216 = vmatprep.subr.mxu0 0.0
    %217 = vmatpush1.msra.mxu0 %v178
    %218 = vmatprep.subr.mxu0 0.0
    %219 = vmatpush1.msra.mxu0 0.0
    %220 = vmatprep.subr.mxu0 0.0
    %221 = vmatpush1.msra.mxu0 0.0
    %222 = vmatprep.subr.mxu0 0.0
    %223 = vmatpush1.msra.mxu0 0.0
    %224 = vmatprep.subr.mxu0 0.0
    %225 = vmatpush1.msra.mxu0 0.0
    %226 = vmatprep.subr.mxu0 0.0
    %227 = vmatpush1.msra.mxu0 0.0
    %228 = vmatprep.subr.mxu0 0.0
    %229 = vmatpush1.msra.mxu0 0.0
    %230 = vmatprep.subr.mxu0 0.0
    %231 = vmatpush1.msra.mxu0 0.0
    %232 = vmatprep.subr.mxu0 0.0
    %233 = vmatpush1.msra.mxu0 0.0
    %234 = vmatprep.subr.mxu0 0.0
    %235 = vmatpush1.msra.mxu0 0.0
    %236 = vmatprep.subr.mxu0 0.0
    %237 = vmatpush1.msra.mxu0 0.0
    %238 = vmatprep.subr.mxu0 0.0
    %239 = vmatpush1.msra.mxu0 0.0
    %240 = vmatprep.subr.mxu0 0.0
    %241 = vmatpush1.msra.mxu0 0.0
    %242 = vmatprep.subr.mxu0 0.0
    %243 = vmatpush1.msra.mxu0 0.0
    %244 = vmatprep.subr.mxu0 0.0
    %245 = vmatpush1.msra.mxu0 0.0
    %246 = vmatprep.subr.mxu0 0.0
    %247 = vmatpush1.msra.mxu0 0.0
    %248 = vmatprep.subr.mxu0 0.0
    %249 = vmatpush1.msra.mxu0 0.0
    %250 = vmatprep.mubr.f32.mxu0 0.0
    %251 = vmatmul.mubr.f32.gmra.mrb[0].mxu0 %v161
    %v252 = vpop.f32.mrb[0].mxu0
    %v253 = vadd.f32 %v184, %v252
    %v254 = vpop.f32.mrb[0].mxu0
    %255 = vmatprep.mubr.f32.mxu0 0.0
    %256 = vmatmul.mubr.f32.gmra.mrb[0].mxu0 %v162
    %v257 = vpop.f32.mrb[0].mxu0
    %v258 = vadd.f32 %v184, %v257
    %v259 = vpop.f32.mrb[0].mxu0
    %260 = vdwg.mxu0
    %261 = vst [vmem:[#allocation2] sm:$0xff] %v253
    %262 = vst [vmem:[#allocation2 + $0x8] sm:$0xff] %v258
    %v263 = vld [vmem:[#allocation2] ss:$8 sm:$0x3]
    %v264 = vld [vmem:[#allocation9] sm:$0xff]
    %v265 = vld [vmem:[#allocation9 + $0x8] sm:$0xff]
    %v266 = vld [vmem:[#allocation9 + $0x10] sm:$0xff]
    %v267 = vld [vmem:[#allocation9 + $0x18] sm:$0xff]
    %vm268 = vcmask 261120
    %v270 = vsel %vm268, 0.0, 0
    %272 = vmatprep.subr.mxu0 0.0
    %273 = vmatpush1.msra.mxu0 %v264
    %274 = vmatprep.subr.mxu0 0.0
    %275 = vmatpush1.msra.mxu0 %v265
    %276 = vmatprep.subr.mxu0 0.0
    %277 = vmatpush1.msra.mxu0 %v266
    %278 = vmatprep.subr.mxu0 0.0
    %279 = vmatpush1.msra.mxu0 %v267
    %280 = vmatprep.subr.mxu0 0.0
    %281 = vmatpush1.msra.mxu0 0.0
    %282 = vmatprep.subr.mxu0 0.0
    %283 = vmatpush1.msra.mxu0 0.0
    %284 = vmatprep.subr.mxu0 0.0
    %285 = vmatpush1.msra.mxu0 0.0
    %286 = vmatprep.subr.mxu0 0.0
    %287 = vmatpush1.msra.mxu0 0.0
    %288 = vmatprep.subr.mxu0 0.0
    %289 = vmatpush1.msra.mxu0 0.0
    %290 = vmatprep.subr.mxu0 0.0
    %291 = vmatpush1.msra.mxu0 0.0
    %292 = vmatprep.subr.mxu0 0.0
    %293 = vmatpush1.msra.mxu0 0.0
    %294 = vmatprep.subr.mxu0 0.0
    %295 = vmatpush1.msra.mxu0 0.0
    %296 = vmatprep.subr.mxu0 0.0
    %297 = vmatpush1.msra.mxu0 0.0
    %298 = vmatprep.subr.mxu0 0.0
    %299 = vmatpush1.msra.mxu0 0.0
    %300 = vmatprep.subr.mxu0 0.0
    %301 = vmatpush1.msra.mxu0 0.0
    %302 = vmatprep.subr.mxu0 0.0
    %303 = vmatpush1.msra.mxu0 0.0
    %304 = vmatprep.subr.mxu0 0.0
    %305 = vmatpush1.msra.mxu0 0.0
    %306 = vmatprep.subr.mxu0 0.0
    %307 = vmatpush1.msra.mxu0 0.0
    %308 = vmatprep.subr.mxu0 0.0
    %309 = vmatpush1.msra.mxu0 0.0
    %310 = vmatprep.subr.mxu0 0.0
    %311 = vmatpush1.msra.mxu0 0.0
    %312 = vmatprep.subr.mxu0 0.0
    %313 = vmatpush1.msra.mxu0 0.0
    %314 = vmatprep.subr.mxu0 0.0
    %315 = vmatpush1.msra.mxu0 0.0
    %316 = vmatprep.subr.mxu0 0.0
    %317 = vmatpush1.msra.mxu0 0.0
    %318 = vmatprep.subr.mxu0 0.0
    %319 = vmatpush1.msra.mxu0 0.0
    %320 = vmatprep.subr.mxu0 0.0
    %321 = vmatpush1.msra.mxu0 0.0
    %322 = vmatprep.subr.mxu0 0.0
    %323 = vmatpush1.msra.mxu0 0.0
    %324 = vmatprep.subr.mxu0 0.0
    %325 = vmatpush1.msra.mxu0 0.0
    %326 = vmatprep.subr.mxu0 0.0
    %327 = vmatpush1.msra.mxu0 0.0
    %328 = vmatprep.subr.mxu0 0.0
    %329 = vmatpush1.msra.mxu0 0.0
    %330 = vmatprep.subr.mxu0 0.0
    %331 = vmatpush1.msra.mxu0 0.0
    %332 = vmatprep.subr.mxu0 0.0
    %333 = vmatpush1.msra.mxu0 0.0
    %334 = vmatprep.subr.mxu0 0.0
    %335 = vmatpush1.msra.mxu0 0.0
    %336 = vmatprep.mubr.f32.mxu0 0.0
    %337 = vmatmul.mubr.f32.gmra.mrb[0].mxu0 %v270
    %v338 = vpop.f32.mrb[0].mxu0
    %v339 = vadd.f32 0.0, %v338
    %v340 = vpop.f32.mrb[0].mxu0
    %341 = vdwg.mxu0
    %v342 = vadd.f32 %v263, %v339
    %v343 = vlaneseq
    %v344 = vand.u32 %v343, 127
    %vm345 = vcmp.ge.s32.totalorder %v344, 64
    %vm346 = vcmp.lt.s32.totalorder %v344, 96
    %vm347 = vmand %vm345, %vm346
    %v348 = vtanh.pop %v342
    %v349 = vxor.u32 %v342, 2147483648
    %v350 = vmul.f32 %v349, 1.442695
    %v351 = vpow.pop %v350
    %v352 = vadd.f32 %v351, 1.0
    %v353 = vrcp.pop %v352
    %v354 = vmul.f32 1.0, %v353
    %v355 = vsel %vm347, %v348, %v354
    %v356 = vmul.f32 %v355, 0.0
    %358 = vrot.lane.b32.xlu0 %v355, 64
    %v359 = vpop.permute.xlu0 %358
    %v361 = vmul.f32 %v355, %v359
    %363 = vrot.lane.b32.xlu0 %v361, 32
    %v364 = vpop.permute.xlu0 %363
    %v366 = vadd.f32 %v356, %v364
    %v367 = vtanh.pop %v366
    %369 = vrot.lane.b32.xlu0 %v367, 64
    %v370 = vpop.permute.xlu0 %369
    %v372 = vmul.f32 %v355, %v370
    %374 = vrot.lane.b32.xlu0 %v372, 32
    %v375 = vpop.permute.xlu0 %374
    %vm377 = vcmask 254976
    %378 = vst.msk [vmem:[#allocation3] sm:$0x3] %vm377, %v375
    %s379 = scalar_lea.vmem [#allocation2], 1
    %v380 = vld [vmem:[%s379] ss:$8 sm:$0x3]
    %v381 = vld [vmem:[#allocation9] sm:$0xff]
    %v382 = vld [vmem:[#allocation9 + $0x8] sm:$0xff]
    %v383 = vld [vmem:[#allocation9 + $0x10] sm:$0xff]
    %v384 = vld [vmem:[#allocation9 + $0x18] sm:$0xff]
    %v385 = vsel %vm268, %v375, 0
    %387 = vmatprep.subr.mxu0 0.0
    %388 = vmatpush1.msra.mxu0 %v381
    %389 = vmatprep.subr.mxu0 0.0
    %390 = vmatpush1.msra.mxu0 %v382
    %391 = vmatprep.subr.mxu0 0.0
    %392 = vmatpush1.msra.mxu0 %v383
    %393 = vmatprep.subr.mxu0 0.0
    %394 = vmatpush1.msra.mxu0 %v384
    %395 = vmatprep.subr.mxu0 0.0
    %396 = vmatpush1.msra.mxu0 0.0
    %397 = vmatprep.subr.mxu0 0.0
    %398 = vmatpush1.msra.mxu0 0.0
    %399 = vmatprep.subr.mxu0 0.0
    %400 = vmatpush1.msra.mxu0 0.0
    %401 = vmatprep.subr.mxu0 0.0
    %402 = vmatpush1.msra.mxu0 0.0
    %403 = vmatprep.subr.mxu0 0.0
    %404 = vmatpush1.msra.mxu0 0.0
    %405 = vmatprep.subr.mxu0 0.0
    %406 = vmatpush1.msra.mxu0 0.0
    %407 = vmatprep.subr.mxu0 0.0
    %408 = vmatpush1.msra.mxu0 0.0
    %409 = vmatprep.subr.mxu0 0.0
    %410 = vmatpush1.msra.mxu0 0.0
    %411 = vmatprep.subr.mxu0 0.0
    %412 = vmatpush1.msra.mxu0 0.0
    %413 = vmatprep.subr.mxu0 0.0
    %414 = vmatpush1.msra.mxu0 0.0
    %415 = vmatprep.subr.mxu0 0.0
    %416 = vmatpush1.msra.mxu0 0.0
    %417 = vmatprep.subr.mxu0 0.0
    %418 = vmatpush1.msra.mxu0 0.0
    %419 = vmatprep.subr.mxu0 0.0
    %420 = vmatpush1.msra.mxu0 0.0
    %421 = vmatprep.subr.mxu0 0.0
    %422 = vmatpush1.msra.mxu0 0.0
    %423 = vmatprep.subr.mxu0 0.0
    %424 = vmatpush1.msra.mxu0 0.0
    %425 = vmatprep.subr.mxu0 0.0
    %426 = vmatpush1.msra.mxu0 0.0
    %427 = vmatprep.subr.mxu0 0.0
    %428 = vmatpush1.msra.mxu0 0.0
    %429 = vmatprep.subr.mxu0 0.0
    %430 = vmatpush1.msra.mxu0 0.0
    %431 = vmatprep.subr.mxu0 0.0
    %432 = vmatpush1.msra.mxu0 0.0
    %433 = vmatprep.subr.mxu0 0.0
    %434 = vmatpush1.msra.mxu0 0.0
    %435 = vmatprep.subr.mxu0 0.0
    %436 = vmatpush1.msra.mxu0 0.0
    %437 = vmatprep.subr.mxu0 0.0
    %438 = vmatpush1.msra.mxu0 0.0
    %439 = vmatprep.subr.mxu0 0.0
    %440 = vmatpush1.msra.mxu0 0.0
    %441 = vmatprep.subr.mxu0 0.0
    %442 = vmatpush1.msra.mxu0 0.0
    %443 = vmatprep.subr.mxu0 0.0
    %444 = vmatpush1.msra.mxu0 0.0
    %445 = vmatprep.subr.mxu0 0.0
    %446 = vmatpush1.msra.mxu0 0.0
    %447 = vmatprep.subr.mxu0 0.0
    %448 = vmatpush1.msra.mxu0 0.0
    %449 = vmatprep.subr.mxu0 0.0
    %450 = vmatpush1.msra.mxu0 0.0
    %451 = vmatprep.mubr.f32.mxu0 0.0
    %452 = vmatmul.mubr.f32.gmra.mrb[0].mxu0 %v385
    %v453 = vpop.f32.mrb[0].mxu0
    %v454 = vadd.f32 0.0, %v453
    %v455 = vpop.f32.mrb[0].mxu0
    %456 = vdwg.mxu0
    %v457 = vadd.f32 %v380, %v454
    %v458 = vtanh.pop %v457
    %v459 = vxor.u32 %v457, 2147483648
    %v460 = vmul.f32 %v459, 1.442695
    %v461 = vpow.pop %v460
    %v462 = vadd.f32 %v461, 1.0
    %v463 = vrcp.pop %v462
    %v464 = vmul.f32 1.0, %v463
    %v465 = vsel %vm347, %v458, %v464
    %v466 = vmul.f32 %v465, %v366
    %468 = vrot.lane.b32.xlu0 %v465, 64
    %v469 = vpop.permute.xlu0 %468
    %v471 = vmul.f32 %v465, %v469
    %473 = vrot.lane.b32.xlu0 %v471, 32
    %v474 = vpop.permute.xlu0 %473
    %v476 = vadd.f32 %v466, %v474
    %v477 = vtanh.pop %v476
    %479 = vrot.lane.b32.xlu0 %v477, 64
    %v480 = vpop.permute.xlu0 %479
    %v482 = vmul.f32 %v465, %v480
    %484 = vrot.lane.b32.xlu0 %v482, 32
    %v485 = vpop.permute.xlu0 %484
    %487 = vst.msk [vmem:[#allocation3 + $0x2] sm:$0x3] %vm377, %v485
    %s488 = scalar_lea.vmem [#allocation2], 2
    %v489 = vld [vmem:[%s488] ss:$8 sm:$0x3]
    %v490 = vld [vmem:[#allocation9] sm:$0xff]
    %v491 = vld [vmem:[#allocation9 + $0x8] sm:$0xff]
    %v492 = vld [vmem:[#allocation9 + $0x10] sm:$0xff]
    %v493 = vld [vmem:[#allocation9 + $0x18] sm:$0xff]
    %v494 = vsel %vm268, %v485, 0
    %496 = vmatprep.subr.mxu0 0.0
    %497 = vmatpush1.msra.mxu0 %v490
    %498 = vmatprep.subr.mxu0 0.0
    %499 = vmatpush1.msra.mxu0 %v491
    %500 = vmatprep.subr.mxu0 0.0
    %501 = vmatpush1.msra.mxu0 %v492
    %502 = vmatprep.subr.mxu0 0.0
    %503 = vmatpush1.msra.mxu0 %v493
    %504 = vmatprep.subr.mxu0 0.0
    %505 = vmatpush1.msra.mxu0 0.0
    %506 = vmatprep.subr.mxu0 0.0
    %507 = vmatpush1.msra.mxu0 0.0
    %508 = vmatprep.subr.mxu0 0.0
    %509 = vmatpush1.msra.mxu0 0.0
    %510 = vmatprep.subr.mxu0 0.0
    %511 = vmatpush1.msra.mxu0 0.0
    %512 = vmatprep.subr.mxu0 0.0
    %513 = vmatpush1.msra.mxu0 0.0
    %514 = vmatprep.subr.mxu0 0.0
    %515 = vmatpush1.msra.mxu0 0.0
    %516 = vmatprep.subr.mxu0 0.0
    %517 = vmatpush1.msra.mxu0 0.0
    %518 = vmatprep.subr.mxu0 0.0
    %519 = vmatpush1.msra.mxu0 0.0
    %520 = vmatprep.subr.mxu0 0.0
    %521 = vmatpush1.msra.mxu0 0.0
    %522 = vmatprep.subr.mxu0 0.0
    %523 = vmatpush1.msra.mxu0 0.0
    %524 = vmatprep.subr.mxu0 0.0
    %525 = vmatpush1.msra.mxu0 0.0
    %526 = vmatprep.subr.mxu0 0.0
    %527 = vmatpush1.msra.mxu0 0.0
    %528 = vmatprep.subr.mxu0 0.0
    %529 = vmatpush1.msra.mxu0 0.0
    %530 = vmatprep.subr.mxu0 0.0
    %531 = vmatpush1.msra.mxu0 0.0
    %532 = vmatprep.subr.mxu0 0.0
    %533 = vmatpush1.msra.mxu0 0.0
    %534 = vmatprep.subr.mxu0 0.0
    %535 = vmatpush1.msra.mxu0 0.0
    %536 = vmatprep.subr.mxu0 0.0
    %537 = vmatpush1.msra.mxu0 0.0
    %538 = vmatprep.subr.mxu0 0.0
    %539 = vmatpush1.msra.mxu0 0.0
    %540 = vmatprep.subr.mxu0 0.0
    %541 = vmatpush1.msra.mxu0 0.0
    %542 = vmatprep.subr.mxu0 0.0
    %543 = vmatpush1.msra.mxu0 0.0
    %544 = vmatprep.subr.mxu0 0.0
    %545 = vmatpush1.msra.mxu0 0.0
    %546 = vmatprep.subr.mxu0 0.0
    %547 = vmatpush1.msra.mxu0 0.0
    %548 = vmatprep.subr.mxu0 0.0
    %549 = vmatpush1.msra.mxu0 0.0
    %550 = vmatprep.subr.mxu0 0.0
    %551 = vmatpush1.msra.mxu0 0.0
    %552 = vmatprep.subr.mxu0 0.0
    %553 = vmatpush1.msra.mxu0 0.0
    %554 = vmatprep.subr.mxu0 0.0
    %555 = vmatpush1.msra.mxu0 0.0
    %556 = vmatprep.subr.mxu0 0.0
    %557 = vmatpush1.msra.mxu0 0.0
    %558 = vmatprep.subr.mxu0 0.0
    %559 = vmatpush1.msra.mxu0 0.0
    %560 = vmatprep.mubr.f32.mxu0 0.0
    %561 = vmatmul.mubr.f32.gmra.mrb[0].mxu0 %v494
    %v562 = vpop.f32.mrb[0].mxu0
    %v563 = vadd.f32 0.0, %v562
    %v564 = vpop.f32.mrb[0].mxu0
    %565 = vdwg.mxu0
    %v566 = vadd.f32 %v489, %v563
    %v567 = vtanh.pop %v566
    %v568 = vxor.u32 %v566, 2147483648
    %v569 = vmul.f32 %v568, 1.442695
    %v570 = vpow.pop %v569
    %v571 = vadd.f32 %v570, 1.0
    %v572 = vrcp.pop %v571
    %v573 = vmul.f32 1.0, %v572
    %v574 = vsel %vm347, %v567, %v573
    %v575 = vmul.f32 %v574, %v476
    %577 = vrot.lane.b32.xlu0 %v574, 64
    %v578 = vpop.permute.xlu0 %577
    %v580 = vmul.f32 %v574, %v578
    %582 = vrot.lane.b32.xlu0 %v580, 32
    %v583 = vpop.permute.xlu0 %582
    %v585 = vadd.f32 %v575, %v583
    %v586 = vtanh.pop %v585
    %588 = vrot.lane.b32.xlu0 %v586, 64
    %v589 = vpop.permute.xlu0 %588
    %v591 = vmul.f32 %v574, %v589
    %593 = vrot.lane.b32.xlu0 %v591, 32
    %v594 = vpop.permute.xlu0 %593
    %596 = vst.msk [vmem:[#allocation3 + $0x4] sm:$0x3] %vm377, %v594
    %s597 = scalar_lea.vmem [#allocation2], 3
    %v598 = vld [vmem:[%s597] ss:$8 sm:$0x3]
    %v599 = vld [vmem:[#allocation9] sm:$0xff]
    %v600 = vld [vmem:[#allocation9 + $0x8] sm:$0xff]
    %v601 = vld [vmem:[#allocation9 + $0x10] sm:$0xff]
    %v602 = vld [vmem:[#allocation9 + $0x18] sm:$0xff]
    %v603 = vsel %vm268, %v594, 0
    %605 = vmatprep.subr.mxu0 0.0
    %606 = vmatpush1.msra.mxu0 %v599
    %607 = vmatprep.subr.mxu0 0.0
    %608 = vmatpush1.msra.mxu0 %v600
    %609 = vmatprep.subr.mxu0 0.0
    %610 = vmatpush1.msra.mxu0 %v601
    %611 = vmatprep.subr.mxu0 0.0
    %612 = vmatpush1.msra.mxu0 %v602
    %613 = vmatprep.subr.mxu0 0.0
    %614 = vmatpush1.msra.mxu0 0.0
    %615 = vmatprep.subr.mxu0 0.0
    %616 = vmatpush1.msra.mxu0 0.0
    %617 = vmatprep.subr.mxu0 0.0
    %618 = vmatpush1.msra.mxu0 0.0
    %619 = vmatprep.subr.mxu0 0.0
    %620 = vmatpush1.msra.mxu0 0.0
    %621 = vmatprep.subr.mxu0 0.0
    %622 = vmatpush1.msra.mxu0 0.0
    %623 = vmatprep.subr.mxu0 0.0
    %624 = vmatpush1.msra.mxu0 0.0
    %625 = vmatprep.subr.mxu0 0.0
    %626 = vmatpush1.msra.mxu0 0.0
    %627 = vmatprep.subr.mxu0 0.0
    %628 = vmatpush1.msra.mxu0 0.0
    %629 = vmatprep.subr.mxu0 0.0
    %630 = vmatpush1.msra.mxu0 0.0
    %631 = vmatprep.subr.mxu0 0.0
    %632 = vmatpush1.msra.mxu0 0.0
    %633 = vmatprep.subr.mxu0 0.0
    %634 = vmatpush1.msra.mxu0 0.0
    %635 = vmatprep.subr.mxu0 0.0
    %636 = vmatpush1.msra.mxu0 0.0
    %637 = vmatprep.subr.mxu0 0.0
    %638 = vmatpush1.msra.mxu0 0.0
    %639 = vmatprep.subr.mxu0 0.0
    %640 = vmatpush1.msra.mxu0 0.0
    %641 = vmatprep.subr.mxu0 0.0
    %642 = vmatpush1.msra.mxu0 0.0
    %643 = vmatprep.subr.mxu0 0.0
    %644 = vmatpush1.msra.mxu0 0.0
    %645 = vmatprep.subr.mxu0 0.0
    %646 = vmatpush1.msra.mxu0 0.0
    %647 = vmatprep.subr.mxu0 0.0
    %648 = vmatpush1.msra.mxu0 0.0
    %649 = vmatprep.subr.mxu0 0.0
    %650 = vmatpush1.msra.mxu0 0.0
    %651 = vmatprep.subr.mxu0 0.0
    %652 = vmatpush1.msra.mxu0 0.0
    %653 = vmatprep.subr.mxu0 0.0
    %654 = vmatpush1.msra.mxu0 0.0
    %655 = vmatprep.subr.mxu0 0.0
    %656 = vmatpush1.msra.mxu0 0.0
    %657 = vmatprep.subr.mxu0 0.0
    %658 = vmatpush1.msra.mxu0 0.0
    %659 = vmatprep.subr.mxu0 0.0
    %660 = vmatpush1.msra.mxu0 0.0
    %661 = vmatprep.subr.mxu0 0.0
    %662 = vmatpush1.msra.mxu0 0.0
    %663 = vmatprep.subr.mxu0 0.0
    %664 = vmatpush1.msra.mxu0 0.0
    %665 = vmatprep.subr.mxu0 0.0
    %666 = vmatpush1.msra.mxu0 0.0
    %667 = vmatprep.subr.mxu0 0.0
    %668 = vmatpush1.msra.mxu0 0.0
    %669 = vmatprep.mubr.f32.mxu0 0.0
    %670 = vmatmul.mubr.f32.gmra.mrb[0].mxu0 %v603
    %v671 = vpop.f32.mrb[0].mxu0
    %v672 = vadd.f32 0.0, %v671
    %v673 = vpop.f32.mrb[0].mxu0
    %674 = vdwg.mxu0
    %v675 = vadd.f32 %v598, %v672
    %v676 = vtanh.pop %v675
    %v677 = vxor.u32 %v675, 2147483648
    %v678 = vmul.f32 %v677, 1.442695
    %v679 = vpow.pop %v678
    %v680 = vadd.f32 %v679, 1.0
    %v681 = vrcp.pop %v680
    %v682 = vmul.f32 1.0, %v681
    %v683 = vsel %vm347, %v676, %v682
    %v684 = vmul.f32 %v683, %v585
    %686 = vrot.lane.b32.xlu0 %v683, 64
    %v687 = vpop.permute.xlu0 %686
    %v689 = vmul.f32 %v683, %v687
    %691 = vrot.lane.b32.xlu0 %v689, 32
    %v692 = vpop.permute.xlu0 %691
    %v694 = vadd.f32 %v684, %v692
    %v695 = vtanh.pop %v694
    %697 = vrot.lane.b32.xlu0 %v695, 64
    %v698 = vpop.permute.xlu0 %697
    %v700 = vmul.f32 %v683, %v698
    %702 = vrot.lane.b32.xlu0 %v700, 32
    %v703 = vpop.permute.xlu0 %702
    %705 = vst.msk [vmem:[#allocation3 + $0x6] sm:$0x3] %vm377, %v703
    %s706 = scalar_lea.vmem [#allocation2], 4
    %v707 = vld [vmem:[%s706] ss:$8 sm:$0x3]
    %v708 = vld [vmem:[#allocation9] sm:$0xff]
    %v709 = vld [vmem:[#allocation9 + $0x8] sm:$0xff]
    %v710 = vld [vmem:[#allocation9 + $0x10] sm:$0xff]
    %v711 = vld [vmem:[#allocation9 + $0x18] sm:$0xff]
    %v712 = vsel %vm268, %v703, 0
    %714 = vmatprep.subr.mxu0 0.0
    %715 = vmatpush1.msra.mxu0 %v708
    %716 = vmatprep.subr.mxu0 0.0
    %717 = vmatpush1.msra.mxu0 %v709
    %718 = vmatprep.subr.mxu0 0.0
    %719 = vmatpush1.msra.mxu0 %v710
    %720 = vmatprep.subr.mxu0 0.0
    %721 = vmatpush1.msra.mxu0 %v711
    %722 = vmatprep.subr.mxu0 0.0
    %723 = vmatpush1.msra.mxu0 0.0
    %724 = vmatprep.subr.mxu0 0.0
    %725 = vmatpush1.msra.mxu0 0.0
    %726 = vmatprep.subr.mxu0 0.0
    %727 = vmatpush1.msra.mxu0 0.0
    %728 = vmatprep.subr.mxu0 0.0
    %729 = vmatpush1.msra.mxu0 0.0
    %730 = vmatprep.subr.mxu0 0.0
    %731 = vmatpush1.msra.mxu0 0.0
    %732 = vmatprep.subr.mxu0 0.0
    %733 = vmatpush1.msra.mxu0 0.0
    %734 = vmatprep.subr.mxu0 0.0
    %735 = vmatpush1.msra.mxu0 0.0
    %736 = vmatprep.subr.mxu0 0.0
    %737 = vmatpush1.msra.mxu0 0.0
    %738 = vmatprep.subr.mxu0 0.0
    %739 = vmatpush1.msra.mxu0 0.0
    %740 = vmatprep.subr.mxu0 0.0
    %741 = vmatpush1.msra.mxu0 0.0
    %742 = vmatprep.subr.mxu0 0.0
    %743 = vmatpush1.msra.mxu0 0.0
    %744 = vmatprep.subr.mxu0 0.0
    %745 = vmatpush1.msra.mxu0 0.0
    %746 = vmatprep.subr.mxu0 0.0
    %747 = vmatpush1.msra.mxu0 0.0
    %748 = vmatprep.subr.mxu0 0.0
    %749 = vmatpush1.msra.mxu0 0.0
    %750 = vmatprep.subr.mxu0 0.0
    %751 = vmatpush1.msra.mxu0 0.0
    %752 = vmatprep.subr.mxu0 0.0
    %753 = vmatpush1.msra.mxu0 0.0
    %754 = vmatprep.subr.mxu0 0.0
    %755 = vmatpush1.msra.mxu0 0.0
    %756 = vmatprep.subr.mxu0 0.0
    %757 = vmatpush1.msra.mxu0 0.0
    %758 = vmatprep.subr.mxu0 0.0
    %759 = vmatpush1.msra.mxu0 0.0
    %760 = vmatprep.subr.mxu0 0.0
    %761 = vmatpush1.msra.mxu0 0.0
    %762 = vmatprep.subr.mxu0 0.0
    %763 = vmatpush1.msra.mxu0 0.0
    %764 = vmatprep.subr.mxu0 0.0
    %765 = vmatpush1.msra.mxu0 0.0
    %766 = vmatprep.subr.mxu0 0.0
    %767 = vmatpush1.msra.mxu0 0.0
    %768 = vmatprep.subr.mxu0 0.0
    %769 = vmatpush1.msra.mxu0 0.0
    %770 = vmatprep.subr.mxu0 0.0
    %771 = vmatpush1.msra.mxu0 0.0
    %772 = vmatprep.subr.mxu0 0.0
    %773 = vmatpush1.msra.mxu0 0.0
    %774 = vmatprep.subr.mxu0 0.0
    %775 = vmatpush1.msra.mxu0 0.0
    %776 = vmatprep.subr.mxu0 0.0
    %777 = vmatpush1.msra.mxu0 0.0
    %778 = vmatprep.mubr.f32.mxu0 0.0
    %779 = vmatmul.mubr.f32.gmra.mrb[0].mxu0 %v712
    %v780 = vpop.f32.mrb[0].mxu0
    %v781 = vadd.f32 0.0, %v780
    %v782 = vpop.f32.mrb[0].mxu0
    %783 = vdwg.mxu0
    %v784 = vadd.f32 %v707, %v781
    %v785 = vtanh.pop %v784
    %v786 = vxor.u32 %v784, 2147483648
    %v787 = vmul.f32 %v786, 1.442695
    %v788 = vpow.pop %v787
    %v789 = vadd.f32 %v788, 1.0
    %v790 = vrcp.pop %v789
    %v791 = vmul.f32 1.0, %v790
    %v792 = vsel %vm347, %v785, %v791
    %v793 = vmul.f32 %v792, %v694
    %795 = vrot.lane.b32.xlu0 %v792, 64
    %v796 = vpop.permute.xlu0 %795
    %v798 = vmul.f32 %v792, %v796
    %800 = vrot.lane.b32.xlu0 %v798, 32
    %v801 = vpop.permute.xlu0 %800
    %v803 = vadd.f32 %v793, %v801
    %v804 = vtanh.pop %v803
    %806 = vrot.lane.b32.xlu0 %v804, 64
    %v807 = vpop.permute.xlu0 %806
    %v809 = vmul.f32 %v792, %v807
    %811 = vrot.lane.b32.xlu0 %v809, 32
    %v812 = vpop.permute.xlu0 %811
    %814 = vst.msk [vmem:[#allocation3 + $0x8] sm:$0x3] %vm377, %v812
    %s815 = scalar_lea.vmem [#allocation2], 5
    %v816 = vld [vmem:[%s815] ss:$8 sm:$0x3]
    %v817 = vld [vmem:[#allocation9] sm:$0xff]
    %v818 = vld [vmem:[#allocation9 + $0x8] sm:$0xff]
    %v819 = vld [vmem:[#allocation9 + $0x10] sm:$0xff]
    %v820 = vld [vmem:[#allocation9 + $0x18] sm:$0xff]
    %v821 = vsel %vm268, %v812, 0
    %823 = vmatprep.subr.mxu0 0.0
    %824 = vmatpush1.msra.mxu0 %v817
    %825 = vmatprep.subr.mxu0 0.0
    %826 = vmatpush1.msra.mxu0 %v818
    %827 = vmatprep.subr.mxu0 0.0
    %828 = vmatpush1.msra.mxu0 %v819
    %829 = vmatprep.subr.mxu0 0.0
    %830 = vmatpush1.msra.mxu0 %v820
    %831 = vmatprep.subr.mxu0 0.0
    %832 = vmatpush1.msra.mxu0 0.0
    %833 = vmatprep.subr.mxu0 0.0
    %834 = vmatpush1.msra.mxu0 0.0
    %835 = vmatprep.subr.mxu0 0.0
    %836 = vmatpush1.msra.mxu0 0.0
    %837 = vmatprep.subr.mxu0 0.0
    %838 = vmatpush1.msra.mxu0 0.0
    %839 = vmatprep.subr.mxu0 0.0
    %840 = vmatpush1.msra.mxu0 0.0
    %841 = vmatprep.subr.mxu0 0.0
    %842 = vmatpush1.msra.mxu0 0.0
    %843 = vmatprep.subr.mxu0 0.0
    %844 = vmatpush1.msra.mxu0 0.0
    %845 = vmatprep.subr.mxu0 0.0
    %846 = vmatpush1.msra.mxu0 0.0
    %847 = vmatprep.subr.mxu0 0.0
    %848 = vmatpush1.msra.mxu0 0.0
    %849 = vmatprep.subr.mxu0 0.0
    %850 = vmatpush1.msra.mxu0 0.0
    %851 = vmatprep.subr.mxu0 0.0
    %852 = vmatpush1.msra.mxu0 0.0
    %853 = vmatprep.subr.mxu0 0.0
    %854 = vmatpush1.msra.mxu0 0.0
    %855 = vmatprep.subr.mxu0 0.0
    %856 = vmatpush1.msra.mxu0 0.0
    %857 = vmatprep.subr.mxu0 0.0
    %858 = vmatpush1.msra.mxu0 0.0
    %859 = vmatprep.subr.mxu0 0.0
    %860 = vmatpush1.msra.mxu0 0.0
    %861 = vmatprep.subr.mxu0 0.0
    %862 = vmatpush1.msra.mxu0 0.0
    %863 = vmatprep.subr.mxu0 0.0
    %864 = vmatpush1.msra.mxu0 0.0
    %865 = vmatprep.subr.mxu0 0.0
    %866 = vmatpush1.msra.mxu0 0.0
    %867 = vmatprep.subr.mxu0 0.0
    %868 = vmatpush1.msra.mxu0 0.0
    %869 = vmatprep.subr.mxu0 0.0
    %870 = vmatpush1.msra.mxu0 0.0
    %871 = vmatprep.subr.mxu0 0.0
    %872 = vmatpush1.msra.mxu0 0.0
    %873 = vmatprep.subr.mxu0 0.0
    %874 = vmatpush1.msra.mxu0 0.0
    %875 = vmatprep.subr.mxu0 0.0
    %876 = vmatpush1.msra.mxu0 0.0
    %877 = vmatprep.subr.mxu0 0.0
    %878 = vmatpush1.msra.mxu0 0.0
    %879 = vmatprep.subr.mxu0 0.0
    %880 = vmatpush1.msra.mxu0 0.0
    %881 = vmatprep.subr.mxu0 0.0
    %882 = vmatpush1.msra.mxu0 0.0
    %883 = vmatprep.subr.mxu0 0.0
    %884 = vmatpush1.msra.mxu0 0.0
    %885 = vmatprep.subr.mxu0 0.0
    %886 = vmatpush1.msra.mxu0 0.0
    %887 = vmatprep.mubr.f32.mxu0 0.0
    %888 = vmatmul.mubr.f32.gmra.mrb[0].mxu0 %v821
    %v889 = vpop.f32.mrb[0].mxu0
    %v890 = vadd.f32 0.0, %v889
    %v891 = vpop.f32.mrb[0].mxu0
    %892 = vdwg.mxu0
    %v893 = vadd.f32 %v816, %v890
    %v894 = vtanh.pop %v893
    %v895 = vxor.u32 %v893, 2147483648
    %v896 = vmul.f32 %v895, 1.442695
    %v897 = vpow.pop %v896
    %v898 = vadd.f32 %v897, 1.0
    %v899 = vrcp.pop %v898
    %v900 = vmul.f32 1.0, %v899
    %v901 = vsel %vm347, %v894, %v900
    %v902 = vmul.f32 %v901, %v803
    %904 = vrot.lane.b32.xlu0 %v901, 64
    %v905 = vpop.permute.xlu0 %904
    %v907 = vmul.f32 %v901, %v905
    %909 = vrot.lane.b32.xlu0 %v907, 32
    %v910 = vpop.permute.xlu0 %909
    %v912 = vadd.f32 %v902, %v910
    %v913 = vtanh.pop %v912
    %915 = vrot.lane.b32.xlu0 %v913, 64
    %v916 = vpop.permute.xlu0 %915
    %v918 = vmul.f32 %v901, %v916
    %920 = vrot.lane.b32.xlu0 %v918, 32
    %v921 = vpop.permute.xlu0 %920
    %923 = vst.msk [vmem:[#allocation3 + $0xa] sm:$0x3] %vm377, %v921
    %s924 = scalar_lea.vmem [#allocation2], 6
    %v925 = vld [vmem:[%s924] ss:$8 sm:$0x3]
    %v926 = vld [vmem:[#allocation9] sm:$0xff]
    %v927 = vld [vmem:[#allocation9 + $0x8] sm:$0xff]
    %v928 = vld [vmem:[#allocation9 + $0x10] sm:$0xff]
    %v929 = vld [vmem:[#allocation9 + $0x18] sm:$0xff]
    %v930 = vsel %vm268, %v921, 0
    %932 = vmatprep.subr.mxu0 0.0
    %933 = vmatpush1.msra.mxu0 %v926
    %934 = vmatprep.subr.mxu0 0.0
    %935 = vmatpush1.msra.mxu0 %v927
    %936 = vmatprep.subr.mxu0 0.0
    %937 = vmatpush1.msra.mxu0 %v928
    %938 = vmatprep.subr.mxu0 0.0
    %939 = vmatpush1.msra.mxu0 %v929
    %940 = vmatprep.subr.mxu0 0.0
    %941 = vmatpush1.msra.mxu0 0.0
    %942 = vmatprep.subr.mxu0 0.0
    %943 = vmatpush1.msra.mxu0 0.0
    %944 = vmatprep.subr.mxu0 0.0
    %945 = vmatpush1.msra.mxu0 0.0
    %946 = vmatprep.subr.mxu0 0.0
    %947 = vmatpush1.msra.mxu0 0.0
    %948 = vmatprep.subr.mxu0 0.0
    %949 = vmatpush1.msra.mxu0 0.0
    %950 = vmatprep.subr.mxu0 0.0
    %951 = vmatpush1.msra.mxu0 0.0
    %952 = vmatprep.subr.mxu0 0.0
    %953 = vmatpush1.msra.mxu0 0.0
    %954 = vmatprep.subr.mxu0 0.0
    %955 = vmatpush1.msra.mxu0 0.0
    %956 = vmatprep.subr.mxu0 0.0
    %957 = vmatpush1.msra.mxu0 0.0
    %958 = vmatprep.subr.mxu0 0.0
    %959 = vmatpush1.msra.mxu0 0.0
    %960 = vmatprep.subr.mxu0 0.0
    %961 = vmatpush1.msra.mxu0 0.0
    %962 = vmatprep.subr.mxu0 0.0
    %963 = vmatpush1.msra.mxu0 0.0
    %964 = vmatprep.subr.mxu0 0.0
    %965 = vmatpush1.msra.mxu0 0.0
    %966 = vmatprep.subr.mxu0 0.0
    %967 = vmatpush1.msra.mxu0 0.0
    %968 = vmatprep.subr.mxu0 0.0
    %969 = vmatpush1.msra.mxu0 0.0
    %970 = vmatprep.subr.mxu0 0.0
    %971 = vmatpush1.msra.mxu0 0.0
    %972 = vmatprep.subr.mxu0 0.0
    %973 = vmatpush1.msra.mxu0 0.0
    %974 = vmatprep.subr.mxu0 0.0
    %975 = vmatpush1.msra.mxu0 0.0
    %976 = vmatprep.subr.mxu0 0.0
    %977 = vmatpush1.msra.mxu0 0.0
    %978 = vmatprep.subr.mxu0 0.0
    %979 = vmatpush1.msra.mxu0 0.0
    %980 = vmatprep.subr.mxu0 0.0
    %981 = vmatpush1.msra.mxu0 0.0
    %982 = vmatprep.subr.mxu0 0.0
    %983 = vmatpush1.msra.mxu0 0.0
    %984 = vmatprep.subr.mxu0 0.0
    %985 = vmatpush1.msra.mxu0 0.0
    %986 = vmatprep.subr.mxu0 0.0
    %987 = vmatpush1.msra.mxu0 0.0
    %988 = vmatprep.subr.mxu0 0.0
    %989 = vmatpush1.msra.mxu0 0.0
    %990 = vmatprep.subr.mxu0 0.0
    %991 = vmatpush1.msra.mxu0 0.0
    %992 = vmatprep.subr.mxu0 0.0
    %993 = vmatpush1.msra.mxu0 0.0
    %994 = vmatprep.subr.mxu0 0.0
    %995 = vmatpush1.msra.mxu0 0.0
    %996 = vmatprep.mubr.f32.mxu0 0.0
    %997 = vmatmul.mubr.f32.gmra.mrb[0].mxu0 %v930
    %v998 = vpop.f32.mrb[0].mxu0
    %v999 = vadd.f32 0.0, %v998
    %v1000 = vpop.f32.mrb[0].mxu0
    %1001 = vdwg.mxu0
    %v1002 = vadd.f32 %v925, %v999
    %v1003 = vtanh.pop %v1002
    %v1004 = vxor.u32 %v1002, 2147483648
    %v1005 = vmul.f32 %v1004, 1.442695
    %v1006 = vpow.pop %v1005
    %v1007 = vadd.f32 %v1006, 1.0
    %v1008 = vrcp.pop %v1007
    %v1009 = vmul.f32 1.0, %v1008
    %v1010 = vsel %vm347, %v1003, %v1009
    %v1011 = vmul.f32 %v1010, %v912
    %1013 = vrot.lane.b32.xlu0 %v1010, 64
    %v1014 = vpop.permute.xlu0 %1013
    %v1016 = vmul.f32 %v1010, %v1014
    %1018 = vrot.lane.b32.xlu0 %v1016, 32
    %v1019 = vpop.permute.xlu0 %1018
    %v1021 = vadd.f32 %v1011, %v1019
    %v1022 = vtanh.pop %v1021
    %1024 = vrot.lane.b32.xlu0 %v1022, 64
    %v1025 = vpop.permute.xlu0 %1024
    %v1027 = vmul.f32 %v1010, %v1025
    %1029 = vrot.lane.b32.xlu0 %v1027, 32
    %v1030 = vpop.permute.xlu0 %1029
    %1032 = vst.msk [vmem:[#allocation3 + $0xc] sm:$0x3] %vm377, %v1030
    %s1033 = scalar_lea.vmem [#allocation2], 7
    %v1034 = vld [vmem:[%s1033] ss:$8 sm:$0x3]
    %v1035 = vld [vmem:[#allocation9] sm:$0xff]
    %v1036 = vld [vmem:[#allocation9 + $0x8] sm:$0xff]
    %v1037 = vld [vmem:[#allocation9 + $0x10] sm:$0xff]
    %v1038 = vld [vmem:[#allocation9 + $0x18] sm:$0xff]
    %v1039 = vsel %vm268, %v1030, 0
    %1041 = vmatprep.subr.mxu0 0.0
    %1042 = vmatpush1.msra.mxu0 %v1035
    %1043 = vmatprep.subr.mxu0 0.0
    %1044 = vmatpush1.msra.mxu0 %v1036
    %1045 = vmatprep.subr.mxu0 0.0
    %1046 = vmatpush1.msra.mxu0 %v1037
    %1047 = vmatprep.subr.mxu0 0.0
    %1048 = vmatpush1.msra.mxu0 %v1038
    %1049 = vmatprep.subr.mxu0 0.0
    %1050 = vmatpush1.msra.mxu0 0.0
    %1051 = vmatprep.subr.mxu0 0.0
    %1052 = vmatpush1.msra.mxu0 0.0
    %1053 = vmatprep.subr.mxu0 0.0
    %1054 = vmatpush1.msra.mxu0 0.0
    %1055 = vmatprep.subr.mxu0 0.0
    %1056 = vmatpush1.msra.mxu0 0.0
    %1057 = vmatprep.subr.mxu0 0.0
    %1058 = vmatpush1.msra.mxu0 0.0
    %1059 = vmatprep.subr.mxu0 0.0
    %1060 = vmatpush1.msra.mxu0 0.0
    %1061 = vmatprep.subr.mxu0 0.0
    %1062 = vmatpush1.msra.mxu0 0.0
    %1063 = vmatprep.subr.mxu0 0.0
    %1064 = vmatpush1.msra.mxu0 0.0
    %1065 = vmatprep.subr.mxu0 0.0
    %1066 = vmatpush1.msra.mxu0 0.0
    %1067 = vmatprep.subr.mxu0 0.0
    %1068 = vmatpush1.msra.mxu0 0.0
    %1069 = vmatprep.subr.mxu0 0.0
    %1070 = vmatpush1.msra.mxu0 0.0
    %1071 = vmatprep.subr.mxu0 0.0
    %1072 = vmatpush1.msra.mxu0 0.0
    %1073 = vmatprep.subr.mxu0 0.0
    %1074 = vmatpush1.msra.mxu0 0.0
    %1075 = vmatprep.subr.mxu0 0.0
    %1076 = vmatpush1.msra.mxu0 0.0
    %1077 = vmatprep.subr.mxu0 0.0
    %1078 = vmatpush1.msra.mxu0 0.0
    %1079 = vmatprep.subr.mxu0 0.0
    %1080 = vmatpush1.msra.mxu0 0.0
    %1081 = vmatprep.subr.mxu0 0.0
    %1082 = vmatpush1.msra.mxu0 0.0
    %1083 = vmatprep.subr.mxu0 0.0
    %1084 = vmatpush1.msra.mxu0 0.0
    %1085 = vmatprep.subr.mxu0 0.0
    %1086 = vmatpush1.msra.mxu0 0.0
    %1087 = vmatprep.subr.mxu0 0.0
    %1088 = vmatpush1.msra.mxu0 0.0
    %1089 = vmatprep.subr.mxu0 0.0
    %1090 = vmatpush1.msra.mxu0 0.0
    %1091 = vmatprep.subr.mxu0 0.0
    %1092 = vmatpush1.msra.mxu0 0.0
    %1093 = vmatprep.subr.mxu0 0.0
    %1094 = vmatpush1.msra.mxu0 0.0
    %1095 = vmatprep.subr.mxu0 0.0
    %1096 = vmatpush1.msra.mxu0 0.0
    %1097 = vmatprep.subr.mxu0 0.0
    %1098 = vmatpush1.msra.mxu0 0.0
    %1099 = vmatprep.subr.mxu0 0.0
    %1100 = vmatpush1.msra.mxu0 0.0
    %1101 = vmatprep.subr.mxu0 0.0
    %1102 = vmatpush1.msra.mxu0 0.0
    %1103 = vmatprep.subr.mxu0 0.0
    %1104 = vmatpush1.msra.mxu0 0.0
    %1105 = vmatprep.mubr.f32.mxu0 0.0
    %1106 = vmatmul.mubr.f32.gmra.mrb[0].mxu0 %v1039
    %v1107 = vpop.f32.mrb[0].mxu0
    %v1108 = vadd.f32 0.0, %v1107
    %v1109 = vpop.f32.mrb[0].mxu0
    %1110 = vdwg.mxu0
    %v1111 = vadd.f32 %v1034, %v1108
    %v1112 = vtanh.pop %v1111
    %v1113 = vxor.u32 %v1111, 2147483648
    %v1114 = vmul.f32 %v1113, 1.442695
    %v1115 = vpow.pop %v1114
    %v1116 = vadd.f32 %v1115, 1.0
    %v1117 = vrcp.pop %v1116
    %v1118 = vmul.f32 1.0, %v1117
    %v1119 = vsel %vm347, %v1112, %v1118
    %v1120 = vmul.f32 %v1119, %v1021
    %1122 = vrot.lane.b32.xlu0 %v1119, 64
    %v1123 = vpop.permute.xlu0 %1122
    %v1125 = vmul.f32 %v1119, %v1123
    %1127 = vrot.lane.b32.xlu0 %v1125, 32
    %v1128 = vpop.permute.xlu0 %1127
    %v1130 = vadd.f32 %v1120, %v1128
    %v1131 = vtanh.pop %v1130
    %1133 = vrot.lane.b32.xlu0 %v1131, 64
    %v1134 = vpop.permute.xlu0 %1133
    %v1136 = vmul.f32 %v1119, %v1134
    %1138 = vrot.lane.b32.xlu0 %v1136, 32
    %v1139 = vpop.permute.xlu0 %1138
    %1141 = vst.msk [vmem:[#allocation3 + $0xe] sm:$0x3] %vm377, %v1139
    %v1142 = vld [vmem:[#allocation3] sm:$0xff]
    %v1143 = vld [vmem:[#allocation3 + $0x8] sm:$0xff]
    %v1144 = vld [vmem:[#allocation10] sm:$0xff]
    %v1145 = vld [vmem:[#allocation10 + $0x8] sm:$0xff]
    %v1146 = vld [vmem:[#allocation10 + $0x10] sm:$0xff]
    %v1147 = vld [vmem:[#allocation10 + $0x18] sm:$0xff]
    %v1148 = vld [vmem:[%s6] sm:$0x1]
    %v1150 = vlaneseq
    %v1151 = vshrl.u32 %v1150, 7
    %v1152 = vsub.s32 0, %v1151
    %v1153 = vrot.slane %v1148, %v1152
    %v1156 = vsel %vm268, %v1142, 0
    %v1159 = vsel %vm268, %v1143, 0
    %1161 = vmatprep.subr.mxu0 0.0
    %1162 = vmatpush1.msra.mxu0 %v1144
    %1163 = vmatprep.subr.mxu0 0.0
    %1164 = vmatpush1.msra.mxu0 %v1145
    %1165 = vmatprep.subr.mxu0 0.0
    %1166 = vmatpush1.msra.mxu0 %v1146
    %1167 = vmatprep.subr.mxu0 0.0
    %1168 = vmatpush1.msra.mxu0 %v1147
    %1169 = vmatprep.subr.mxu0 0.0
    %1170 = vmatpush1.msra.mxu0 0.0
    %1171 = vmatprep.subr.mxu0 0.0
    %1172 = vmatpush1.msra.mxu0 0.0
    %1173 = vmatprep.subr.mxu0 0.0
    %1174 = vmatpush1.msra.mxu0 0.0
    %1175 = vmatprep.subr.mxu0 0.0
    %1176 = vmatpush1.msra.mxu0 0.0
    %1177 = vmatprep.subr.mxu0 0.0
    %1178 = vmatpush1.msra.mxu0 0.0
    %1179 = vmatprep.subr.mxu0 0.0
    %1180 = vmatpush1.msra.mxu0 0.0
    %1181 = vmatprep.subr.mxu0 0.0
    %1182 = vmatpush1.msra.mxu0 0.0
    %1183 = vmatprep.subr.mxu0 0.0
    %1184 = vmatpush1.msra.mxu0 0.0
    %1185 = vmatprep.subr.mxu0 0.0
    %1186 = vmatpush1.msra.mxu0 0.0
    %1187 = vmatprep.subr.mxu0 0.0
    %1188 = vmatpush1.msra.mxu0 0.0
    %1189 = vmatprep.subr.mxu0 0.0
    %1190 = vmatpush1.msra.mxu0 0.0
    %1191 = vmatprep.subr.mxu0 0.0
    %1192 = vmatpush1.msra.mxu0 0.0
    %1193 = vmatprep.subr.mxu0 0.0
    %1194 = vmatpush1.msra.mxu0 0.0
    %1195 = vmatprep.subr.mxu0 0.0
    %1196 = vmatpush1.msra.mxu0 0.0
    %1197 = vmatprep.subr.mxu0 0.0
    %1198 = vmatpush1.msra.mxu0 0.0
    %1199 = vmatprep.subr.mxu0 0.0
    %1200 = vmatpush1.msra.mxu0 0.0
    %1201 = vmatprep.subr.mxu0 0.0
    %1202 = vmatpush1.msra.mxu0 0.0
    %1203 = vmatprep.subr.mxu0 0.0
    %1204 = vmatpush1.msra.mxu0 0.0
    %1205 = vmatprep.subr.mxu0 0.0
    %1206 = vmatpush1.msra.mxu0 0.0
    %1207 = vmatprep.subr.mxu0 0.0
    %1208 = vmatpush1.msra.mxu0 0.0
    %1209 = vmatprep.subr.mxu0 0.0
    %1210 = vmatpush1.msra.mxu0 0.0
    %1211 = vmatprep.subr.mxu0 0.0
    %1212 = vmatpush1.msra.mxu0 0.0
    %1213 = vmatprep.subr.mxu0 0.0
    %1214 = vmatpush1.msra.mxu0 0.0
    %1215 = vmatprep.subr.mxu0 0.0
    %1216 = vmatpush1.msra.mxu0 0.0
    %1217 = vmatprep.subr.mxu0 0.0
    %1218 = vmatpush1.msra.mxu0 0.0
    %1219 = vmatprep.subr.mxu0 0.0
    %1220 = vmatpush1.msra.mxu0 0.0
    %1221 = vmatprep.subr.mxu0 0.0
    %1222 = vmatpush1.msra.mxu0 0.0
    %1223 = vmatprep.subr.mxu0 0.0
    %1224 = vmatpush1.msra.mxu0 0.0
    %1225 = vmatprep.mubr.f32.mxu0 0.0
    %1226 = vmatmul.mubr.f32.gmra.mrb[0].mxu0 %v1156
    %v1227 = vpop.f32.mrb[0].mxu0
    %v1228 = vadd.f32 %v1153, %v1227
    %v1229 = vpop.f32.mrb[0].mxu0
    %1230 = vmatprep.mubr.f32.mxu0 0.0
    %1231 = vmatmul.mubr.f32.gmra.mrb[0].mxu0 %v1159
    %v1232 = vpop.f32.mrb[0].mxu0
    %v1233 = vadd.f32 %v1153, %v1232
    %v1234 = vpop.f32.mrb[0].mxu0
    %1235 = vdwg.mxu0
    %1236 = vst [vmem:[#allocation2] sm:$0xff] %v1228
    %1237 = vst [vmem:[#allocation2 + $0x8] sm:$0xff] %v1233
    %v1238 = vld [vmem:[#allocation2] sm:$0x3]
    %v1239 = vld [vmem:[#allocation12] sm:$0xff]
    %v1240 = vld [vmem:[#allocation12 + $0x8] sm:$0xff]
    %v1241 = vld [vmem:[#allocation12 + $0x10] sm:$0xff]
    %v1242 = vld [vmem:[#allocation12 + $0x18] sm:$0xff]
    %1243 = vmatprep.subr.mxu0 0.0
    %1244 = vmatpush1.msra.mxu0 %v1239
    %1245 = vmatprep.subr.mxu0 0.0
    %1246 = vmatpush1.msra.mxu0 %v1240
    %1247 = vmatprep.subr.mxu0 0.0
    %1248 = vmatpush1.msra.mxu0 %v1241
    %1249 = vmatprep.subr.mxu0 0.0
    %1250 = vmatpush1.msra.mxu0 %v1242
    %1251 = vmatprep.subr.mxu0 0.0
    %1252 = vmatpush1.msra.mxu0 0.0
    %1253 = vmatprep.subr.mxu0 0.0
    %1254 = vmatpush1.msra.mxu0 0.0
    %1255 = vmatprep.subr.mxu0 0.0
    %1256 = vmatpush1.msra.mxu0 0.0
    %1257 = vmatprep.subr.mxu0 0.0
    %1258 = vmatpush1.msra.mxu0 0.0
    %1259 = vmatprep.subr.mxu0 0.0
    %1260 = vmatpush1.msra.mxu0 0.0
    %1261 = vmatprep.subr.mxu0 0.0
    %1262 = vmatpush1.msra.mxu0 0.0
    %1263 = vmatprep.subr.mxu0 0.0
    %1264 = vmatpush1.msra.mxu0 0.0
    %1265 = vmatprep.subr.mxu0 0.0
    %1266 = vmatpush1.msra.mxu0 0.0
    %1267 = vmatprep.subr.mxu0 0.0
    %1268 = vmatpush1.msra.mxu0 0.0
    %1269 = vmatprep.subr.mxu0 0.0
    %1270 = vmatpush1.msra.mxu0 0.0
    %1271 = vmatprep.subr.mxu0 0.0
    %1272 = vmatpush1.msra.mxu0 0.0
    %1273 = vmatprep.subr.mxu0 0.0
    %1274 = vmatpush1.msra.mxu0 0.0
    %1275 = vmatprep.subr.mxu0 0.0
    %1276 = vmatpush1.msra.mxu0 0.0
    %1277 = vmatprep.subr.mxu0 0.0
    %1278 = vmatpush1.msra.mxu0 0.0
    %1279 = vmatprep.subr.mxu0 0.0
    %1280 = vmatpush1.msra.mxu0 0.0
    %1281 = vmatprep.subr.mxu0 0.0
    %1282 = vmatpush1.msra.mxu0 0.0
    %1283 = vmatprep.subr.mxu0 0.0
    %1284 = vmatpush1.msra.mxu0 0.0
    %1285 = vmatprep.subr.mxu0 0.0
    %1286 = vmatpush1.msra.mxu0 0.0
    %1287 = vmatprep.subr.mxu0 0.0
    %1288 = vmatpush1.msra.mxu0 0.0
    %1289 = vmatprep.subr.mxu0 0.0
    %1290 = vmatpush1.msra.mxu0 0.0
    %1291 = vmatprep.subr.mxu0 0.0
    %1292 = vmatpush1.msra.mxu0 0.0
    %1293 = vmatprep.subr.mxu0 0.0
    %1294 = vmatpush1.msra.mxu0 0.0
    %1295 = vmatprep.subr.mxu0 0.0
    %1296 = vmatpush1.msra.mxu0 0.0
    %1297 = vmatprep.subr.mxu0 0.0
    %1298 = vmatpush1.msra.mxu0 0.0
    %1299 = vmatprep.subr.mxu0 0.0
    %1300 = vmatpush1.msra.mxu0 0.0
    %1301 = vmatprep.subr.mxu0 0.0
    %1302 = vmatpush1.msra.mxu0 0.0
    %1303 = vmatprep.subr.mxu0 0.0
    %1304 = vmatpush1.msra.mxu0 0.0
    %1305 = vmatprep.subr.mxu0 0.0
    %1306 = vmatpush1.msra.mxu0 0.0
    %1307 = vmatprep.mubr.f32.mxu0 0.0
    %1308 = vmatmul.mubr.f32.gmra.mrb[0].mxu0 %v270
    %v1309 = vpop.f32.mrb[0].mxu0
    %v1310 = vadd.f32 0.0, %v1309
    %v1311 = vpop.f32.mrb[0].mxu0
    %1312 = vdwg.mxu0
    %v1313 = vadd.f32 %v1238, %v1310
    %v1314 = vtanh.pop %v1313
    %v1315 = vxor.u32 %v1313, 2147483648
    %v1316 = vmul.f32 %v1315, 1.442695
    %v1317 = vpow.pop %v1316
    %v1318 = vadd.f32 %v1317, 1.0
    %v1319 = vrcp.pop %v1318
    %v1320 = vmul.f32 1.0, %v1319
    %v1321 = vsel %vm347, %v1314, %v1320
    %v1322 = vmul.f32 %v1321, 0.0
    %1324 = vrot.lane.b32.xlu0 %v1321, 64
    %v1325 = vpop.permute.xlu0 %1324
    %v1327 = vmul.f32 %v1321, %v1325
    %1329 = vrot.lane.b32.xlu0 %v1327, 32
    %v1330 = vpop.permute.xlu0 %1329
    %v1332 = vadd.f32 %v1322, %v1330
    %v1333 = vtanh.pop %v1332
    %1335 = vrot.lane.b32.xlu0 %v1333, 64
    %v1336 = vpop.permute.xlu0 %1335
    %v1338 = vmul.f32 %v1321, %v1336
    %1340 = vrot.lane.b32.xlu0 %v1338, 32
    %v1341 = vpop.permute.xlu0 %1340
    %1343 = vst.msk [vmem:[#allocation3] sm:$0x3] %vm377, %v1341
    %v1344 = vld [vmem:[#allocation2 + $0x2] sm:$0x3]
    %v1345 = vld [vmem:[#allocation12] sm:$0xff]
    %v1346 = vld [vmem:[#allocation12 + $0x8] sm:$0xff]
    %v1347 = vld [vmem:[#allocation12 + $0x10] sm:$0xff]
    %v1348 = vld [vmem:[#allocation12 + $0x18] sm:$0xff]
    %v1349 = vsel %vm268, %v1341, 0
    %1351 = vmatprep.subr.mxu0 0.0
    %1352 = vmatpush1.msra.mxu0 %v1345
    %1353 = vmatprep.subr.mxu0 0.0
    %1354 = vmatpush1.msra.mxu0 %v1346
    %1355 = vmatprep.subr.mxu0 0.0
    %1356 = vmatpush1.msra.mxu0 %v1347
    %1357 = vmatprep.subr.mxu0 0.0
    %1358 = vmatpush1.msra.mxu0 %v1348
    %1359 = vmatprep.subr.mxu0 0.0
    %1360 = vmatpush1.msra.mxu0 0.0
    %1361 = vmatprep.subr.mxu0 0.0
    %1362 = vmatpush1.msra.mxu0 0.0
    %1363 = vmatprep.subr.mxu0 0.0
    %1364 = vmatpush1.msra.mxu0 0.0
    %1365 = vmatprep.subr.mxu0 0.0
    %1366 = vmatpush1.msra.mxu0 0.0
    %1367 = vmatprep.subr.mxu0 0.0
    %1368 = vmatpush1.msra.mxu0 0.0
    %1369 = vmatprep.subr.mxu0 0.0
    %1370 = vmatpush1.msra.mxu0 0.0
    %1371 = vmatprep.subr.mxu0 0.0
    %1372 = vmatpush1.msra.mxu0 0.0
    %1373 = vmatprep.subr.mxu0 0.0
    %1374 = vmatpush1.msra.mxu0 0.0
    %1375 = vmatprep.subr.mxu0 0.0
    %1376 = vmatpush1.msra.mxu0 0.0
    %1377 = vmatprep.subr.mxu0 0.0
    %1378 = vmatpush1.msra.mxu0 0.0
    %1379 = vmatprep.subr.mxu0 0.0
    %1380 = vmatpush1.msra.mxu0 0.0
    %1381 = vmatprep.subr.mxu0 0.0
    %1382 = vmatpush1.msra.mxu0 0.0
    %1383 = vmatprep.subr.mxu0 0.0
    %1384 = vmatpush1.msra.mxu0 0.0
    %1385 = vmatprep.subr.mxu0 0.0
    %1386 = vmatpush1.msra.mxu0 0.0
    %1387 = vmatprep.subr.mxu0 0.0
    %1388 = vmatpush1.msra.mxu0 0.0
    %1389 = vmatprep.subr.mxu0 0.0
    %1390 = vmatpush1.msra.mxu0 0.0
    %1391 = vmatprep.subr.mxu0 0.0
    %1392 = vmatpush1.msra.mxu0 0.0
    %1393 = vmatprep.subr.mxu0 0.0
    %1394 = vmatpush1.msra.mxu0 0.0
    %1395 = vmatprep.subr.mxu0 0.0
    %1396 = vmatpush1.msra.mxu0 0.0
    %1397 = vmatprep.subr.mxu0 0.0
    %1398 = vmatpush1.msra.mxu0 0.0
    %1399 = vmatprep.subr.mxu0 0.0
    %1400 = vmatpush1.msra.mxu0 0.0
    %1401 = vmatprep.subr.mxu0 0.0
    %1402 = vmatpush1.msra.mxu0 0.0
    %1403 = vmatprep.subr.mxu0 0.0
    %1404 = vmatpush1.msra.mxu0 0.0
    %1405 = vmatprep.subr.mxu0 0.0
    %1406 = vmatpush1.msra.mxu0 0.0
    %1407 = vmatprep.subr.mxu0 0.0
    %1408 = vmatpush1.msra.mxu0 0.0
    %1409 = vmatprep.subr.mxu0 0.0
    %1410 = vmatpush1.msra.mxu0 0.0
    %1411 = vmatprep.subr.mxu0 0.0
    %1412 = vmatpush1.msra.mxu0 0.0
    %1413 = vmatprep.subr.mxu0 0.0
    %1414 = vmatpush1.msra.mxu0 0.0
    %1415 = vmatprep.mubr.f32.mxu0 0.0
    %1416 = vmatmul.mubr.f32.gmra.mrb[0].mxu0 %v1349
    %v1417 = vpop.f32.mrb[0].mxu0
    %v1418 = vadd.f32 0.0, %v1417
    %v1419 = vpop.f32.mrb[0].mxu0
    %1420 = vdwg.mxu0
    %v1421 = vadd.f32 %v1344, %v1418
    %v1422 = vtanh.pop %v1421
    %v1423 = vxor.u32 %v1421, 2147483648
    %v1424 = vmul.f32 %v1423, 1.442695
    %v1425 = vpow.pop %v1424
    %v1426 = vadd.f32 %v1425, 1.0
    %v1427 = vrcp.pop %v1426
    %v1428 = vmul.f32 1.0, %v1427
    %v1429 = vsel %vm347, %v1422, %v1428
    %v1430 = vmul.f32 %v1429, %v1332
    %1432 = vrot.lane.b32.xlu0 %v1429, 64
    %v1433 = vpop.permute.xlu0 %1432
    %v1435 = vmul.f32 %v1429, %v1433
    %1437 = vrot.lane.b32.xlu0 %v1435, 32
    %v1438 = vpop.permute.xlu0 %1437
    %v1440 = vadd.f32 %v1430, %v1438
    %v1441 = vtanh.pop %v1440
    %1443 = vrot.lane.b32.xlu0 %v1441, 64
    %v1444 = vpop.permute.xlu0 %1443
    %v1446 = vmul.f32 %v1429, %v1444
    %1448 = vrot.lane.b32.xlu0 %v1446, 32
    %v1449 = vpop.permute.xlu0 %1448
    %1451 = vst.msk [vmem:[#allocation3 + $0x2] sm:$0x3] %vm377, %v1449
    %v1452 = vld [vmem:[#allocation2 + $0x4] sm:$0x3]
    %v1453 = vld [vmem:[#allocation12] sm:$0xff]
    %v1454 = vld [vmem:[#allocation12 + $0x8] sm:$0xff]
    %v1455 = vld [vmem:[#allocation12 + $0x10] sm:$0xff]
    %v1456 = vld [vmem:[#allocation12 + $0x18] sm:$0xff]
    %v1457 = vsel %vm268, %v1449, 0
    %1459 = vmatprep.subr.mxu0 0.0
    %1460 = vmatpush1.msra.mxu0 %v1453
    %1461 = vmatprep.subr.mxu0 0.0
    %1462 = vmatpush1.msra.mxu0 %v1454
    %1463 = vmatprep.subr.mxu0 0.0
    %1464 = vmatpush1.msra.mxu0 %v1455
    %1465 = vmatprep.subr.mxu0 0.0
    %1466 = vmatpush1.msra.mxu0 %v1456
    %1467 = vmatprep.subr.mxu0 0.0
    %1468 = vmatpush1.msra.mxu0 0.0
    %1469 = vmatprep.subr.mxu0 0.0
    %1470 = vmatpush1.msra.mxu0 0.0
    %1471 = vmatprep.subr.mxu0 0.0
    %1472 = vmatpush1.msra.mxu0 0.0
    %1473 = vmatprep.subr.mxu0 0.0
    %1474 = vmatpush1.msra.mxu0 0.0
    %1475 = vmatprep.subr.mxu0 0.0
    %1476 = vmatpush1.msra.mxu0 0.0
    %1477 = vmatprep.subr.mxu0 0.0
    %1478 = vmatpush1.msra.mxu0 0.0
    %1479 = vmatprep.subr.mxu0 0.0
    %1480 = vmatpush1.msra.mxu0 0.0
    %1481 = vmatprep.subr.mxu0 0.0
    %1482 = vmatpush1.msra.mxu0 0.0
    %1483 = vmatprep.subr.mxu0 0.0
    %1484 = vmatpush1.msra.mxu0 0.0
    %1485 = vmatprep.subr.mxu0 0.0
    %1486 = vmatpush1.msra.mxu0 0.0
    %1487 = vmatprep.subr.mxu0 0.0
    %1488 = vmatpush1.msra.mxu0 0.0
    %1489 = vmatprep.subr.mxu0 0.0
    %1490 = vmatpush1.msra.mxu0 0.0
    %1491 = vmatprep.subr.mxu0 0.0
    %1492 = vmatpush1.msra.mxu0 0.0
    %1493 = vmatprep.subr.mxu0 0.0
    %1494 = vmatpush1.msra.mxu0 0.0
    %1495 = vmatprep.subr.mxu0 0.0
    %1496 = vmatpush1.msra.mxu0 0.0
    %1497 = vmatprep.subr.mxu0 0.0
    %1498 = vmatpush1.msra.mxu0 0.0
    %1499 = vmatprep.subr.mxu0 0.0
    %1500 = vmatpush1.msra.mxu0 0.0
    %1501 = vmatprep.subr.mxu0 0.0
    %1502 = vmatpush1.msra.mxu0 0.0
    %1503 = vmatprep.subr.mxu0 0.0
    %1504 = vmatpush1.msra.mxu0 0.0
    %1505 = vmatprep.subr.mxu0 0.0
    %1506 = vmatpush1.msra.mxu0 0.0
    %1507 = vmatprep.subr.mxu0 0.0
    %1508 = vmatpush1.msra.mxu0 0.0
    %1509 = vmatprep.subr.mxu0 0.0
    %1510 = vmatpush1.msra.mxu0 0.0
    %1511 = vmatprep.subr.mxu0 0.0
    %1512 = vmatpush1.msra.mxu0 0.0
    %1513 = vmatprep.subr.mxu0 0.0
    %1514 = vmatpush1.msra.mxu0 0.0
    %1515 = vmatprep.subr.mxu0 0.0
    %1516 = vmatpush1.msra.mxu0 0.0
    %1517 = vmatprep.subr.mxu0 0.0
    %1518 = vmatpush1.msra.mxu0 0.0
    %1519 = vmatprep.subr.mxu0 0.0
    %1520 = vmatpush1.msra.mxu0 0.0
    %1521 = vmatprep.subr.mxu0 0.0
    %1522 = vmatpush1.msra.mxu0 0.0
    %1523 = vmatprep.mubr.f32.mxu0 0.0
    %1524 = vmatmul.mubr.f32.gmra.mrb[0].mxu0 %v1457
    %v1525 = vpop.f32.mrb[0].mxu0
    %v1526 = vadd.f32 0.0, %v1525
    %v1527 = vpop.f32.mrb[0].mxu0
    %1528 = vdwg.mxu0
    %v1529 = vadd.f32 %v1452, %v1526
    %v1530 = vtanh.pop %v1529
    %v1531 = vxor.u32 %v1529, 2147483648
    %v1532 = vmul.f32 %v1531, 1.442695
    %v1533 = vpow.pop %v1532
    %v1534 = vadd.f32 %v1533, 1.0
    %v1535 = vrcp.pop %v1534
    %v1536 = vmul.f32 1.0, %v1535
    %v1537 = vsel %vm347, %v1530, %v1536
    %v1538 = vmul.f32 %v1537, %v1440
    %1540 = vrot.lane.b32.xlu0 %v1537, 64
    %v1541 = vpop.permute.xlu0 %1540
    %v1543 = vmul.f32 %v1537, %v1541
    %1545 = vrot.lane.b32.xlu0 %v1543, 32
    %v1546 = vpop.permute.xlu0 %1545
    %v1548 = vadd.f32 %v1538, %v1546
    %v1549 = vtanh.pop %v1548
    %1551 = vrot.lane.b32.xlu0 %v1549, 64
    %v1552 = vpop.permute.xlu0 %1551
    %v1554 = vmul.f32 %v1537, %v1552
    %1556 = vrot.lane.b32.xlu0 %v1554, 32
    %v1557 = vpop.permute.xlu0 %1556
    %1559 = vst.msk [vmem:[#allocation3 + $0x4] sm:$0x3] %vm377, %v1557
    %v1560 = vld [vmem:[#allocation2 + $0x6] sm:$0x3]
    %v1561 = vld [vmem:[#allocation12] sm:$0xff]
    %v1562 = vld [vmem:[#allocation12 + $0x8] sm:$0xff]
    %v1563 = vld [vmem:[#allocation12 + $0x10] sm:$0xff]
    %v1564 = vld [vmem:[#allocation12 + $0x18] sm:$0xff]
    %v1565 = vsel %vm268, %v1557, 0
    %1567 = vmatprep.subr.mxu0 0.0
    %1568 = vmatpush1.msra.mxu0 %v1561
    %1569 = vmatprep.subr.mxu0 0.0
    %1570 = vmatpush1.msra.mxu0 %v1562
    %1571 = vmatprep.subr.mxu0 0.0
    %1572 = vmatpush1.msra.mxu0 %v1563
    %1573 = vmatprep.subr.mxu0 0.0
    %1574 = vmatpush1.msra.mxu0 %v1564
    %1575 = vmatprep.subr.mxu0 0.0
    %1576 = vmatpush1.msra.mxu0 0.0
    %1577 = vmatprep.subr.mxu0 0.0
    %1578 = vmatpush1.msra.mxu0 0.0
    %1579 = vmatprep.subr.mxu0 0.0
    %1580 = vmatpush1.msra.mxu0 0.0
    %1581 = vmatprep.subr.mxu0 0.0
    %1582 = vmatpush1.msra.mxu0 0.0
    %1583 = vmatprep.subr.mxu0 0.0
    %1584 = vmatpush1.msra.mxu0 0.0
    %1585 = vmatprep.subr.mxu0 0.0
    %1586 = vmatpush1.msra.mxu0 0.0
    %1587 = vmatprep.subr.mxu0 0.0
    %1588 = vmatpush1.msra.mxu0 0.0
    %1589 = vmatprep.subr.mxu0 0.0
    %1590 = vmatpush1.msra.mxu0 0.0
    %1591 = vmatprep.subr.mxu0 0.0
    %1592 = vmatpush1.msra.mxu0 0.0
    %1593 = vmatprep.subr.mxu0 0.0
    %1594 = vmatpush1.msra.mxu0 0.0
    %1595 = vmatprep.subr.mxu0 0.0
    %1596 = vmatpush1.msra.mxu0 0.0
    %1597 = vmatprep.subr.mxu0 0.0
    %1598 = vmatpush1.msra.mxu0 0.0
    %1599 = vmatprep.subr.mxu0 0.0
    %1600 = vmatpush1.msra.mxu0 0.0
    %1601 = vmatprep.subr.mxu0 0.0
    %1602 = vmatpush1.msra.mxu0 0.0
    %1603 = vmatprep.subr.mxu0 0.0
    %1604 = vmatpush1.msra.mxu0 0.0
    %1605 = vmatprep.subr.mxu0 0.0
    %1606 = vmatpush1.msra.mxu0 0.0
    %1607 = vmatprep.subr.mxu0 0.0
    %1608 = vmatpush1.msra.mxu0 0.0
    %1609 = vmatprep.subr.mxu0 0.0
    %1610 = vmatpush1.msra.mxu0 0.0
    %1611 = vmatprep.subr.mxu0 0.0
    %1612 = vmatpush1.msra.mxu0 0.0
    %1613 = vmatprep.subr.mxu0 0.0
    %1614 = vmatpush1.msra.mxu0 0.0
    %1615 = vmatprep.subr.mxu0 0.0
    %1616 = vmatpush1.msra.mxu0 0.0
    %1617 = vmatprep.subr.mxu0 0.0
    %1618 = vmatpush1.msra.mxu0 0.0
    %1619 = vmatprep.subr.mxu0 0.0
    %1620 = vmatpush1.msra.mxu0 0.0
    %1621 = vmatprep.subr.mxu0 0.0
    %1622 = vmatpush1.msra.mxu0 0.0
    %1623 = vmatprep.subr.mxu0 0.0
    %1624 = vmatpush1.msra.mxu0 0.0
    %1625 = vmatprep.subr.mxu0 0.0
    %1626 = vmatpush1.msra.mxu0 0.0
    %1627 = vmatprep.subr.mxu0 0.0
    %1628 = vmatpush1.msra.mxu0 0.0
    %1629 = vmatprep.subr.mxu0 0.0
    %1630 = vmatpush1.msra.mxu0 0.0
    %1631 = vmatprep.mubr.f32.mxu0 0.0
    %1632 = vmatmul.mubr.f32.gmra.mrb[0].mxu0 %v1565
    %v1633 = vpop.f32.mrb[0].mxu0
    %v1634 = vadd.f32 0.0, %v1633
    %v1635 = vpop.f32.mrb[0].mxu0
    %1636 = vdwg.mxu0
    %v1637 = vadd.f32 %v1560, %v1634
    %v1638 = vtanh.pop %v1637
    %v1639 = vxor.u32 %v1637, 2147483648
    %v1640 = vmul.f32 %v1639, 1.442695
    %v1641 = vpow.pop %v1640
    %v1642 = vadd.f32 %v1641, 1.0
    %v1643 = vrcp.pop %v1642
    %v1644 = vmul.f32 1.0, %v1643
    %v1645 = vsel %vm347, %v1638, %v1644
    %v1646 = vmul.f32 %v1645, %v1548
    %1648 = vrot.lane.b32.xlu0 %v1645, 64
    %v1649 = vpop.permute.xlu0 %1648
    %v1651 = vmul.f32 %v1645, %v1649
    %1653 = vrot.lane.b32.xlu0 %v1651, 32
    %v1654 = vpop.permute.xlu0 %1653
    %v1656 = vadd.f32 %v1646, %v1654
    %v1657 = vtanh.pop %v1656
    %1659 = vrot.lane.b32.xlu0 %v1657, 64
    %v1660 = vpop.permute.xlu0 %1659
    %v1662 = vmul.f32 %v1645, %v1660
    %1664 = vrot.lane.b32.xlu0 %v1662, 32
    %v1665 = vpop.permute.xlu0 %1664
    %1667 = vst.msk [vmem:[#allocation3 + $0x6] sm:$0x3] %vm377, %v1665
    %v1668 = vld [vmem:[#allocation2 + $0x8] sm:$0x3]
    %v1669 = vld [vmem:[#allocation12] sm:$0xff]
    %v1670 = vld [vmem:[#allocation12 + $0x8] sm:$0xff]
    %v1671 = vld [vmem:[#allocation12 + $0x10] sm:$0xff]
    %v1672 = vld [vmem:[#allocation12 + $0x18] sm:$0xff]
    %v1673 = vsel %vm268, %v1665, 0
    %1675 = vmatprep.subr.mxu0 0.0
    %1676 = vmatpush1.msra.mxu0 %v1669
    %1677 = vmatprep.subr.mxu0 0.0
    %1678 = vmatpush1.msra.mxu0 %v1670
    %1679 = vmatprep.subr.mxu0 0.0
    %1680 = vmatpush1.msra.mxu0 %v1671
    %1681 = vmatprep.subr.mxu0 0.0
    %1682 = vmatpush1.msra.mxu0 %v1672
    %1683 = vmatprep.subr.mxu0 0.0
    %1684 = vmatpush1.msra.mxu0 0.0
    %1685 = vmatprep.subr.mxu0 0.0
    %1686 = vmatpush1.msra.mxu0 0.0
    %1687 = vmatprep.subr.mxu0 0.0
    %1688 = vmatpush1.msra.mxu0 0.0
    %1689 = vmatprep.subr.mxu0 0.0
    %1690 = vmatpush1.msra.mxu0 0.0
    %1691 = vmatprep.subr.mxu0 0.0
    %1692 = vmatpush1.msra.mxu0 0.0
    %1693 = vmatprep.subr.mxu0 0.0
    %1694 = vmatpush1.msra.mxu0 0.0
    %1695 = vmatprep.subr.mxu0 0.0
    %1696 = vmatpush1.msra.mxu0 0.0
    %1697 = vmatprep.subr.mxu0 0.0
    %1698 = vmatpush1.msra.mxu0 0.0
    %1699 = vmatprep.subr.mxu0 0.0
    %1700 = vmatpush1.msra.mxu0 0.0
    %1701 = vmatprep.subr.mxu0 0.0
    %1702 = vmatpush1.msra.mxu0 0.0
    %1703 = vmatprep.subr.mxu0 0.0
    %1704 = vmatpush1.msra.mxu0 0.0
    %1705 = vmatprep.subr.mxu0 0.0
    %1706 = vmatpush1.msra.mxu0 0.0
    %1707 = vmatprep.subr.mxu0 0.0
    %1708 = vmatpush1.msra.mxu0 0.0
    %1709 = vmatprep.subr.mxu0 0.0
    %1710 = vmatpush1.msra.mxu0 0.0
    %1711 = vmatprep.subr.mxu0 0.0
    %1712 = vmatpush1.msra.mxu0 0.0
    %1713 = vmatprep.subr.mxu0 0.0
    %1714 = vmatpush1.msra.mxu0 0.0
    %1715 = vmatprep.subr.mxu0 0.0
    %1716 = vmatpush1.msra.mxu0 0.0
    %1717 = vmatprep.subr.mxu0 0.0
    %1718 = vmatpush1.msra.mxu0 0.0
    %1719 = vmatprep.subr.mxu0 0.0
    %1720 = vmatpush1.msra.mxu0 0.0
    %1721 = vmatprep.subr.mxu0 0.0
    %1722 = vmatpush1.msra.mxu0 0.0
    %1723 = vmatprep.subr.mxu0 0.0
    %1724 = vmatpush1.msra.mxu0 0.0
    %1725 = vmatprep.subr.mxu0 0.0
    %1726 = vmatpush1.msra.mxu0 0.0
    %1727 = vmatprep.subr.mxu0 0.0
    %1728 = vmatpush1.msra.mxu0 0.0
    %1729 = vmatprep.subr.mxu0 0.0
    %1730 = vmatpush1.msra.mxu0 0.0
    %1731 = vmatprep.subr.mxu0 0.0
    %1732 = vmatpush1.msra.mxu0 0.0
    %1733 = vmatprep.subr.mxu0 0.0
    %1734 = vmatpush1.msra.mxu0 0.0
    %1735 = vmatprep.subr.mxu0 0.0
    %1736 = vmatpush1.msra.mxu0 0.0
    %1737 = vmatprep.subr.mxu0 0.0
    %1738 = vmatpush1.msra.mxu0 0.0
    %1739 = vmatprep.mubr.f32.mxu0 0.0
    %1740 = vmatmul.mubr.f32.gmra.mrb[0].mxu0 %v1673
    %v1741 = vpop.f32.mrb[0].mxu0
    %v1742 = vadd.f32 0.0, %v1741
    %v1743 = vpop.f32.mrb[0].mxu0
    %1744 = vdwg.mxu0
    %v1745 = vadd.f32 %v1668, %v1742
    %v1746 = vtanh.pop %v1745
    %v1747 = vxor.u32 %v1745, 2147483648
    %v1748 = vmul.f32 %v1747, 1.442695
    %v1749 = vpow.pop %v1748
    %v1750 = vadd.f32 %v1749, 1.0
    %v1751 = vrcp.pop %v1750
    %v1752 = vmul.f32 1.0, %v1751
    %v1753 = vsel %vm347, %v1746, %v1752
    %v1754 = vmul.f32 %v1753, %v1656
    %1756 = vrot.lane.b32.xlu0 %v1753, 64
    %v1757 = vpop.permute.xlu0 %1756
    %v1759 = vmul.f32 %v1753, %v1757
    %1761 = vrot.lane.b32.xlu0 %v1759, 32
    %v1762 = vpop.permute.xlu0 %1761
    %v1764 = vadd.f32 %v1754, %v1762
    %v1765 = vtanh.pop %v1764
    %1767 = vrot.lane.b32.xlu0 %v1765, 64
    %v1768 = vpop.permute.xlu0 %1767
    %v1770 = vmul.f32 %v1753, %v1768
    %1772 = vrot.lane.b32.xlu0 %v1770, 32
    %v1773 = vpop.permute.xlu0 %1772
    %1775 = vst.msk [vmem:[#allocation3 + $0x8] sm:$0x3] %vm377, %v1773
    %v1776 = vld [vmem:[#allocation2 + $0xa] sm:$0x3]
    %v1777 = vld [vmem:[#allocation12] sm:$0xff]
    %v1778 = vld [vmem:[#allocation12 + $0x8] sm:$0xff]
    %v1779 = vld [vmem:[#allocation12 + $0x10] sm:$0xff]
    %v1780 = vld [vmem:[#allocation12 + $0x18] sm:$0xff]
    %v1781 = vsel %vm268, %v1773, 0
    %1783 = vmatprep.subr.mxu0 0.0
    %1784 = vmatpush1.msra.mxu0 %v1777
    %1785 = vmatprep.subr.mxu0 0.0
    %1786 = vmatpush1.msra.mxu0 %v1778
    %1787 = vmatprep.subr.mxu0 0.0
    %1788 = vmatpush1.msra.mxu0 %v1779
    %1789 = vmatprep.subr.mxu0 0.0
    %1790 = vmatpush1.msra.mxu0 %v1780
    %1791 = vmatprep.subr.mxu0 0.0
    %1792 = vmatpush1.msra.mxu0 0.0
    %1793 = vmatprep.subr.mxu0 0.0
    %1794 = vmatpush1.msra.mxu0 0.0
    %1795 = vmatprep.subr.mxu0 0.0
    %1796 = vmatpush1.msra.mxu0 0.0
    %1797 = vmatprep.subr.mxu0 0.0
    %1798 = vmatpush1.msra.mxu0 0.0
    %1799 = vmatprep.subr.mxu0 0.0
    %1800 = vmatpush1.msra.mxu0 0.0
    %1801 = vmatprep.subr.mxu0 0.0
    %1802 = vmatpush1.msra.mxu0 0.0
    %1803 = vmatprep.subr.mxu0 0.0
    %1804 = vmatpush1.msra.mxu0 0.0
    %1805 = vmatprep.subr.mxu0 0.0
    %1806 = vmatpush1.msra.mxu0 0.0
    %1807 = vmatprep.subr.mxu0 0.0
    %1808 = vmatpush1.msra.mxu0 0.0
    %1809 = vmatprep.subr.mxu0 0.0
    %1810 = vmatpush1.msra.mxu0 0.0
    %1811 = vmatprep.subr.mxu0 0.0
    %1812 = vmatpush1.msra.mxu0 0.0
    %1813 = vmatprep.subr.mxu0 0.0
    %1814 = vmatpush1.msra.mxu0 0.0
    %1815 = vmatprep.subr.mxu0 0.0
    %1816 = vmatpush1.msra.mxu0 0.0
    %1817 = vmatprep.subr.mxu0 0.0
    %1818 = vmatpush1.msra.mxu0 0.0
    %1819 = vmatprep.subr.mxu0 0.0
    %1820 = vmatpush1.msra.mxu0 0.0
    %1821 = vmatprep.subr.mxu0 0.0
    %1822 = vmatpush1.msra.mxu0 0.0
    %1823 = vmatprep.subr.mxu0 0.0
    %1824 = vmatpush1.msra.mxu0 0.0
    %1825 = vmatprep.subr.mxu0 0.0
    %1826 = vmatpush1.msra.mxu0 0.0
    %1827 = vmatprep.subr.mxu0 0.0
    %1828 = vmatpush1.msra.mxu0 0.0
    %1829 = vmatprep.subr.mxu0 0.0
    %1830 = vmatpush1.msra.mxu0 0.0
    %1831 = vmatprep.subr.mxu0 0.0
    %1832 = vmatpush1.msra.mxu0 0.0
    %1833 = vmatprep.subr.mxu0 0.0
    %1834 = vmatpush1.msra.mxu0 0.0
    %1835 = vmatprep.subr.mxu0 0.0
    %1836 = vmatpush1.msra.mxu0 0.0
    %1837 = vmatprep.subr.mxu0 0.0
    %1838 = vmatpush1.msra.mxu0 0.0
    %1839 = vmatprep.subr.mxu0 0.0
    %1840 = vmatpush1.msra.mxu0 0.0
    %1841 = vmatprep.subr.mxu0 0.0
    %1842 = vmatpush1.msra.mxu0 0.0
    %1843 = vmatprep.subr.mxu0 0.0
    %1844 = vmatpush1.msra.mxu0 0.0
    %1845 = vmatprep.subr.mxu0 0.0
    %1846 = vmatpush1.msra.mxu0 0.0
    %1847 = vmatprep.mubr.f32.mxu0 0.0
    %1848 = vmatmul.mubr.f32.gmra.mrb[0].mxu0 %v1781
    %v1849 = vpop.f32.mrb[0].mxu0
    %v1850 = vadd.f32 0.0, %v1849
    %v1851 = vpop.f32.mrb[0].mxu0
    %1852 = vdwg.mxu0
    %v1853 = vadd.f32 %v1776, %v1850
    %v1854 = vtanh.pop %v1853
    %v1855 = vxor.u32 %v1853, 2147483648
    %v1856 = vmul.f32 %v1855, 1.442695
    %v1857 = vpow.pop %v1856
    %v1858 = vadd.f32 %v1857, 1.0
    %v1859 = vrcp.pop %v1858
    %v1860 = vmul.f32 1.0, %v1859
    %v1861 = vsel %vm347, %v1854, %v1860
    %v1862 = vmul.f32 %v1861, %v1764
    %1864 = vrot.lane.b32.xlu0 %v1861, 64
    %v1865 = vpop.permute.xlu0 %1864
    %v1867 = vmul.f32 %v1861, %v1865
    %1869 = vrot.lane.b32.xlu0 %v1867, 32
    %v1870 = vpop.permute.xlu0 %1869
    %v1872 = vadd.f32 %v1862, %v1870
    %v1873 = vtanh.pop %v1872
    %1875 = vrot.lane.b32.xlu0 %v1873, 64
    %v1876 = vpop.permute.xlu0 %1875
    %v1878 = vmul.f32 %v1861, %v1876
    %1880 = vrot.lane.b32.xlu0 %v1878, 32
    %v1881 = vpop.permute.xlu0 %1880
    %1883 = vst.msk [vmem:[#allocation3 + $0xa] sm:$0x3] %vm377, %v1881
    %v1884 = vld [vmem:[#allocation2 + $0xc] sm:$0x3]
    %v1885 = vld [vmem:[#allocation12] sm:$0xff]
    %v1886 = vld [vmem:[#allocation12 + $0x8] sm:$0xff]
    %v1887 = vld [vmem:[#allocation12 + $0x10] sm:$0xff]
    %v1888 = vld [vmem:[#allocation12 + $0x18] sm:$0xff]
    %v1889 = vsel %vm268, %v1881, 0
    %1891 = vmatprep.subr.mxu0 0.0
    %1892 = vmatpush1.msra.mxu0 %v1885
    %1893 = vmatprep.subr.mxu0 0.0
    %1894 = vmatpush1.msra.mxu0 %v1886
    %1895 = vmatprep.subr.mxu0 0.0
    %1896 = vmatpush1.msra.mxu0 %v1887
    %1897 = vmatprep.subr.mxu0 0.0
    %1898 = vmatpush1.msra.mxu0 %v1888
    %1899 = vmatprep.subr.mxu0 0.0
    %1900 = vmatpush1.msra.mxu0 0.0
    %1901 = vmatprep.subr.mxu0 0.0
    %1902 = vmatpush1.msra.mxu0 0.0
    %1903 = vmatprep.subr.mxu0 0.0
    %1904 = vmatpush1.msra.mxu0 0.0
    %1905 = vmatprep.subr.mxu0 0.0
    %1906 = vmatpush1.msra.mxu0 0.0
    %1907 = vmatprep.subr.mxu0 0.0
    %1908 = vmatpush1.msra.mxu0 0.0
    %1909 = vmatprep.subr.mxu0 0.0
    %1910 = vmatpush1.msra.mxu0 0.0
    %1911 = vmatprep.subr.mxu0 0.0
    %1912 = vmatpush1.msra.mxu0 0.0
    %1913 = vmatprep.subr.mxu0 0.0
    %1914 = vmatpush1.msra.mxu0 0.0
    %1915 = vmatprep.subr.mxu0 0.0
    %1916 = vmatpush1.msra.mxu0 0.0
    %1917 = vmatprep.subr.mxu0 0.0
    %1918 = vmatpush1.msra.mxu0 0.0
    %1919 = vmatprep.subr.mxu0 0.0
    %1920 = vmatpush1.msra.mxu0 0.0
    %1921 = vmatprep.subr.mxu0 0.0
    %1922 = vmatpush1.msra.mxu0 0.0
    %1923 = vmatprep.subr.mxu0 0.0
    %1924 = vmatpush1.msra.mxu0 0.0
    %1925 = vmatprep.subr.mxu0 0.0
    %1926 = vmatpush1.msra.mxu0 0.0
    %1927 = vmatprep.subr.mxu0 0.0
    %1928 = vmatpush1.msra.mxu0 0.0
    %1929 = vmatprep.subr.mxu0 0.0
    %1930 = vmatpush1.msra.mxu0 0.0
    %1931 = vmatprep.subr.mxu0 0.0
    %1932 = vmatpush1.msra.mxu0 0.0
    %1933 = vmatprep.subr.mxu0 0.0
    %1934 = vmatpush1.msra.mxu0 0.0
    %1935 = vmatprep.subr.mxu0 0.0
    %1936 = vmatpush1.msra.mxu0 0.0
    %1937 = vmatprep.subr.mxu0 0.0
    %1938 = vmatpush1.msra.mxu0 0.0
    %1939 = vmatprep.subr.mxu0 0.0
    %1940 = vmatpush1.msra.mxu0 0.0
    %1941 = vmatprep.subr.mxu0 0.0
    %1942 = vmatpush1.msra.mxu0 0.0
    %1943 = vmatprep.subr.mxu0 0.0
    %1944 = vmatpush1.msra.mxu0 0.0
    %1945 = vmatprep.subr.mxu0 0.0
    %1946 = vmatpush1.msra.mxu0 0.0
    %1947 = vmatprep.subr.mxu0 0.0
    %1948 = vmatpush1.msra.mxu0 0.0
    %1949 = vmatprep.subr.mxu0 0.0
    %1950 = vmatpush1.msra.mxu0 0.0
    %1951 = vmatprep.subr.mxu0 0.0
    %1952 = vmatpush1.msra.mxu0 0.0
    %1953 = vmatprep.subr.mxu0 0.0
    %1954 = vmatpush1.msra.mxu0 0.0
    %1955 = vmatprep.mubr.f32.mxu0 0.0
    %1956 = vmatmul.mubr.f32.gmra.mrb[0].mxu0 %v1889
    %v1957 = vpop.f32.mrb[0].mxu0
    %v1958 = vadd.f32 0.0, %v1957
    %v1959 = vpop.f32.mrb[0].mxu0
    %1960 = vdwg.mxu0
    %v1961 = vadd.f32 %v1884, %v1958
    %v1962 = vtanh.pop %v1961
    %v1963 = vxor.u32 %v1961, 2147483648
    %v1964 = vmul.f32 %v1963, 1.442695
    %v1965 = vpow.pop %v1964
    %v1966 = vadd.f32 %v1965, 1.0
    %v1967 = vrcp.pop %v1966
    %v1968 = vmul.f32 1.0, %v1967
    %v1969 = vsel %vm347, %v1962, %v1968
    %v1970 = vmul.f32 %v1969, %v1872
    %1972 = vrot.lane.b32.xlu0 %v1969, 64
    %v1973 = vpop.permute.xlu0 %1972
    %v1975 = vmul.f32 %v1969, %v1973
    %1977 = vrot.lane.b32.xlu0 %v1975, 32
    %v1978 = vpop.permute.xlu0 %1977
    %v1980 = vadd.f32 %v1970, %v1978
    %v1981 = vtanh.pop %v1980
    %1983 = vrot.lane.b32.xlu0 %v1981, 64
    %v1984 = vpop.permute.xlu0 %1983
    %v1986 = vmul.f32 %v1969, %v1984
    %1988 = vrot.lane.b32.xlu0 %v1986, 32
    %v1989 = vpop.permute.xlu0 %1988
    %1991 = vst.msk [vmem:[#allocation3 + $0xc] sm:$0x3] %vm377, %v1989
    %v1992 = vld [vmem:[#allocation2 + $0xe] sm:$0x3]
    %v1993 = vld [vmem:[#allocation12] sm:$0xff]
    %v1994 = vld [vmem:[#allocation12 + $0x8] sm:$0xff]
    %v1995 = vld [vmem:[#allocation12 + $0x10] sm:$0xff]
    %v1996 = vld [vmem:[#allocation12 + $0x18] sm:$0xff]
    %v1997 = vsel %vm268, %v1989, 0
    %1999 = vmatprep.subr.mxu0 0.0
    %2000 = vmatpush1.msra.mxu0 %v1993
    %2001 = vmatprep.subr.mxu0 0.0
    %2002 = vmatpush1.msra.mxu0 %v1994
    %2003 = vmatprep.subr.mxu0 0.0
    %2004 = vmatpush1.msra.mxu0 %v1995
    %2005 = vmatprep.subr.mxu0 0.0
    %2006 = vmatpush1.msra.mxu0 %v1996
    %2007 = vmatprep.subr.mxu0 0.0
    %2008 = vmatpush1.msra.mxu0 0.0
    %2009 = vmatprep.subr.mxu0 0.0
    %2010 = vmatpush1.msra.mxu0 0.0
    %2011 = vmatprep.subr.mxu0 0.0
    %2012 = vmatpush1.msra.mxu0 0.0
    %2013 = vmatprep.subr.mxu0 0.0
    %2014 = vmatpush1.msra.mxu0 0.0
    %2015 = vmatprep.subr.mxu0 0.0
    %2016 = vmatpush1.msra.mxu0 0.0
    %2017 = vmatprep.subr.mxu0 0.0
    %2018 = vmatpush1.msra.mxu0 0.0
    %2019 = vmatprep.subr.mxu0 0.0
    %2020 = vmatpush1.msra.mxu0 0.0
    %2021 = vmatprep.subr.mxu0 0.0
    %2022 = vmatpush1.msra.mxu0 0.0
    %2023 = vmatprep.subr.mxu0 0.0
    %2024 = vmatpush1.msra.mxu0 0.0
    %2025 = vmatprep.subr.mxu0 0.0
    %2026 = vmatpush1.msra.mxu0 0.0
    %2027 = vmatprep.subr.mxu0 0.0
    %2028 = vmatpush1.msra.mxu0 0.0
    %2029 = vmatprep.subr.mxu0 0.0
    %2030 = vmatpush1.msra.mxu0 0.0
    %2031 = vmatprep.subr.mxu0 0.0
    %2032 = vmatpush1.msra.mxu0 0.0
    %2033 = vmatprep.subr.mxu0 0.0
    %2034 = vmatpush1.msra.mxu0 0.0
    %2035 = vmatprep.subr.mxu0 0.0
    %2036 = vmatpush1.msra.mxu0 0.0
    %2037 = vmatprep.subr.mxu0 0.0
    %2038 = vmatpush1.msra.mxu0 0.0
    %2039 = vmatprep.subr.mxu0 0.0
    %2040 = vmatpush1.msra.mxu0 0.0
    %2041 = vmatprep.subr.mxu0 0.0
    %2042 = vmatpush1.msra.mxu0 0.0
    %2043 = vmatprep.subr.mxu0 0.0
    %2044 = vmatpush1.msra.mxu0 0.0
    %2045 = vmatprep.subr.mxu0 0.0
    %2046 = vmatpush1.msra.mxu0 0.0
    %2047 = vmatprep.subr.mxu0 0.0
    %2048 = vmatpush1.msra.mxu0 0.0
    %2049 = vmatprep.subr.mxu0 0.0
    %2050 = vmatpush1.msra.mxu0 0.0
    %2051 = vmatprep.subr.mxu0 0.0
    %2052 = vmatpush1.msra.mxu0 0.0
    %2053 = vmatprep.subr.mxu0 0.0
    %2054 = vmatpush1.msra.mxu0 0.0
    %2055 = vmatprep.subr.mxu0 0.0
    %2056 = vmatpush1.msra.mxu0 0.0
    %2057 = vmatprep.subr.mxu0 0.0
    %2058 = vmatpush1.msra.mxu0 0.0
    %2059 = vmatprep.subr.mxu0 0.0
    %2060 = vmatpush1.msra.mxu0 0.0
    %2061 = vmatprep.subr.mxu0 0.0
    %2062 = vmatpush1.msra.mxu0 0.0
    %2063 = vmatprep.mubr.f32.mxu0 0.0
    %2064 = vmatmul.mubr.f32.gmra.mrb[0].mxu0 %v1997
    %v2065 = vpop.f32.mrb[0].mxu0
    %v2066 = vadd.f32 0.0, %v2065
    %v2067 = vpop.f32.mrb[0].mxu0
    %2068 = vdwg.mxu0
    %v2069 = vadd.f32 %v1992, %v2066
    %v2070 = vtanh.pop %v2069
    %v2071 = vxor.u32 %v2069, 2147483648
    %v2072 = vmul.f32 %v2071, 1.442695
    %v2073 = vpow.pop %v2072
    %v2074 = vadd.f32 %v2073, 1.0
    %v2075 = vrcp.pop %v2074
    %v2076 = vmul.f32 1.0, %v2075
    %v2077 = vsel %vm347, %v2070, %v2076
    %v2078 = vmul.f32 %v2077, %v1980
    %2080 = vrot.lane.b32.xlu0 %v2077, 64
    %v2081 = vpop.permute.xlu0 %2080
    %v2083 = vmul.f32 %v2077, %v2081
    %2085 = vrot.lane.b32.xlu0 %v2083, 32
    %v2086 = vpop.permute.xlu0 %2085
    %v2088 = vadd.f32 %v2078, %v2086
    %v2089 = vtanh.pop %v2088
    %2091 = vrot.lane.b32.xlu0 %v2089, 64
    %v2092 = vpop.permute.xlu0 %2091
    %v2094 = vmul.f32 %v2077, %v2092
    %2096 = vrot.lane.b32.xlu0 %v2094, 32
    %v2097 = vpop.permute.xlu0 %2096
    %2099 = vst.msk [vmem:[#allocation3 + $0xe] sm:$0x3] %vm377, %v2097
    %v2100 = vld [vmem:[#allocation3] sm:$0xff]
    %v2101 = vld [vmem:[#allocation3 + $0x8] sm:$0xff]
    %v2102 = vld [vmem:[%s7] sm:$0xff]
    %v2103 = vld [vmem:[%s7 + $0x8] sm:$0xff]
    %v2104 = vld [vmem:[%s7 + $0x10] sm:$0xff]
    %v2105 = vld [vmem:[%s7 + $0x18] sm:$0xff]
    %v2106 = vld [vmem:[%s9] sm:$0x1]
    %v2108 = vlaneseq
    %v2109 = vshrl.u32 %v2108, 7
    %v2110 = vsub.s32 0, %v2109
    %v2111 = vrot.slane %v2106, %v2110
    %v2114 = vsel %vm268, %v2100, 0
    %v2117 = vsel %vm268, %v2101, 0
    %2119 = vmatprep.subr.mxu0 0.0
    %2120 = vmatpush1.msra.mxu0 %v2102
    %2121 = vmatprep.subr.mxu0 0.0
    %2122 = vmatpush1.msra.mxu0 %v2103
    %2123 = vmatprep.subr.mxu0 0.0
    %2124 = vmatpush1.msra.mxu0 %v2104
    %2125 = vmatprep.subr.mxu0 0.0
    %2126 = vmatpush1.msra.mxu0 %v2105
    %2127 = vmatprep.subr.mxu0 0.0
    %2128 = vmatpush1.msra.mxu0 0.0
    %2129 = vmatprep.subr.mxu0 0.0
    %2130 = vmatpush1.msra.mxu0 0.0
    %2131 = vmatprep.subr.mxu0 0.0
    %2132 = vmatpush1.msra.mxu0 0.0
    %2133 = vmatprep.subr.mxu0 0.0
    %2134 = vmatpush1.msra.mxu0 0.0
    %2135 = vmatprep.subr.mxu0 0.0
    %2136 = vmatpush1.msra.mxu0 0.0
    %2137 = vmatprep.subr.mxu0 0.0
    %2138 = vmatpush1.msra.mxu0 0.0
    %2139 = vmatprep.subr.mxu0 0.0
    %2140 = vmatpush1.msra.mxu0 0.0
    %2141 = vmatprep.subr.mxu0 0.0
    %2142 = vmatpush1.msra.mxu0 0.0
    %2143 = vmatprep.subr.mxu0 0.0
    %2144 = vmatpush1.msra.mxu0 0.0
    %2145 = vmatprep.subr.mxu0 0.0
    %2146 = vmatpush1.msra.mxu0 0.0
    %2147 = vmatprep.subr.mxu0 0.0
    %2148 = vmatpush1.msra.mxu0 0.0
    %2149 = vmatprep.subr.mxu0 0.0
    %2150 = vmatpush1.msra.mxu0 0.0
    %2151 = vmatprep.subr.mxu0 0.0
    %2152 = vmatpush1.msra.mxu0 0.0
    %2153 = vmatprep.subr.mxu0 0.0
    %2154 = vmatpush1.msra.mxu0 0.0
    %2155 = vmatprep.subr.mxu0 0.0
    %2156 = vmatpush1.msra.mxu0 0.0
    %2157 = vmatprep.subr.mxu0 0.0
    %2158 = vmatpush1.msra.mxu0 0.0
    %2159 = vmatprep.subr.mxu0 0.0
    %2160 = vmatpush1.msra.mxu0 0.0
    %2161 = vmatprep.subr.mxu0 0.0
    %2162 = vmatpush1.msra.mxu0 0.0
    %2163 = vmatprep.subr.mxu0 0.0
    %2164 = vmatpush1.msra.mxu0 0.0
    %2165 = vmatprep.subr.mxu0 0.0
    %2166 = vmatpush1.msra.mxu0 0.0
    %2167 = vmatprep.subr.mxu0 0.0
    %2168 = vmatpush1.msra.mxu0 0.0
    %2169 = vmatprep.subr.mxu0 0.0
    %2170 = vmatpush1.msra.mxu0 0.0
    %2171 = vmatprep.subr.mxu0 0.0
    %2172 = vmatpush1.msra.mxu0 0.0
    %2173 = vmatprep.subr.mxu0 0.0
    %2174 = vmatpush1.msra.mxu0 0.0
    %2175 = vmatprep.subr.mxu0 0.0
    %2176 = vmatpush1.msra.mxu0 0.0
    %2177 = vmatprep.subr.mxu0 0.0
    %2178 = vmatpush1.msra.mxu0 0.0
    %2179 = vmatprep.subr.mxu0 0.0
    %2180 = vmatpush1.msra.mxu0 0.0
    %2181 = vmatprep.subr.mxu0 0.0
    %2182 = vmatpush1.msra.mxu0 0.0
    %2183 = vmatprep.mubr.f32.mxu0 0.0
    %2184 = vmatmul.mubr.f32.gmra.mrb[0].mxu0 %v2114
    %v2185 = vpop.f32.mrb[0].mxu0
    %v2186 = vadd.f32 %v2111, %v2185
    %v2187 = vpop.f32.mrb[0].mxu0
    %2188 = vmatprep.mubr.f32.mxu0 0.0
    %2189 = vmatmul.mubr.f32.gmra.mrb[0].mxu0 %v2117
    %v2190 = vpop.f32.mrb[0].mxu0
    %v2191 = vadd.f32 %v2111, %v2190
    %v2192 = vpop.f32.mrb[0].mxu0
    %2193 = vdwg.mxu0
    %2194 = vst [vmem:[#allocation2] sm:$0xff] %v2186
    %2195 = vst [vmem:[#allocation2 + $0x8] sm:$0xff] %v2191
    %v2196 = vld [vmem:[#allocation2] sm:$0x3]
    %v2197 = vld [vmem:[#allocation13] sm:$0xff]
    %v2198 = vld [vmem:[#allocation13 + $0x8] sm:$0xff]
    %v2199 = vld [vmem:[#allocation13 + $0x10] sm:$0xff]
    %v2200 = vld [vmem:[#allocation13 + $0x18] sm:$0xff]
    %2201 = vmatprep.subr.mxu0 0.0
    %2202 = vmatpush1.msra.mxu0 %v2197
    %2203 = vmatprep.subr.mxu0 0.0
    %2204 = vmatpush1.msra.mxu0 %v2198
    %2205 = vmatprep.subr.mxu0 0.0
    %2206 = vmatpush1.msra.mxu0 %v2199
    %2207 = vmatprep.subr.mxu0 0.0
    %2208 = vmatpush1.msra.mxu0 %v2200
    %2209 = vmatprep.subr.mxu0 0.0
    %2210 = vmatpush1.msra.mxu0 0.0
    %2211 = vmatprep.subr.mxu0 0.0
    %2212 = vmatpush1.msra.mxu0 0.0
    %2213 = vmatprep.subr.mxu0 0.0
    %2214 = vmatpush1.msra.mxu0 0.0
    %2215 = vmatprep.subr.mxu0 0.0
    %2216 = vmatpush1.msra.mxu0 0.0
    %2217 = vmatprep.subr.mxu0 0.0
    %2218 = vmatpush1.msra.mxu0 0.0
    %2219 = vmatprep.subr.mxu0 0.0
    %2220 = vmatpush1.msra.mxu0 0.0
    %2221 = vmatprep.subr.mxu0 0.0
    %2222 = vmatpush1.msra.mxu0 0.0
    %2223 = vmatprep.subr.mxu0 0.0
    %2224 = vmatpush1.msra.mxu0 0.0
    %2225 = vmatprep.subr.mxu0 0.0
    %2226 = vmatpush1.msra.mxu0 0.0
    %2227 = vmatprep.subr.mxu0 0.0
    %2228 = vmatpush1.msra.mxu0 0.0
    %2229 = vmatprep.subr.mxu0 0.0
    %2230 = vmatpush1.msra.mxu0 0.0
    %2231 = vmatprep.subr.mxu0 0.0
    %2232 = vmatpush1.msra.mxu0 0.0
    %2233 = vmatprep.subr.mxu0 0.0
    %2234 = vmatpush1.msra.mxu0 0.0
    %2235 = vmatprep.subr.mxu0 0.0
    %2236 = vmatpush1.msra.mxu0 0.0
    %2237 = vmatprep.subr.mxu0 0.0
    %2238 = vmatpush1.msra.mxu0 0.0
    %2239 = vmatprep.subr.mxu0 0.0
    %2240 = vmatpush1.msra.mxu0 0.0
    %2241 = vmatprep.subr.mxu0 0.0
    %2242 = vmatpush1.msra.mxu0 0.0
    %2243 = vmatprep.subr.mxu0 0.0
    %2244 = vmatpush1.msra.mxu0 0.0
    %2245 = vmatprep.subr.mxu0 0.0
    %2246 = vmatpush1.msra.mxu0 0.0
    %2247 = vmatprep.subr.mxu0 0.0
    %2248 = vmatpush1.msra.mxu0 0.0
    %2249 = vmatprep.subr.mxu0 0.0
    %2250 = vmatpush1.msra.mxu0 0.0
    %2251 = vmatprep.subr.mxu0 0.0
    %2252 = vmatpush1.msra.mxu0 0.0
    %2253 = vmatprep.subr.mxu0 0.0
    %2254 = vmatpush1.msra.mxu0 0.0
    %2255 = vmatprep.subr.mxu0 0.0
    %2256 = vmatpush1.msra.mxu0 0.0
    %2257 = vmatprep.subr.mxu0 0.0
    %2258 = vmatpush1.msra.mxu0 0.0
    %2259 = vmatprep.subr.mxu0 0.0
    %2260 = vmatpush1.msra.mxu0 0.0
    %2261 = vmatprep.subr.mxu0 0.0
    %2262 = vmatpush1.msra.mxu0 0.0
    %2263 = vmatprep.subr.mxu0 0.0
    %2264 = vmatpush1.msra.mxu0 0.0
    %2265 = vmatprep.mubr.f32.mxu0 0.0
    %2266 = vmatmul.mubr.f32.gmra.mrb[0].mxu0 %v270
    %v2267 = vpop.f32.mrb[0].mxu0
    %v2268 = vadd.f32 0.0, %v2267
    %v2269 = vpop.f32.mrb[0].mxu0
    %2270 = vdwg.mxu0
    %v2271 = vadd.f32 %v2196, %v2268
    %v2272 = vtanh.pop %v2271
    %v2273 = vxor.u32 %v2271, 2147483648
    %v2274 = vmul.f32 %v2273, 1.442695
    %v2275 = vpow.pop %v2274
    %v2276 = vadd.f32 %v2275, 1.0
    %v2277 = vrcp.pop %v2276
    %v2278 = vmul.f32 1.0, %v2277
    %v2279 = vsel %vm347, %v2272, %v2278
    %v2280 = vmul.f32 %v2279, 0.0
    %2282 = vrot.lane.b32.xlu0 %v2279, 64
    %v2283 = vpop.permute.xlu0 %2282
    %v2285 = vmul.f32 %v2279, %v2283
    %2287 = vrot.lane.b32.xlu0 %v2285, 32
    %v2288 = vpop.permute.xlu0 %2287
    %v2290 = vadd.f32 %v2280, %v2288
    %v2291 = vtanh.pop %v2290
    %2293 = vrot.lane.b32.xlu0 %v2291, 64
    %v2294 = vpop.permute.xlu0 %2293
    %v2296 = vmul.f32 %v2279, %v2294
    %2298 = vrot.lane.b32.xlu0 %v2296, 32
    %v2299 = vpop.permute.xlu0 %2298
    %2301 = vst.msk [vmem:[#allocation3] sm:$0x3] %vm377, %v2299
    %v2302 = vld [vmem:[#allocation2 + $0x2] sm:$0x3]
    %v2303 = vld [vmem:[#allocation13] sm:$0xff]
    %v2304 = vld [vmem:[#allocation13 + $0x8] sm:$0xff]
    %v2305 = vld [vmem:[#allocation13 + $0x10] sm:$0xff]
    %v2306 = vld [vmem:[#allocation13 + $0x18] sm:$0xff]
    %v2307 = vsel %vm268, %v2299, 0
    %2309 = vmatprep.subr.mxu0 0.0
    %2310 = vmatpush1.msra.mxu0 %v2303
    %2311 = vmatprep.subr.mxu0 0.0
    %2312 = vmatpush1.msra.mxu0 %v2304
    %2313 = vmatprep.subr.mxu0 0.0
    %2314 = vmatpush1.msra.mxu0 %v2305
    %2315 = vmatprep.subr.mxu0 0.0
    %2316 = vmatpush1.msra.mxu0 %v2306
    %2317 = vmatprep.subr.mxu0 0.0
    %2318 = vmatpush1.msra.mxu0 0.0
    %2319 = vmatprep.subr.mxu0 0.0
    %2320 = vmatpush1.msra.mxu0 0.0
    %2321 = vmatprep.subr.mxu0 0.0
    %2322 = vmatpush1.msra.mxu0 0.0
    %2323 = vmatprep.subr.mxu0 0.0
    %2324 = vmatpush1.msra.mxu0 0.0
    %2325 = vmatprep.subr.mxu0 0.0
    %2326 = vmatpush1.msra.mxu0 0.0
    %2327 = vmatprep.subr.mxu0 0.0
    %2328 = vmatpush1.msra.mxu0 0.0
    %2329 = vmatprep.subr.mxu0 0.0
    %2330 = vmatpush1.msra.mxu0 0.0
    %2331 = vmatprep.subr.mxu0 0.0
    %2332 = vmatpush1.msra.mxu0 0.0
    %2333 = vmatprep.subr.mxu0 0.0
    %2334 = vmatpush1.msra.mxu0 0.0
    %2335 = vmatprep.subr.mxu0 0.0
    %2336 = vmatpush1.msra.mxu0 0.0
    %2337 = vmatprep.subr.mxu0 0.0
    %2338 = vmatpush1.msra.mxu0 0.0
    %2339 = vmatprep.subr.mxu0 0.0
    %2340 = vmatpush1.msra.mxu0 0.0
    %2341 = vmatprep.subr.mxu0 0.0
    %2342 = vmatpush1.msra.mxu0 0.0
    %2343 = vmatprep.subr.mxu0 0.0
    %2344 = vmatpush1.msra.mxu0 0.0
    %2345 = vmatprep.subr.mxu0 0.0
    %2346 = vmatpush1.msra.mxu0 0.0
    %2347 = vmatprep.subr.mxu0 0.0
    %2348 = vmatpush1.msra.mxu0 0.0
    %2349 = vmatprep.subr.mxu0 0.0
    %2350 = vmatpush1.msra.mxu0 0.0
    %2351 = vmatprep.subr.mxu0 0.0
    %2352 = vmatpush1.msra.mxu0 0.0
    %2353 = vmatprep.subr.mxu0 0.0
    %2354 = vmatpush1.msra.mxu0 0.0
    %2355 = vmatprep.subr.mxu0 0.0
    %2356 = vmatpush1.msra.mxu0 0.0
    %2357 = vmatprep.subr.mxu0 0.0
    %2358 = vmatpush1.msra.mxu0 0.0
    %2359 = vmatprep.subr.mxu0 0.0
    %2360 = vmatpush1.msra.mxu0 0.0
    %2361 = vmatprep.subr.mxu0 0.0
    %2362 = vmatpush1.msra.mxu0 0.0
    %2363 = vmatprep.subr.mxu0 0.0
    %2364 = vmatpush1.msra.mxu0 0.0
    %2365 = vmatprep.subr.mxu0 0.0
    %2366 = vmatpush1.msra.mxu0 0.0
    %2367 = vmatprep.subr.mxu0 0.0
    %2368 = vmatpush1.msra.mxu0 0.0
    %2369 = vmatprep.subr.mxu0 0.0
    %2370 = vmatpush1.msra.mxu0 0.0
    %2371 = vmatprep.subr.mxu0 0.0
    %2372 = vmatpush1.msra.mxu0 0.0
    %2373 = vmatprep.mubr.f32.mxu0 0.0
    %2374 = vmatmul.mubr.f32.gmra.mrb[0].mxu0 %v2307
    %v2375 = vpop.f32.mrb[0].mxu0
    %v2376 = vadd.f32 0.0, %v2375
    %v2377 = vpop.f32.mrb[0].mxu0
    %2378 = vdwg.mxu0
    %v2379 = vadd.f32 %v2302, %v2376
    %v2380 = vtanh.pop %v2379
    %v2381 = vxor.u32 %v2379, 2147483648
    %v2382 = vmul.f32 %v2381, 1.442695
    %v2383 = vpow.pop %v2382
    %v2384 = vadd.f32 %v2383, 1.0
    %v2385 = vrcp.pop %v2384
    %v2386 = vmul.f32 1.0, %v2385
    %v2387 = vsel %vm347, %v2380, %v2386
    %v2388 = vmul.f32 %v2387, %v2290
    %2390 = vrot.lane.b32.xlu0 %v2387, 64
    %v2391 = vpop.permute.xlu0 %2390
    %v2393 = vmul.f32 %v2387, %v2391
    %2395 = vrot.lane.b32.xlu0 %v2393, 32
    %v2396 = vpop.permute.xlu0 %2395
    %v2398 = vadd.f32 %v2388, %v2396
    %v2399 = vtanh.pop %v2398
    %2401 = vrot.lane.b32.xlu0 %v2399, 64
    %v2402 = vpop.permute.xlu0 %2401
    %v2404 = vmul.f32 %v2387, %v2402
    %2406 = vrot.lane.b32.xlu0 %v2404, 32
    %v2407 = vpop.permute.xlu0 %2406
    %2409 = vst.msk [vmem:[#allocation3 + $0x2] sm:$0x3] %vm377, %v2407
    %v2410 = vld [vmem:[#allocation2 + $0x4] sm:$0x3]
    %v2411 = vld [vmem:[#allocation13] sm:$0xff]
    %v2412 = vld [vmem:[#allocation13 + $0x8] sm:$0xff]
    %v2413 = vld [vmem:[#allocation13 + $0x10] sm:$0xff]
    %v2414 = vld [vmem:[#allocation13 + $0x18] sm:$0xff]
    %v2415 = vsel %vm268, %v2407, 0
    %2417 = vmatprep.subr.mxu0 0.0
    %2418 = vmatpush1.msra.mxu0 %v2411
    %2419 = vmatprep.subr.mxu0 0.0
    %2420 = vmatpush1.msra.mxu0 %v2412
    %2421 = vmatprep.subr.mxu0 0.0
    %2422 = vmatpush1.msra.mxu0 %v2413
    %2423 = vmatprep.subr.mxu0 0.0
    %2424 = vmatpush1.msra.mxu0 %v2414
    %2425 = vmatprep.subr.mxu0 0.0
    %2426 = vmatpush1.msra.mxu0 0.0
    %2427 = vmatprep.subr.mxu0 0.0
    %2428 = vmatpush1.msra.mxu0 0.0
    %2429 = vmatprep.subr.mxu0 0.0
    %2430 = vmatpush1.msra.mxu0 0.0
    %2431 = vmatprep.subr.mxu0 0.0
    %2432 = vmatpush1.msra.mxu0 0.0
    %2433 = vmatprep.subr.mxu0 0.0
    %2434 = vmatpush1.msra.mxu0 0.0
    %2435 = vmatprep.subr.mxu0 0.0
    %2436 = vmatpush1.msra.mxu0 0.0
    %2437 = vmatprep.subr.mxu0 0.0
    %2438 = vmatpush1.msra.mxu0 0.0
    %2439 = vmatprep.subr.mxu0 0.0
    %2440 = vmatpush1.msra.mxu0 0.0
    %2441 = vmatprep.subr.mxu0 0.0
    %2442 = vmatpush1.msra.mxu0 0.0
    %2443 = vmatprep.subr.mxu0 0.0
    %2444 = vmatpush1.msra.mxu0 0.0
    %2445 = vmatprep.subr.mxu0 0.0
    %2446 = vmatpush1.msra.mxu0 0.0
    %2447 = vmatprep.subr.mxu0 0.0
    %2448 = vmatpush1.msra.mxu0 0.0
    %2449 = vmatprep.subr.mxu0 0.0
    %2450 = vmatpush1.msra.mxu0 0.0
    %2451 = vmatprep.subr.mxu0 0.0
    %2452 = vmatpush1.msra.mxu0 0.0
    %2453 = vmatprep.subr.mxu0 0.0
    %2454 = vmatpush1.msra.mxu0 0.0
    %2455 = vmatprep.subr.mxu0 0.0
    %2456 = vmatpush1.msra.mxu0 0.0
    %2457 = vmatprep.subr.mxu0 0.0
    %2458 = vmatpush1.msra.mxu0 0.0
    %2459 = vmatprep.subr.mxu0 0.0
    %2460 = vmatpush1.msra.mxu0 0.0
    %2461 = vmatprep.subr.mxu0 0.0
    %2462 = vmatpush1.msra.mxu0 0.0
    %2463 = vmatprep.subr.mxu0 0.0
    %2464 = vmatpush1.msra.mxu0 0.0
    %2465 = vmatprep.subr.mxu0 0.0
    %2466 = vmatpush1.msra.mxu0 0.0
    %2467 = vmatprep.subr.mxu0 0.0
    %2468 = vmatpush1.msra.mxu0 0.0
    %2469 = vmatprep.subr.mxu0 0.0
    %2470 = vmatpush1.msra.mxu0 0.0
    %2471 = vmatprep.subr.mxu0 0.0
    %2472 = vmatpush1.msra.mxu0 0.0
    %2473 = vmatprep.subr.mxu0 0.0
    %2474 = vmatpush1.msra.mxu0 0.0
    %2475 = vmatprep.subr.mxu0 0.0
    %2476 = vmatpush1.msra.mxu0 0.0
    %2477 = vmatprep.subr.mxu0 0.0
    %2478 = vmatpush1.msra.mxu0 0.0
    %2479 = vmatprep.subr.mxu0 0.0
    %2480 = vmatpush1.msra.mxu0 0.0
    %2481 = vmatprep.mubr.f32.mxu0 0.0
    %2482 = vmatmul.mubr.f32.gmra.mrb[0].mxu0 %v2415
    %v2483 = vpop.f32.mrb[0].mxu0
    %v2484 = vadd.f32 0.0, %v2483
    %v2485 = vpop.f32.mrb[0].mxu0
    %2486 = vdwg.mxu0
    %v2487 = vadd.f32 %v2410, %v2484
    %v2488 = vtanh.pop %v2487
    %v2489 = vxor.u32 %v2487, 2147483648
    %v2490 = vmul.f32 %v2489, 1.442695
    %v2491 = vpow.pop %v2490
    %v2492 = vadd.f32 %v2491, 1.0
    %v2493 = vrcp.pop %v2492
    %v2494 = vmul.f32 1.0, %v2493
    %v2495 = vsel %vm347, %v2488, %v2494
    %v2496 = vmul.f32 %v2495, %v2398
    %2498 = vrot.lane.b32.xlu0 %v2495, 64
    %v2499 = vpop.permute.xlu0 %2498
    %v2501 = vmul.f32 %v2495, %v2499
    %2503 = vrot.lane.b32.xlu0 %v2501, 32
    %v2504 = vpop.permute.xlu0 %2503
    %v2506 = vadd.f32 %v2496, %v2504
    %v2507 = vtanh.pop %v2506
    %2509 = vrot.lane.b32.xlu0 %v2507, 64
    %v2510 = vpop.permute.xlu0 %2509
    %v2512 = vmul.f32 %v2495, %v2510
    %2514 = vrot.lane.b32.xlu0 %v2512, 32
    %v2515 = vpop.permute.xlu0 %2514
    %2517 = vst.msk [vmem:[#allocation3 + $0x4] sm:$0x3] %vm377, %v2515
    %v2518 = vld [vmem:[#allocation2 + $0x6] sm:$0x3]
    %v2519 = vld [vmem:[#allocation13] sm:$0xff]
    %v2520 = vld [vmem:[#allocation13 + $0x8] sm:$0xff]
    %v2521 = vld [vmem:[#allocation13 + $0x10] sm:$0xff]
    %v2522 = vld [vmem:[#allocation13 + $0x18] sm:$0xff]
    %v2523 = vsel %vm268, %v2515, 0
    %2525 = vmatprep.subr.mxu0 0.0
    %2526 = vmatpush1.msra.mxu0 %v2519
    %2527 = vmatprep.subr.mxu0 0.0
    %2528 = vmatpush1.msra.mxu0 %v2520
    %2529 = vmatprep.subr.mxu0 0.0
    %2530 = vmatpush1.msra.mxu0 %v2521
    %2531 = vmatprep.subr.mxu0 0.0
    %2532 = vmatpush1.msra.mxu0 %v2522
    %2533 = vmatprep.subr.mxu0 0.0
    %2534 = vmatpush1.msra.mxu0 0.0
    %2535 = vmatprep.subr.mxu0 0.0
    %2536 = vmatpush1.msra.mxu0 0.0
    %2537 = vmatprep.subr.mxu0 0.0
    %2538 = vmatpush1.msra.mxu0 0.0
    %2539 = vmatprep.subr.mxu0 0.0
    %2540 = vmatpush1.msra.mxu0 0.0
    %2541 = vmatprep.subr.mxu0 0.0
    %2542 = vmatpush1.msra.mxu0 0.0
    %2543 = vmatprep.subr.mxu0 0.0
    %2544 = vmatpush1.msra.mxu0 0.0
    %2545 = vmatprep.subr.mxu0 0.0
    %2546 = vmatpush1.msra.mxu0 0.0
    %2547 = vmatprep.subr.mxu0 0.0
    %2548 = vmatpush1.msra.mxu0 0.0
    %2549 = vmatprep.subr.mxu0 0.0
    %2550 = vmatpush1.msra.mxu0 0.0
    %2551 = vmatprep.subr.mxu0 0.0
    %2552 = vmatpush1.msra.mxu0 0.0
    %2553 = vmatprep.subr.mxu0 0.0
    %2554 = vmatpush1.msra.mxu0 0.0
    %2555 = vmatprep.subr.mxu0 0.0
    %2556 = vmatpush1.msra.mxu0 0.0
    %2557 = vmatprep.subr.mxu0 0.0
    %2558 = vmatpush1.msra.mxu0 0.0
    %2559 = vmatprep.subr.mxu0 0.0
    %2560 = vmatpush1.msra.mxu0 0.0
    %2561 = vmatprep.subr.mxu0 0.0
    %2562 = vmatpush1.msra.mxu0 0.0
    %2563 = vmatprep.subr.mxu0 0.0
    %2564 = vmatpush1.msra.mxu0 0.0
    %2565 = vmatprep.subr.mxu0 0.0
    %2566 = vmatpush1.msra.mxu0 0.0
    %2567 = vmatprep.subr.mxu0 0.0
    %2568 = vmatpush1.msra.mxu0 0.0
    %2569 = vmatprep.subr.mxu0 0.0
    %2570 = vmatpush1.msra.mxu0 0.0
    %2571 = vmatprep.subr.mxu0 0.0
    %2572 = vmatpush1.msra.mxu0 0.0
    %2573 = vmatprep.subr.mxu0 0.0
    %2574 = vmatpush1.msra.mxu0 0.0
    %2575 = vmatprep.subr.mxu0 0.0
    %2576 = vmatpush1.msra.mxu0 0.0
    %2577 = vmatprep.subr.mxu0 0.0
    %2578 = vmatpush1.msra.mxu0 0.0
    %2579 = vmatprep.subr.mxu0 0.0
    %2580 = vmatpush1.msra.mxu0 0.0
    %2581 = vmatprep.subr.mxu0 0.0
    %2582 = vmatpush1.msra.mxu0 0.0
    %2583 = vmatprep.subr.mxu0 0.0
    %2584 = vmatpush1.msra.mxu0 0.0
    %2585 = vmatprep.subr.mxu0 0.0
    %2586 = vmatpush1.msra.mxu0 0.0
    %2587 = vmatprep.subr.mxu0 0.0
    %2588 = vmatpush1.msra.mxu0 0.0
    %2589 = vmatprep.mubr.f32.mxu0 0.0
    %2590 = vmatmul.mubr.f32.gmra.mrb[0].mxu0 %v2523
    %v2591 = vpop.f32.mrb[0].mxu0
    %v2592 = vadd.f32 0.0, %v2591
    %v2593 = vpop.f32.mrb[0].mxu0
    %2594 = vdwg.mxu0
    %v2595 = vadd.f32 %v2518, %v2592
    %v2596 = vtanh.pop %v2595
    %v2597 = vxor.u32 %v2595, 2147483648
    %v2598 = vmul.f32 %v2597, 1.442695
    %v2599 = vpow.pop %v2598
    %v2600 = vadd.f32 %v2599, 1.0
    %v2601 = vrcp.pop %v2600
    %v2602 = vmul.f32 1.0, %v2601
    %v2603 = vsel %vm347, %v2596, %v2602
    %v2604 = vmul.f32 %v2603, %v2506
    %2606 = vrot.lane.b32.xlu0 %v2603, 64
    %v2607 = vpop.permute.xlu0 %2606
    %v2609 = vmul.f32 %v2603, %v2607
    %2611 = vrot.lane.b32.xlu0 %v2609, 32
    %v2612 = vpop.permute.xlu0 %2611
    %v2614 = vadd.f32 %v2604, %v2612
    %v2615 = vtanh.pop %v2614
    %2617 = vrot.lane.b32.xlu0 %v2615, 64
    %v2618 = vpop.permute.xlu0 %2617
    %v2620 = vmul.f32 %v2603, %v2618
    %2622 = vrot.lane.b32.xlu0 %v2620, 32
    %v2623 = vpop.permute.xlu0 %2622
    %2625 = vst.msk [vmem:[#allocation3 + $0x6] sm:$0x3] %vm377, %v2623
    %v2626 = vld [vmem:[#allocation2 + $0x8] sm:$0x3]
    %v2627 = vld [vmem:[#allocation13] sm:$0xff]
    %v2628 = vld [vmem:[#allocation13 + $0x8] sm:$0xff]
    %v2629 = vld [vmem:[#allocation13 + $0x10] sm:$0xff]
    %v2630 = vld [vmem:[#allocation13 + $0x18] sm:$0xff]
    %v2631 = vsel %vm268, %v2623, 0
    %2633 = vmatprep.subr.mxu0 0.0
    %2634 = vmatpush1.msra.mxu0 %v2627
    %2635 = vmatprep.subr.mxu0 0.0
    %2636 = vmatpush1.msra.mxu0 %v2628
    %2637 = vmatprep.subr.mxu0 0.0
    %2638 = vmatpush1.msra.mxu0 %v2629
    %2639 = vmatprep.subr.mxu0 0.0
    %2640 = vmatpush1.msra.mxu0 %v2630
    %2641 = vmatprep.subr.mxu0 0.0
    %2642 = vmatpush1.msra.mxu0 0.0
    %2643 = vmatprep.subr.mxu0 0.0
    %2644 = vmatpush1.msra.mxu0 0.0
    %2645 = vmatprep.subr.mxu0 0.0
    %2646 = vmatpush1.msra.mxu0 0.0
    %2647 = vmatprep.subr.mxu0 0.0
    %2648 = vmatpush1.msra.mxu0 0.0
    %2649 = vmatprep.subr.mxu0 0.0
    %2650 = vmatpush1.msra.mxu0 0.0
    %2651 = vmatprep.subr.mxu0 0.0
    %2652 = vmatpush1.msra.mxu0 0.0
    %2653 = vmatprep.subr.mxu0 0.0
    %2654 = vmatpush1.msra.mxu0 0.0
    %2655 = vmatprep.subr.mxu0 0.0
    %2656 = vmatpush1.msra.mxu0 0.0
    %2657 = vmatprep.subr.mxu0 0.0
    %2658 = vmatpush1.msra.mxu0 0.0
    %2659 = vmatprep.subr.mxu0 0.0
    %2660 = vmatpush1.msra.mxu0 0.0
    %2661 = vmatprep.subr.mxu0 0.0
    %2662 = vmatpush1.msra.mxu0 0.0
    %2663 = vmatprep.subr.mxu0 0.0
    %2664 = vmatpush1.msra.mxu0 0.0
    %2665 = vmatprep.subr.mxu0 0.0
    %2666 = vmatpush1.msra.mxu0 0.0
    %2667 = vmatprep.subr.mxu0 0.0
    %2668 = vmatpush1.msra.mxu0 0.0
    %2669 = vmatprep.subr.mxu0 0.0
    %2670 = vmatpush1.msra.mxu0 0.0
    %2671 = vmatprep.subr.mxu0 0.0
    %2672 = vmatpush1.msra.mxu0 0.0
    %2673 = vmatprep.subr.mxu0 0.0
    %2674 = vmatpush1.msra.mxu0 0.0
    %2675 = vmatprep.subr.mxu0 0.0
    %2676 = vmatpush1.msra.mxu0 0.0
    %2677 = vmatprep.subr.mxu0 0.0
    %2678 = vmatpush1.msra.mxu0 0.0
    %2679 = vmatprep.subr.mxu0 0.0
    %2680 = vmatpush1.msra.mxu0 0.0
    %2681 = vmatprep.subr.mxu0 0.0
    %2682 = vmatpush1.msra.mxu0 0.0
    %2683 = vmatprep.subr.mxu0 0.0
    %2684 = vmatpush1.msra.mxu0 0.0
    %2685 = vmatprep.subr.mxu0 0.0
    %2686 = vmatpush1.msra.mxu0 0.0
    %2687 = vmatprep.subr.mxu0 0.0
    %2688 = vmatpush1.msra.mxu0 0.0
    %2689 = vmatprep.subr.mxu0 0.0
    %2690 = vmatpush1.msra.mxu0 0.0
    %2691 = vmatprep.subr.mxu0 0.0
    %2692 = vmatpush1.msra.mxu0 0.0
    %2693 = vmatprep.subr.mxu0 0.0
    %2694 = vmatpush1.msra.mxu0 0.0
    %2695 = vmatprep.subr.mxu0 0.0
    %2696 = vmatpush1.msra.mxu0 0.0
    %2697 = vmatprep.mubr.f32.mxu0 0.0
    %2698 = vmatmul.mubr.f32.gmra.mrb[0].mxu0 %v2631
    %v2699 = vpop.f32.mrb[0].mxu0
    %v2700 = vadd.f32 0.0, %v2699
    %v2701 = vpop.f32.mrb[0].mxu0
    %2702 = vdwg.mxu0
    %v2703 = vadd.f32 %v2626, %v2700
    %v2704 = vtanh.pop %v2703
    %v2705 = vxor.u32 %v2703, 2147483648
    %v2706 = vmul.f32 %v2705, 1.442695
    %v2707 = vpow.pop %v2706
    %v2708 = vadd.f32 %v2707, 1.0
    %v2709 = vrcp.pop %v2708
    %v2710 = vmul.f32 1.0, %v2709
    %v2711 = vsel %vm347, %v2704, %v2710
    %v2712 = vmul.f32 %v2711, %v2614
    %2714 = vrot.lane.b32.xlu0 %v2711, 64
    %v2715 = vpop.permute.xlu0 %2714
    %v2717 = vmul.f32 %v2711, %v2715
    %2719 = vrot.lane.b32.xlu0 %v2717, 32
    %v2720 = vpop.permute.xlu0 %2719
    %v2722 = vadd.f32 %v2712, %v2720
    %v2723 = vtanh.pop %v2722
    %2725 = vrot.lane.b32.xlu0 %v2723, 64
    %v2726 = vpop.permute.xlu0 %2725
    %v2728 = vmul.f32 %v2711, %v2726
    %2730 = vrot.lane.b32.xlu0 %v2728, 32
    %v2731 = vpop.permute.xlu0 %2730
    %2733 = vst.msk [vmem:[#allocation3 + $0x8] sm:$0x3] %vm377, %v2731
    %v2734 = vld [vmem:[#allocation2 + $0xa] sm:$0x3]
    %v2735 = vld [vmem:[#allocation13] sm:$0xff]
    %v2736 = vld [vmem:[#allocation13 + $0x8] sm:$0xff]
    %v2737 = vld [vmem:[#allocation13 + $0x10] sm:$0xff]
    %v2738 = vld [vmem:[#allocation13 + $0x18] sm:$0xff]
    %v2739 = vsel %vm268, %v2731, 0
    %2741 = vmatprep.subr.mxu0 0.0
    %2742 = vmatpush1.msra.mxu0 %v2735
    %2743 = vmatprep.subr.mxu0 0.0
    %2744 = vmatpush1.msra.mxu0 %v2736
    %2745 = vmatprep.subr.mxu0 0.0
    %2746 = vmatpush1.msra.mxu0 %v2737
    %2747 = vmatprep.subr.mxu0 0.0
    %2748 = vmatpush1.msra.mxu0 %v2738
    %2749 = vmatprep.subr.mxu0 0.0
    %2750 = vmatpush1.msra.mxu0 0.0
    %2751 = vmatprep.subr.mxu0 0.0
    %2752 = vmatpush1.msra.mxu0 0.0
    %2753 = vmatprep.subr.mxu0 0.0
    %2754 = vmatpush1.msra.mxu0 0.0
    %2755 = vmatprep.subr.mxu0 0.0
    %2756 = vmatpush1.msra.mxu0 0.0
    %2757 = vmatprep.subr.mxu0 0.0
    %2758 = vmatpush1.msra.mxu0 0.0
    %2759 = vmatprep.subr.mxu0 0.0
    %2760 = vmatpush1.msra.mxu0 0.0
    %2761 = vmatprep.subr.mxu0 0.0
    %2762 = vmatpush1.msra.mxu0 0.0
    %2763 = vmatprep.subr.mxu0 0.0
    %2764 = vmatpush1.msra.mxu0 0.0
    %2765 = vmatprep.subr.mxu0 0.0
    %2766 = vmatpush1.msra.mxu0 0.0
    %2767 = vmatprep.subr.mxu0 0.0
    %2768 = vmatpush1.msra.mxu0 0.0
    %2769 = vmatprep.subr.mxu0 0.0
    %2770 = vmatpush1.msra.mxu0 0.0
    %2771 = vmatprep.subr.mxu0 0.0
    %2772 = vmatpush1.msra.mxu0 0.0
    %2773 = vmatprep.subr.mxu0 0.0
    %2774 = vmatpush1.msra.mxu0 0.0
    %2775 = vmatprep.subr.mxu0 0.0
    %2776 = vmatpush1.msra.mxu0 0.0
    %2777 = vmatprep.subr.mxu0 0.0
    %2778 = vmatpush1.msra.mxu0 0.0
    %2779 = vmatprep.subr.mxu0 0.0
    %2780 = vmatpush1.msra.mxu0 0.0
    %2781 = vmatprep.subr.mxu0 0.0
    %2782 = vmatpush1.msra.mxu0 0.0
    %2783 = vmatprep.subr.mxu0 0.0
    %2784 = vmatpush1.msra.mxu0 0.0
    %2785 = vmatprep.subr.mxu0 0.0
    %2786 = vmatpush1.msra.mxu0 0.0
    %2787 = vmatprep.subr.mxu0 0.0
    %2788 = vmatpush1.msra.mxu0 0.0
    %2789 = vmatprep.subr.mxu0 0.0
    %2790 = vmatpush1.msra.mxu0 0.0
    %2791 = vmatprep.subr.mxu0 0.0
    %2792 = vmatpush1.msra.mxu0 0.0
    %2793 = vmatprep.subr.mxu0 0.0
    %2794 = vmatpush1.msra.mxu0 0.0
    %2795 = vmatprep.subr.mxu0 0.0
    %2796 = vmatpush1.msra.mxu0 0.0
    %2797 = vmatprep.subr.mxu0 0.0
    %2798 = vmatpush1.msra.mxu0 0.0
    %2799 = vmatprep.subr.mxu0 0.0
    %2800 = vmatpush1.msra.mxu0 0.0
    %2801 = vmatprep.subr.mxu0 0.0
    %2802 = vmatpush1.msra.mxu0 0.0
    %2803 = vmatprep.subr.mxu0 0.0
    %2804 = vmatpush1.msra.mxu0 0.0
    %2805 = vmatprep.mubr.f32.mxu0 0.0
    %2806 = vmatmul.mubr.f32.gmra.mrb[0].mxu0 %v2739
    %v2807 = vpop.f32.mrb[0].mxu0
    %v2808 = vadd.f32 0.0, %v2807
    %v2809 = vpop.f32.mrb[0].mxu0
    %2810 = vdwg.mxu0
    %v2811 = vadd.f32 %v2734, %v2808
    %v2812 = vtanh.pop %v2811
    %v2813 = vxor.u32 %v2811, 2147483648
    %v2814 = vmul.f32 %v2813, 1.442695
    %v2815 = vpow.pop %v2814
    %v2816 = vadd.f32 %v2815, 1.0
    %v2817 = vrcp.pop %v2816
    %v2818 = vmul.f32 1.0, %v2817
    %v2819 = vsel %vm347, %v2812, %v2818
    %v2820 = vmul.f32 %v2819, %v2722
    %2822 = vrot.lane.b32.xlu0 %v2819, 64
    %v2823 = vpop.permute.xlu0 %2822
    %v2825 = vmul.f32 %v2819, %v2823
    %2827 = vrot.lane.b32.xlu0 %v2825, 32
    %v2828 = vpop.permute.xlu0 %2827
    %v2830 = vadd.f32 %v2820, %v2828
    %v2831 = vtanh.pop %v2830
    %2833 = vrot.lane.b32.xlu0 %v2831, 64
    %v2834 = vpop.permute.xlu0 %2833
    %v2836 = vmul.f32 %v2819, %v2834
    %2838 = vrot.lane.b32.xlu0 %v2836, 32
    %v2839 = vpop.permute.xlu0 %2838
    %2841 = vst.msk [vmem:[#allocation3 + $0xa] sm:$0x3] %vm377, %v2839
    %v2842 = vld [vmem:[#allocation2 + $0xc] sm:$0x3]
    %v2843 = vld [vmem:[#allocation13] sm:$0xff]
    %v2844 = vld [vmem:[#allocation13 + $0x8] sm:$0xff]
    %v2845 = vld [vmem:[#allocation13 + $0x10] sm:$0xff]
    %v2846 = vld [vmem:[#allocation13 + $0x18] sm:$0xff]
    %v2847 = vsel %vm268, %v2839, 0
    %2849 = vmatprep.subr.mxu0 0.0
    %2850 = vmatpush1.msra.mxu0 %v2843
    %2851 = vmatprep.subr.mxu0 0.0
    %2852 = vmatpush1.msra.mxu0 %v2844
    %2853 = vmatprep.subr.mxu0 0.0
    %2854 = vmatpush1.msra.mxu0 %v2845
    %2855 = vmatprep.subr.mxu0 0.0
    %2856 = vmatpush1.msra.mxu0 %v2846
    %2857 = vmatprep.subr.mxu0 0.0
    %2858 = vmatpush1.msra.mxu0 0.0
    %2859 = vmatprep.subr.mxu0 0.0
    %2860 = vmatpush1.msra.mxu0 0.0
    %2861 = vmatprep.subr.mxu0 0.0
    %2862 = vmatpush1.msra.mxu0 0.0
    %2863 = vmatprep.subr.mxu0 0.0
    %2864 = vmatpush1.msra.mxu0 0.0
    %2865 = vmatprep.subr.mxu0 0.0
    %2866 = vmatpush1.msra.mxu0 0.0
    %2867 = vmatprep.subr.mxu0 0.0
    %2868 = vmatpush1.msra.mxu0 0.0
    %2869 = vmatprep.subr.mxu0 0.0
    %2870 = vmatpush1.msra.mxu0 0.0
    %2871 = vmatprep.subr.mxu0 0.0
    %2872 = vmatpush1.msra.mxu0 0.0
    %2873 = vmatprep.subr.mxu0 0.0
    %2874 = vmatpush1.msra.mxu0 0.0
    %2875 = vmatprep.subr.mxu0 0.0
    %2876 = vmatpush1.msra.mxu0 0.0
    %2877 = vmatprep.subr.mxu0 0.0
    %2878 = vmatpush1.msra.mxu0 0.0
    %2879 = vmatprep.subr.mxu0 0.0
    %2880 = vmatpush1.msra.mxu0 0.0
    %2881 = vmatprep.subr.mxu0 0.0
    %2882 = vmatpush1.msra.mxu0 0.0
    %2883 = vmatprep.subr.mxu0 0.0
    %2884 = vmatpush1.msra.mxu0 0.0
    %2885 = vmatprep.subr.mxu0 0.0
    %2886 = vmatpush1.msra.mxu0 0.0
    %2887 = vmatprep.subr.mxu0 0.0
    %2888 = vmatpush1.msra.mxu0 0.0
    %2889 = vmatprep.subr.mxu0 0.0
    %2890 = vmatpush1.msra.mxu0 0.0
    %2891 = vmatprep.subr.mxu0 0.0
    %2892 = vmatpush1.msra.mxu0 0.0
    %2893 = vmatprep.subr.mxu0 0.0
    %2894 = vmatpush1.msra.mxu0 0.0
    %2895 = vmatprep.subr.mxu0 0.0
    %2896 = vmatpush1.msra.mxu0 0.0
    %2897 = vmatprep.subr.mxu0 0.0
    %2898 = vmatpush1.msra.mxu0 0.0
    %2899 = vmatprep.subr.mxu0 0.0
    %2900 = vmatpush1.msra.mxu0 0.0
    %2901 = vmatprep.subr.mxu0 0.0
    %2902 = vmatpush1.msra.mxu0 0.0
    %2903 = vmatprep.subr.mxu0 0.0
    %2904 = vmatpush1.msra.mxu0 0.0
    %2905 = vmatprep.subr.mxu0 0.0
    %2906 = vmatpush1.msra.mxu0 0.0
    %2907 = vmatprep.subr.mxu0 0.0
    %2908 = vmatpush1.msra.mxu0 0.0
    %2909 = vmatprep.subr.mxu0 0.0
    %2910 = vmatpush1.msra.mxu0 0.0
    %2911 = vmatprep.subr.mxu0 0.0
    %2912 = vmatpush1.msra.mxu0 0.0
    %2913 = vmatprep.mubr.f32.mxu0 0.0
    %2914 = vmatmul.mubr.f32.gmra.mrb[0].mxu0 %v2847
    %v2915 = vpop.f32.mrb[0].mxu0
    %v2916 = vadd.f32 0.0, %v2915
    %v2917 = vpop.f32.mrb[0].mxu0
    %2918 = vdwg.mxu0
    %v2919 = vadd.f32 %v2842, %v2916
    %v2920 = vtanh.pop %v2919
    %v2921 = vxor.u32 %v2919, 2147483648
    %v2922 = vmul.f32 %v2921, 1.442695
    %v2923 = vpow.pop %v2922
    %v2924 = vadd.f32 %v2923, 1.0
    %v2925 = vrcp.pop %v2924
    %v2926 = vmul.f32 1.0, %v2925
    %v2927 = vsel %vm347, %v2920, %v2926
    %v2928 = vmul.f32 %v2927, %v2830
    %2930 = vrot.lane.b32.xlu0 %v2927, 64
    %v2931 = vpop.permute.xlu0 %2930
    %v2933 = vmul.f32 %v2927, %v2931
    %2935 = vrot.lane.b32.xlu0 %v2933, 32
    %v2936 = vpop.permute.xlu0 %2935
    %v2938 = vadd.f32 %v2928, %v2936
    %v2939 = vtanh.pop %v2938
    %2941 = vrot.lane.b32.xlu0 %v2939, 64
    %v2942 = vpop.permute.xlu0 %2941
    %v2944 = vmul.f32 %v2927, %v2942
    %2946 = vrot.lane.b32.xlu0 %v2944, 32
    %v2947 = vpop.permute.xlu0 %2946
    %2949 = vst.msk [vmem:[#allocation3 + $0xc] sm:$0x3] %vm377, %v2947
    %v2950 = vld [vmem:[#allocation2 + $0xe] sm:$0x3]
    %v2951 = vld [vmem:[#allocation13] sm:$0xff]
    %v2952 = vld [vmem:[#allocation13 + $0x8] sm:$0xff]
    %v2953 = vld [vmem:[#allocation13 + $0x10] sm:$0xff]
    %v2954 = vld [vmem:[#allocation13 + $0x18] sm:$0xff]
    %v2955 = vsel %vm268, %v2947, 0
    %2957 = vmatprep.subr.mxu0 0.0
    %2958 = vmatpush1.msra.mxu0 %v2951
    %2959 = vmatprep.subr.mxu0 0.0
    %2960 = vmatpush1.msra.mxu0 %v2952
    %2961 = vmatprep.subr.mxu0 0.0
    %2962 = vmatpush1.msra.mxu0 %v2953
    %2963 = vmatprep.subr.mxu0 0.0
    %2964 = vmatpush1.msra.mxu0 %v2954
    %2965 = vmatprep.subr.mxu0 0.0
    %2966 = vmatpush1.msra.mxu0 0.0
    %2967 = vmatprep.subr.mxu0 0.0
    %2968 = vmatpush1.msra.mxu0 0.0
    %2969 = vmatprep.subr.mxu0 0.0
    %2970 = vmatpush1.msra.mxu0 0.0
    %2971 = vmatprep.subr.mxu0 0.0
    %2972 = vmatpush1.msra.mxu0 0.0
    %2973 = vmatprep.subr.mxu0 0.0
    %2974 = vmatpush1.msra.mxu0 0.0
    %2975 = vmatprep.subr.mxu0 0.0
    %2976 = vmatpush1.msra.mxu0 0.0
    %2977 = vmatprep.subr.mxu0 0.0
    %2978 = vmatpush1.msra.mxu0 0.0
    %2979 = vmatprep.subr.mxu0 0.0
    %2980 = vmatpush1.msra.mxu0 0.0
    %2981 = vmatprep.subr.mxu0 0.0
    %2982 = vmatpush1.msra.mxu0 0.0
    %2983 = vmatprep.subr.mxu0 0.0
    %2984 = vmatpush1.msra.mxu0 0.0
    %2985 = vmatprep.subr.mxu0 0.0
    %2986 = vmatpush1.msra.mxu0 0.0
    %2987 = vmatprep.subr.mxu0 0.0
    %2988 = vmatpush1.msra.mxu0 0.0
    %2989 = vmatprep.subr.mxu0 0.0
    %2990 = vmatpush1.msra.mxu0 0.0
    %2991 = vmatprep.subr.mxu0 0.0
    %2992 = vmatpush1.msra.mxu0 0.0
    %2993 = vmatprep.subr.mxu0 0.0
    %2994 = vmatpush1.msra.mxu0 0.0
    %2995 = vmatprep.subr.mxu0 0.0
    %2996 = vmatpush1.msra.mxu0 0.0
    %2997 = vmatprep.subr.mxu0 0.0
    %2998 = vmatpush1.msra.mxu0 0.0
    %2999 = vmatprep.subr.mxu0 0.0
    %3000 = vmatpush1.msra.mxu0 0.0
    %3001 = vmatprep.subr.mxu0 0.0
    %3002 = vmatpush1.msra.mxu0 0.0
    %3003 = vmatprep.subr.mxu0 0.0
    %3004 = vmatpush1.msra.mxu0 0.0
    %3005 = vmatprep.subr.mxu0 0.0
    %3006 = vmatpush1.msra.mxu0 0.0
    %3007 = vmatprep.subr.mxu0 0.0
    %3008 = vmatpush1.msra.mxu0 0.0
    %3009 = vmatprep.subr.mxu0 0.0
    %3010 = vmatpush1.msra.mxu0 0.0
    %3011 = vmatprep.subr.mxu0 0.0
    %3012 = vmatpush1.msra.mxu0 0.0
    %3013 = vmatprep.subr.mxu0 0.0
    %3014 = vmatpush1.msra.mxu0 0.0
    %3015 = vmatprep.subr.mxu0 0.0
    %3016 = vmatpush1.msra.mxu0 0.0
    %3017 = vmatprep.subr.mxu0 0.0
    %3018 = vmatpush1.msra.mxu0 0.0
    %3019 = vmatprep.subr.mxu0 0.0
    %3020 = vmatpush1.msra.mxu0 0.0
    %3021 = vmatprep.mubr.f32.mxu0 0.0
    %3022 = vmatmul.mubr.f32.gmra.mrb[0].mxu0 %v2955
    %v3023 = vpop.f32.mrb[0].mxu0
    %v3024 = vadd.f32 0.0, %v3023
    %v3025 = vpop.f32.mrb[0].mxu0
    %3026 = vdwg.mxu0
    %v3027 = vadd.f32 %v2950, %v3024
    %v3028 = vtanh.pop %v3027
    %v3029 = vxor.u32 %v3027, 2147483648
    %v3030 = vmul.f32 %v3029, 1.442695
    %v3031 = vpow.pop %v3030
    %v3032 = vadd.f32 %v3031, 1.0
    %v3033 = vrcp.pop %v3032
    %v3034 = vmul.f32 1.0, %v3033
    %v3035 = vsel %vm347, %v3028, %v3034
    %v3036 = vmul.f32 %v3035, %v2938
    %3038 = vrot.lane.b32.xlu0 %v3035, 64
    %v3039 = vpop.permute.xlu0 %3038
    %v3041 = vmul.f32 %v3035, %v3039
    %3043 = vrot.lane.b32.xlu0 %v3041, 32
    %v3044 = vpop.permute.xlu0 %3043
    %v3046 = vadd.f32 %v3036, %v3044
    %v3047 = vtanh.pop %v3046
    %3049 = vrot.lane.b32.xlu0 %v3047, 64
    %v3050 = vpop.permute.xlu0 %3049
    %v3052 = vmul.f32 %v3035, %v3050
    %3054 = vrot.lane.b32.xlu0 %v3052, 32
    %v3055 = vpop.permute.xlu0 %3054
    %3057 = vst.msk [vmem:[#allocation3 + $0xe] sm:$0x3] %vm377, %v3055
    %v3058 = vld [vmem:[#allocation3] sm:$0xff]
    %v3059 = vld [vmem:[#allocation3 + $0x8] sm:$0xff]
    %v3060 = vld [vmem:[#allocation15] sm:$0xff]
    %v3061 = vld [vmem:[#allocation15 + $0x8] sm:$0xff]
    %v3062 = vld [vmem:[#allocation15 + $0x10] sm:$0xff]
    %v3063 = vld [vmem:[#allocation15 + $0x18] sm:$0xff]
    %v3064 = vld [vmem:[%s12] sm:$0x1]
    %v3066 = vlaneseq
    %v3067 = vshrl.u32 %v3066, 7
    %v3068 = vsub.s32 0, %v3067
    %v3069 = vrot.slane %v3064, %v3068
    %v3072 = vsel %vm268, %v3058, 0
    %v3075 = vsel %vm268, %v3059, 0
    %3077 = vmatprep.subr.mxu0 0.0
    %3078 = vmatpush1.msra.mxu0 %v3060
    %3079 = vmatprep.subr.mxu0 0.0
    %3080 = vmatpush1.msra.mxu0 %v3061
    %3081 = vmatprep.subr.mxu0 0.0
    %3082 = vmatpush1.msra.mxu0 %v3062
    %3083 = vmatprep.subr.mxu0 0.0
    %3084 = vmatpush1.msra.mxu0 %v3063
    %3085 = vmatprep.subr.mxu0 0.0
    %3086 = vmatpush1.msra.mxu0 0.0
    %3087 = vmatprep.subr.mxu0 0.0
    %3088 = vmatpush1.msra.mxu0 0.0
    %3089 = vmatprep.subr.mxu0 0.0
    %3090 = vmatpush1.msra.mxu0 0.0
    %3091 = vmatprep.subr.mxu0 0.0
    %3092 = vmatpush1.msra.mxu0 0.0
    %3093 = vmatprep.subr.mxu0 0.0
    %3094 = vmatpush1.msra.mxu0 0.0
    %3095 = vmatprep.subr.mxu0 0.0
    %3096 = vmatpush1.msra.mxu0 0.0
    %3097 = vmatprep.subr.mxu0 0.0
    %3098 = vmatpush1.msra.mxu0 0.0
    %3099 = vmatprep.subr.mxu0 0.0
    %3100 = vmatpush1.msra.mxu0 0.0
    %3101 = vmatprep.subr.mxu0 0.0
    %3102 = vmatpush1.msra.mxu0 0.0
    %3103 = vmatprep.subr.mxu0 0.0
    %3104 = vmatpush1.msra.mxu0 0.0
    %3105 = vmatprep.subr.mxu0 0.0
    %3106 = vmatpush1.msra.mxu0 0.0
    %3107 = vmatprep.subr.mxu0 0.0
    %3108 = vmatpush1.msra.mxu0 0.0
    %3109 = vmatprep.subr.mxu0 0.0
    %3110 = vmatpush1.msra.mxu0 0.0
    %3111 = vmatprep.subr.mxu0 0.0
    %3112 = vmatpush1.msra.mxu0 0.0
    %3113 = vmatprep.subr.mxu0 0.0
    %3114 = vmatpush1.msra.mxu0 0.0
    %3115 = vmatprep.subr.mxu0 0.0
    %3116 = vmatpush1.msra.mxu0 0.0
    %3117 = vmatprep.subr.mxu0 0.0
    %3118 = vmatpush1.msra.mxu0 0.0
    %3119 = vmatprep.subr.mxu0 0.0
    %3120 = vmatpush1.msra.mxu0 0.0
    %3121 = vmatprep.subr.mxu0 0.0
    %3122 = vmatpush1.msra.mxu0 0.0
    %3123 = vmatprep.subr.mxu0 0.0
    %3124 = vmatpush1.msra.mxu0 0.0
    %3125 = vmatprep.subr.mxu0 0.0
    %3126 = vmatpush1.msra.mxu0 0.0
    %3127 = vmatprep.subr.mxu0 0.0
    %3128 = vmatpush1.msra.mxu0 0.0
    %3129 = vmatprep.subr.mxu0 0.0
    %3130 = vmatpush1.msra.mxu0 0.0
    %3131 = vmatprep.subr.mxu0 0.0
    %3132 = vmatpush1.msra.mxu0 0.0
    %3133 = vmatprep.subr.mxu0 0.0
    %3134 = vmatpush1.msra.mxu0 0.0
    %3135 = vmatprep.subr.mxu0 0.0
    %3136 = vmatpush1.msra.mxu0 0.0
    %3137 = vmatprep.subr.mxu0 0.0
    %3138 = vmatpush1.msra.mxu0 0.0
    %3139 = vmatprep.subr.mxu0 0.0
    %3140 = vmatpush1.msra.mxu0 0.0
    %3141 = vmatprep.mubr.f32.mxu0 0.0
    %3142 = vmatmul.mubr.f32.gmra.mrb[0].mxu0 %v3072
    %v3143 = vpop.f32.mrb[0].mxu0
    %v3144 = vadd.f32 %v3069, %v3143
    %v3145 = vpop.f32.mrb[0].mxu0
    %3146 = vmatprep.mubr.f32.mxu0 0.0
    %3147 = vmatmul.mubr.f32.gmra.mrb[0].mxu0 %v3075
    %v3148 = vpop.f32.mrb[0].mxu0
    %v3149 = vadd.f32 %v3069, %v3148
    %v3150 = vpop.f32.mrb[0].mxu0
    %3151 = vdwg.mxu0
    %3152 = vst [vmem:[#allocation2] sm:$0xff] %v3144
    %3153 = vst [vmem:[#allocation2 + $0x8] sm:$0xff] %v3149
    %v3154 = vld [vmem:[#allocation2] sm:$0x3]
    %v3155 = vld [vmem:[#allocation16] sm:$0xff]
    %v3156 = vld [vmem:[#allocation16 + $0x8] sm:$0xff]
    %v3157 = vld [vmem:[#allocation16 + $0x10] sm:$0xff]
    %v3158 = vld [vmem:[#allocation16 + $0x18] sm:$0xff]
    %3159 = vmatprep.subr.mxu0 0.0
    %3160 = vmatpush1.msra.mxu0 %v3155
    %3161 = vmatprep.subr.mxu0 0.0
    %3162 = vmatpush1.msra.mxu0 %v3156
    %3163 = vmatprep.subr.mxu0 0.0
    %3164 = vmatpush1.msra.mxu0 %v3157
    %3165 = vmatprep.subr.mxu0 0.0
    %3166 = vmatpush1.msra.mxu0 %v3158
    %3167 = vmatprep.subr.mxu0 0.0
    %3168 = vmatpush1.msra.mxu0 0.0
    %3169 = vmatprep.subr.mxu0 0.0
    %3170 = vmatpush1.msra.mxu0 0.0
    %3171 = vmatprep.subr.mxu0 0.0
    %3172 = vmatpush1.msra.mxu0 0.0
    %3173 = vmatprep.subr.mxu0 0.0
    %3174 = vmatpush1.msra.mxu0 0.0
    %3175 = vmatprep.subr.mxu0 0.0
    %3176 = vmatpush1.msra.mxu0 0.0
    %3177 = vmatprep.subr.mxu0 0.0
    %3178 = vmatpush1.msra.mxu0 0.0
    %3179 = vmatprep.subr.mxu0 0.0
    %3180 = vmatpush1.msra.mxu0 0.0
    %3181 = vmatprep.subr.mxu0 0.0
    %3182 = vmatpush1.msra.mxu0 0.0
    %3183 = vmatprep.subr.mxu0 0.0
    %3184 = vmatpush1.msra.mxu0 0.0
    %3185 = vmatprep.subr.mxu0 0.0
    %3186 = vmatpush1.msra.mxu0 0.0
    %3187 = vmatprep.subr.mxu0 0.0
    %3188 = vmatpush1.msra.mxu0 0.0
    %3189 = vmatprep.subr.mxu0 0.0
    %3190 = vmatpush1.msra.mxu0 0.0
    %3191 = vmatprep.subr.mxu0 0.0
    %3192 = vmatpush1.msra.mxu0 0.0
    %3193 = vmatprep.subr.mxu0 0.0
    %3194 = vmatpush1.msra.mxu0 0.0
    %3195 = vmatprep.subr.mxu0 0.0
    %3196 = vmatpush1.msra.mxu0 0.0
    %3197 = vmatprep.subr.mxu0 0.0
    %3198 = vmatpush1.msra.mxu0 0.0
    %3199 = vmatprep.subr.mxu0 0.0
    %3200 = vmatpush1.msra.mxu0 0.0
    %3201 = vmatprep.subr.mxu0 0.0
    %3202 = vmatpush1.msra.mxu0 0.0
    %3203 = vmatprep.subr.mxu0 0.0
    %3204 = vmatpush1.msra.mxu0 0.0
    %3205 = vmatprep.subr.mxu0 0.0
    %3206 = vmatpush1.msra.mxu0 0.0
    %3207 = vmatprep.subr.mxu0 0.0
    %3208 = vmatpush1.msra.mxu0 0.0
    %3209 = vmatprep.subr.mxu0 0.0
    %3210 = vmatpush1.msra.mxu0 0.0
    %3211 = vmatprep.subr.mxu0 0.0
    %3212 = vmatpush1.msra.mxu0 0.0
    %3213 = vmatprep.subr.mxu0 0.0
    %3214 = vmatpush1.msra.mxu0 0.0
    %3215 = vmatprep.subr.mxu0 0.0
    %3216 = vmatpush1.msra.mxu0 0.0
    %3217 = vmatprep.subr.mxu0 0.0
    %3218 = vmatpush1.msra.mxu0 0.0
    %3219 = vmatprep.subr.mxu0 0.0
    %3220 = vmatpush1.msra.mxu0 0.0
    %3221 = vmatprep.subr.mxu0 0.0
    %3222 = vmatpush1.msra.mxu0 0.0
    %3223 = vmatprep.mubr.f32.mxu0 0.0
    %3224 = vmatmul.mubr.f32.gmra.mrb[0].mxu0 %v270
    %v3225 = vpop.f32.mrb[0].mxu0
    %v3226 = vadd.f32 0.0, %v3225
    %v3227 = vpop.f32.mrb[0].mxu0
    %3228 = vdwg.mxu0
    %v3229 = vadd.f32 %v3154, %v3226
    %v3230 = vtanh.pop %v3229
    %v3231 = vxor.u32 %v3229, 2147483648
    %v3232 = vmul.f32 %v3231, 1.442695
    %v3233 = vpow.pop %v3232
    %v3234 = vadd.f32 %v3233, 1.0
    %v3235 = vrcp.pop %v3234
    %v3236 = vmul.f32 1.0, %v3235
    %v3237 = vsel %vm347, %v3230, %v3236
    %v3238 = vmul.f32 %v3237, 0.0
    %3240 = vrot.lane.b32.xlu0 %v3237, 64
    %v3241 = vpop.permute.xlu0 %3240
    %v3243 = vmul.f32 %v3237, %v3241
    %3245 = vrot.lane.b32.xlu0 %v3243, 32
    %v3246 = vpop.permute.xlu0 %3245
    %v3248 = vadd.f32 %v3238, %v3246
    %v3249 = vtanh.pop %v3248
    %3251 = vrot.lane.b32.xlu0 %v3249, 64
    %v3252 = vpop.permute.xlu0 %3251
    %v3254 = vmul.f32 %v3237, %v3252
    %v3255 = vld [vmem:[#allocation2 + $0x2] sm:$0x3]
    %3257 = vrot.lane.b32.xlu0 %v3254, 32
    %v3258 = vpop.permute.xlu0 %3257
    %v3259 = vsel %vm268, %v3258, 0
    %3261 = vmatprep.subr.mxu0 0.0
    %3262 = vmatpush1.msra.mxu0 %v3155
    %3263 = vmatprep.subr.mxu0 0.0
    %3264 = vmatpush1.msra.mxu0 %v3156
    %3265 = vmatprep.subr.mxu0 0.0
    %3266 = vmatpush1.msra.mxu0 %v3157
    %3267 = vmatprep.subr.mxu0 0.0
    %3268 = vmatpush1.msra.mxu0 %v3158
    %3269 = vmatprep.subr.mxu0 0.0
    %3270 = vmatpush1.msra.mxu0 0.0
    %3271 = vmatprep.subr.mxu0 0.0
    %3272 = vmatpush1.msra.mxu0 0.0
    %3273 = vmatprep.subr.mxu0 0.0
    %3274 = vmatpush1.msra.mxu0 0.0
    %3275 = vmatprep.subr.mxu0 0.0
    %3276 = vmatpush1.msra.mxu0 0.0
    %3277 = vmatprep.subr.mxu0 0.0
    %3278 = vmatpush1.msra.mxu0 0.0
    %3279 = vmatprep.subr.mxu0 0.0
    %3280 = vmatpush1.msra.mxu0 0.0
    %3281 = vmatprep.subr.mxu0 0.0
    %3282 = vmatpush1.msra.mxu0 0.0
    %3283 = vmatprep.subr.mxu0 0.0
    %3284 = vmatpush1.msra.mxu0 0.0
    %3285 = vmatprep.subr.mxu0 0.0
    %3286 = vmatpush1.msra.mxu0 0.0
    %3287 = vmatprep.subr.mxu0 0.0
    %3288 = vmatpush1.msra.mxu0 0.0
    %3289 = vmatprep.subr.mxu0 0.0
    %3290 = vmatpush1.msra.mxu0 0.0
    %3291 = vmatprep.subr.mxu0 0.0
    %3292 = vmatpush1.msra.mxu0 0.0
    %3293 = vmatprep.subr.mxu0 0.0
    %3294 = vmatpush1.msra.mxu0 0.0
    %3295 = vmatprep.subr.mxu0 0.0
    %3296 = vmatpush1.msra.mxu0 0.0
    %3297 = vmatprep.subr.mxu0 0.0
    %3298 = vmatpush1.msra.mxu0 0.0
    %3299 = vmatprep.subr.mxu0 0.0
    %3300 = vmatpush1.msra.mxu0 0.0
    %3301 = vmatprep.subr.mxu0 0.0
    %3302 = vmatpush1.msra.mxu0 0.0
    %3303 = vmatprep.subr.mxu0 0.0
    %3304 = vmatpush1.msra.mxu0 0.0
    %3305 = vmatprep.subr.mxu0 0.0
    %3306 = vmatpush1.msra.mxu0 0.0
    %3307 = vmatprep.subr.mxu0 0.0
    %3308 = vmatpush1.msra.mxu0 0.0
    %3309 = vmatprep.subr.mxu0 0.0
    %3310 = vmatpush1.msra.mxu0 0.0
    %3311 = vmatprep.subr.mxu0 0.0
    %3312 = vmatpush1.msra.mxu0 0.0
    %3313 = vmatprep.subr.mxu0 0.0
    %3314 = vmatpush1.msra.mxu0 0.0
    %3315 = vmatprep.subr.mxu0 0.0
    %3316 = vmatpush1.msra.mxu0 0.0
    %3317 = vmatprep.subr.mxu0 0.0
    %3318 = vmatpush1.msra.mxu0 0.0
    %3319 = vmatprep.subr.mxu0 0.0
    %3320 = vmatpush1.msra.mxu0 0.0
    %3321 = vmatprep.subr.mxu0 0.0
    %3322 = vmatpush1.msra.mxu0 0.0
    %3323 = vmatprep.subr.mxu0 0.0
    %3324 = vmatpush1.msra.mxu0 0.0
    %3325 = vmatprep.mubr.f32.mxu0 0.0
    %3326 = vmatmul.mubr.f32.gmra.mrb[0].mxu0 %v3259
    %v3327 = vpop.f32.mrb[0].mxu0
    %v3328 = vadd.f32 0.0, %v3327
    %v3329 = vpop.f32.mrb[0].mxu0
    %3330 = vdwg.mxu0
    %v3331 = vadd.f32 %v3255, %v3328
    %v3332 = vtanh.pop %v3331
    %v3333 = vxor.u32 %v3331, 2147483648
    %v3334 = vmul.f32 %v3333, 1.442695
    %v3335 = vpow.pop %v3334
    %v3336 = vadd.f32 %v3335, 1.0
    %v3337 = vrcp.pop %v3336
    %v3338 = vmul.f32 1.0, %v3337
    %v3339 = vsel %vm347, %v3332, %v3338
    %v3340 = vmul.f32 %v3339, %v3248
    %3342 = vrot.lane.b32.xlu0 %v3339, 64
    %v3343 = vpop.permute.xlu0 %3342
    %v3345 = vmul.f32 %v3339, %v3343
    %3347 = vrot.lane.b32.xlu0 %v3345, 32
    %v3348 = vpop.permute.xlu0 %3347
    %v3350 = vadd.f32 %v3340, %v3348
    %v3351 = vtanh.pop %v3350
    %3353 = vrot.lane.b32.xlu0 %v3351, 64
    %v3354 = vpop.permute.xlu0 %3353
    %v3356 = vmul.f32 %v3339, %v3354
    %v3357 = vld [vmem:[#allocation2 + $0x4] sm:$0x3]
    %3359 = vrot.lane.b32.xlu0 %v3356, 32
    %v3360 = vpop.permute.xlu0 %3359
    %v3361 = vsel %vm268, %v3360, 0
    %3363 = vmatprep.subr.mxu0 0.0
    %3364 = vmatpush1.msra.mxu0 %v3155
    %3365 = vmatprep.subr.mxu0 0.0
    %3366 = vmatpush1.msra.mxu0 %v3156
    %3367 = vmatprep.subr.mxu0 0.0
    %3368 = vmatpush1.msra.mxu0 %v3157
    %3369 = vmatprep.subr.mxu0 0.0
    %3370 = vmatpush1.msra.mxu0 %v3158
    %3371 = vmatprep.subr.mxu0 0.0
    %3372 = vmatpush1.msra.mxu0 0.0
    %3373 = vmatprep.subr.mxu0 0.0
    %3374 = vmatpush1.msra.mxu0 0.0
    %3375 = vmatprep.subr.mxu0 0.0
    %3376 = vmatpush1.msra.mxu0 0.0
    %3377 = vmatprep.subr.mxu0 0.0
    %3378 = vmatpush1.msra.mxu0 0.0
    %3379 = vmatprep.subr.mxu0 0.0
    %3380 = vmatpush1.msra.mxu0 0.0
    %3381 = vmatprep.subr.mxu0 0.0
    %3382 = vmatpush1.msra.mxu0 0.0
    %3383 = vmatprep.subr.mxu0 0.0
    %3384 = vmatpush1.msra.mxu0 0.0
    %3385 = vmatprep.subr.mxu0 0.0
    %3386 = vmatpush1.msra.mxu0 0.0
    %3387 = vmatprep.subr.mxu0 0.0
    %3388 = vmatpush1.msra.mxu0 0.0
    %3389 = vmatprep.subr.mxu0 0.0
    %3390 = vmatpush1.msra.mxu0 0.0
    %3391 = vmatprep.subr.mxu0 0.0
    %3392 = vmatpush1.msra.mxu0 0.0
    %3393 = vmatprep.subr.mxu0 0.0
    %3394 = vmatpush1.msra.mxu0 0.0
    %3395 = vmatprep.subr.mxu0 0.0
    %3396 = vmatpush1.msra.mxu0 0.0
    %3397 = vmatprep.subr.mxu0 0.0
    %3398 = vmatpush1.msra.mxu0 0.0
    %3399 = vmatprep.subr.mxu0 0.0
    %3400 = vmatpush1.msra.mxu0 0.0
    %3401 = vmatprep.subr.mxu0 0.0
    %3402 = vmatpush1.msra.mxu0 0.0
    %3403 = vmatprep.subr.mxu0 0.0
    %3404 = vmatpush1.msra.mxu0 0.0
    %3405 = vmatprep.subr.mxu0 0.0
    %3406 = vmatpush1.msra.mxu0 0.0
    %3407 = vmatprep.subr.mxu0 0.0
    %3408 = vmatpush1.msra.mxu0 0.0
    %3409 = vmatprep.subr.mxu0 0.0
    %3410 = vmatpush1.msra.mxu0 0.0
    %3411 = vmatprep.subr.mxu0 0.0
    %3412 = vmatpush1.msra.mxu0 0.0
    %3413 = vmatprep.subr.mxu0 0.0
    %3414 = vmatpush1.msra.mxu0 0.0
    %3415 = vmatprep.subr.mxu0 0.0
    %3416 = vmatpush1.msra.mxu0 0.0
    %3417 = vmatprep.subr.mxu0 0.0
    %3418 = vmatpush1.msra.mxu0 0.0
    %3419 = vmatprep.subr.mxu0 0.0
    %3420 = vmatpush1.msra.mxu0 0.0
    %3421 = vmatprep.subr.mxu0 0.0
    %3422 = vmatpush1.msra.mxu0 0.0
    %3423 = vmatprep.subr.mxu0 0.0
    %3424 = vmatpush1.msra.mxu0 0.0
    %3425 = vmatprep.subr.mxu0 0.0
    %3426 = vmatpush1.msra.mxu0 0.0
    %3427 = vmatprep.mubr.f32.mxu0 0.0
    %3428 = vmatmul.mubr.f32.gmra.mrb[0].mxu0 %v3361
    %v3429 = vpop.f32.mrb[0].mxu0
    %v3430 = vadd.f32 0.0, %v3429
    %v3431 = vpop.f32.mrb[0].mxu0
    %3432 = vdwg.mxu0
    %v3433 = vadd.f32 %v3357, %v3430
    %v3434 = vtanh.pop %v3433
    %v3435 = vxor.u32 %v3433, 2147483648
    %v3436 = vmul.f32 %v3435, 1.442695
    %v3437 = vpow.pop %v3436
    %v3438 = vadd.f32 %v3437, 1.0
    %v3439 = vrcp.pop %v3438
    %v3440 = vmul.f32 1.0, %v3439
    %v3441 = vsel %vm347, %v3434, %v3440
    %v3442 = vmul.f32 %v3441, %v3350
    %3444 = vrot.lane.b32.xlu0 %v3441, 64
    %v3445 = vpop.permute.xlu0 %3444
    %v3447 = vmul.f32 %v3441, %v3445
    %3449 = vrot.lane.b32.xlu0 %v3447, 32
    %v3450 = vpop.permute.xlu0 %3449
    %v3452 = vadd.f32 %v3442, %v3450
    %v3453 = vtanh.pop %v3452
    %3455 = vrot.lane.b32.xlu0 %v3453, 64
    %v3456 = vpop.permute.xlu0 %3455
    %v3458 = vmul.f32 %v3441, %v3456
    %v3459 = vld [vmem:[#allocation2 + $0x6] sm:$0x3]
    %3461 = vrot.lane.b32.xlu0 %v3458, 32
    %v3462 = vpop.permute.xlu0 %3461
    %v3463 = vsel %vm268, %v3462, 0
    %3465 = vmatprep.subr.mxu0 0.0
    %3466 = vmatpush1.msra.mxu0 %v3155
    %3467 = vmatprep.subr.mxu0 0.0
    %3468 = vmatpush1.msra.mxu0 %v3156
    %3469 = vmatprep.subr.mxu0 0.0
    %3470 = vmatpush1.msra.mxu0 %v3157
    %3471 = vmatprep.subr.mxu0 0.0
    %3472 = vmatpush1.msra.mxu0 %v3158
    %3473 = vmatprep.subr.mxu0 0.0
    %3474 = vmatpush1.msra.mxu0 0.0
    %3475 = vmatprep.subr.mxu0 0.0
    %3476 = vmatpush1.msra.mxu0 0.0
    %3477 = vmatprep.subr.mxu0 0.0
    %3478 = vmatpush1.msra.mxu0 0.0
    %3479 = vmatprep.subr.mxu0 0.0
    %3480 = vmatpush1.msra.mxu0 0.0
    %3481 = vmatprep.subr.mxu0 0.0
    %3482 = vmatpush1.msra.mxu0 0.0
    %3483 = vmatprep.subr.mxu0 0.0
    %3484 = vmatpush1.msra.mxu0 0.0
    %3485 = vmatprep.subr.mxu0 0.0
    %3486 = vmatpush1.msra.mxu0 0.0
    %3487 = vmatprep.subr.mxu0 0.0
    %3488 = vmatpush1.msra.mxu0 0.0
    %3489 = vmatprep.subr.mxu0 0.0
    %3490 = vmatpush1.msra.mxu0 0.0
    %3491 = vmatprep.subr.mxu0 0.0
    %3492 = vmatpush1.msra.mxu0 0.0
    %3493 = vmatprep.subr.mxu0 0.0
    %3494 = vmatpush1.msra.mxu0 0.0
    %3495 = vmatprep.subr.mxu0 0.0
    %3496 = vmatpush1.msra.mxu0 0.0
    %3497 = vmatprep.subr.mxu0 0.0
    %3498 = vmatpush1.msra.mxu0 0.0
    %3499 = vmatprep.subr.mxu0 0.0
    %3500 = vmatpush1.msra.mxu0 0.0
    %3501 = vmatprep.subr.mxu0 0.0
    %3502 = vmatpush1.msra.mxu0 0.0
    %3503 = vmatprep.subr.mxu0 0.0
    %3504 = vmatpush1.msra.mxu0 0.0
    %3505 = vmatprep.subr.mxu0 0.0
    %3506 = vmatpush1.msra.mxu0 0.0
    %3507 = vmatprep.subr.mxu0 0.0
    %3508 = vmatpush1.msra.mxu0 0.0
    %3509 = vmatprep.subr.mxu0 0.0
    %3510 = vmatpush1.msra.mxu0 0.0
    %3511 = vmatprep.subr.mxu0 0.0
    %3512 = vmatpush1.msra.mxu0 0.0
    %3513 = vmatprep.subr.mxu0 0.0
    %3514 = vmatpush1.msra.mxu0 0.0
    %3515 = vmatprep.subr.mxu0 0.0
    %3516 = vmatpush1.msra.mxu0 0.0
    %3517 = vmatprep.subr.mxu0 0.0
    %3518 = vmatpush1.msra.mxu0 0.0
    %3519 = vmatprep.subr.mxu0 0.0
    %3520 = vmatpush1.msra.mxu0 0.0
    %3521 = vmatprep.subr.mxu0 0.0
    %3522 = vmatpush1.msra.mxu0 0.0
    %3523 = vmatprep.subr.mxu0 0.0
    %3524 = vmatpush1.msra.mxu0 0.0
    %3525 = vmatprep.subr.mxu0 0.0
    %3526 = vmatpush1.msra.mxu0 0.0
    %3527 = vmatprep.subr.mxu0 0.0
    %3528 = vmatpush1.msra.mxu0 0.0
    %3529 = vmatprep.mubr.f32.mxu0 0.0
    %3530 = vmatmul.mubr.f32.gmra.mrb[0].mxu0 %v3463
    %v3531 = vpop.f32.mrb[0].mxu0
    %v3532 = vadd.f32 0.0, %v3531
    %v3533 = vpop.f32.mrb[0].mxu0
    %3534 = vdwg.mxu0
    %v3535 = vadd.f32 %v3459, %v3532
    %v3536 = vtanh.pop %v3535
    %v3537 = vxor.u32 %v3535, 2147483648
    %v3538 = vmul.f32 %v3537, 1.442695
    %v3539 = vpow.pop %v3538
    %v3540 = vadd.f32 %v3539, 1.0
    %v3541 = vrcp.pop %v3540
    %v3542 = vmul.f32 1.0, %v3541
    %v3543 = vsel %vm347, %v3536, %v3542
    %v3544 = vmul.f32 %v3543, %v3452
    %3546 = vrot.lane.b32.xlu0 %v3543, 64
    %v3547 = vpop.permute.xlu0 %3546
    %v3549 = vmul.f32 %v3543, %v3547
    %3551 = vrot.lane.b32.xlu0 %v3549, 32
    %v3552 = vpop.permute.xlu0 %3551
    %v3554 = vadd.f32 %v3544, %v3552
    %v3555 = vtanh.pop %v3554
    %3557 = vrot.lane.b32.xlu0 %v3555, 64
    %v3558 = vpop.permute.xlu0 %3557
    %v3560 = vmul.f32 %v3543, %v3558
    %v3561 = vld [vmem:[#allocation2 + $0x8] sm:$0x3]
    %3563 = vrot.lane.b32.xlu0 %v3560, 32
    %v3564 = vpop.permute.xlu0 %3563
    %v3565 = vsel %vm268, %v3564, 0
    %3567 = vmatprep.subr.mxu0 0.0
    %3568 = vmatpush1.msra.mxu0 %v3155
    %3569 = vmatprep.subr.mxu0 0.0
    %3570 = vmatpush1.msra.mxu0 %v3156
    %3571 = vmatprep.subr.mxu0 0.0
    %3572 = vmatpush1.msra.mxu0 %v3157
    %3573 = vmatprep.subr.mxu0 0.0
    %3574 = vmatpush1.msra.mxu0 %v3158
    %3575 = vmatprep.subr.mxu0 0.0
    %3576 = vmatpush1.msra.mxu0 0.0
    %3577 = vmatprep.subr.mxu0 0.0
    %3578 = vmatpush1.msra.mxu0 0.0
    %3579 = vmatprep.subr.mxu0 0.0
    %3580 = vmatpush1.msra.mxu0 0.0
    %3581 = vmatprep.subr.mxu0 0.0
    %3582 = vmatpush1.msra.mxu0 0.0
    %3583 = vmatprep.subr.mxu0 0.0
    %3584 = vmatpush1.msra.mxu0 0.0
    %3585 = vmatprep.subr.mxu0 0.0
    %3586 = vmatpush1.msra.mxu0 0.0
    %3587 = vmatprep.subr.mxu0 0.0
    %3588 = vmatpush1.msra.mxu0 0.0
    %3589 = vmatprep.subr.mxu0 0.0
    %3590 = vmatpush1.msra.mxu0 0.0
    %3591 = vmatprep.subr.mxu0 0.0
    %3592 = vmatpush1.msra.mxu0 0.0
    %3593 = vmatprep.subr.mxu0 0.0
    %3594 = vmatpush1.msra.mxu0 0.0
    %3595 = vmatprep.subr.mxu0 0.0
    %3596 = vmatpush1.msra.mxu0 0.0
    %3597 = vmatprep.subr.mxu0 0.0
    %3598 = vmatpush1.msra.mxu0 0.0
    %3599 = vmatprep.subr.mxu0 0.0
    %3600 = vmatpush1.msra.mxu0 0.0
    %3601 = vmatprep.subr.mxu0 0.0
    %3602 = vmatpush1.msra.mxu0 0.0
    %3603 = vmatprep.subr.mxu0 0.0
    %3604 = vmatpush1.msra.mxu0 0.0
    %3605 = vmatprep.subr.mxu0 0.0
    %3606 = vmatpush1.msra.mxu0 0.0
    %3607 = vmatprep.subr.mxu0 0.0
    %3608 = vmatpush1.msra.mxu0 0.0
    %3609 = vmatprep.subr.mxu0 0.0
    %3610 = vmatpush1.msra.mxu0 0.0
    %3611 = vmatprep.subr.mxu0 0.0
    %3612 = vmatpush1.msra.mxu0 0.0
    %3613 = vmatprep.subr.mxu0 0.0
    %3614 = vmatpush1.msra.mxu0 0.0
    %3615 = vmatprep.subr.mxu0 0.0
    %3616 = vmatpush1.msra.mxu0 0.0
    %3617 = vmatprep.subr.mxu0 0.0
    %3618 = vmatpush1.msra.mxu0 0.0
    %3619 = vmatprep.subr.mxu0 0.0
    %3620 = vmatpush1.msra.mxu0 0.0
    %3621 = vmatprep.subr.mxu0 0.0
    %3622 = vmatpush1.msra.mxu0 0.0
    %3623 = vmatprep.subr.mxu0 0.0
    %3624 = vmatpush1.msra.mxu0 0.0
    %3625 = vmatprep.subr.mxu0 0.0
    %3626 = vmatpush1.msra.mxu0 0.0
    %3627 = vmatprep.subr.mxu0 0.0
    %3628 = vmatpush1.msra.mxu0 0.0
    %3629 = vmatprep.subr.mxu0 0.0
    %3630 = vmatpush1.msra.mxu0 0.0
    %3631 = vmatprep.mubr.f32.mxu0 0.0
    %3632 = vmatmul.mubr.f32.gmra.mrb[0].mxu0 %v3565
    %v3633 = vpop.f32.mrb[0].mxu0
    %v3634 = vadd.f32 0.0, %v3633
    %v3635 = vpop.f32.mrb[0].mxu0
    %3636 = vdwg.mxu0
    %v3637 = vadd.f32 %v3561, %v3634
    %v3638 = vtanh.pop %v3637
    %v3639 = vxor.u32 %v3637, 2147483648
    %v3640 = vmul.f32 %v3639, 1.442695
    %v3641 = vpow.pop %v3640
    %v3642 = vadd.f32 %v3641, 1.0
    %v3643 = vrcp.pop %v3642
    %v3644 = vmul.f32 1.0, %v3643
    %v3645 = vsel %vm347, %v3638, %v3644
    %v3646 = vmul.f32 %v3645, %v3554
    %3648 = vrot.lane.b32.xlu0 %v3645, 64
    %v3649 = vpop.permute.xlu0 %3648
    %v3651 = vmul.f32 %v3645, %v3649
    %3653 = vrot.lane.b32.xlu0 %v3651, 32
    %v3654 = vpop.permute.xlu0 %3653
    %v3656 = vadd.f32 %v3646, %v3654
    %v3657 = vtanh.pop %v3656
    %3659 = vrot.lane.b32.xlu0 %v3657, 64
    %v3660 = vpop.permute.xlu0 %3659
    %v3662 = vmul.f32 %v3645, %v3660
    %v3663 = vld [vmem:[#allocation2 + $0xa] sm:$0x3]
    %3665 = vrot.lane.b32.xlu0 %v3662, 32
    %v3666 = vpop.permute.xlu0 %3665
    %v3667 = vsel %vm268, %v3666, 0
    %3669 = vmatprep.subr.mxu0 0.0
    %3670 = vmatpush1.msra.mxu0 %v3155
    %3671 = vmatprep.subr.mxu0 0.0
    %3672 = vmatpush1.msra.mxu0 %v3156
    %3673 = vmatprep.subr.mxu0 0.0
    %3674 = vmatpush1.msra.mxu0 %v3157
    %3675 = vmatprep.subr.mxu0 0.0
    %3676 = vmatpush1.msra.mxu0 %v3158
    %3677 = vmatprep.subr.mxu0 0.0
    %3678 = vmatpush1.msra.mxu0 0.0
    %3679 = vmatprep.subr.mxu0 0.0
    %3680 = vmatpush1.msra.mxu0 0.0
    %3681 = vmatprep.subr.mxu0 0.0
    %3682 = vmatpush1.msra.mxu0 0.0
    %3683 = vmatprep.subr.mxu0 0.0
    %3684 = vmatpush1.msra.mxu0 0.0
    %3685 = vmatprep.subr.mxu0 0.0
    %3686 = vmatpush1.msra.mxu0 0.0
    %3687 = vmatprep.subr.mxu0 0.0
    %3688 = vmatpush1.msra.mxu0 0.0
    %3689 = vmatprep.subr.mxu0 0.0
    %3690 = vmatpush1.msra.mxu0 0.0
    %3691 = vmatprep.subr.mxu0 0.0
    %3692 = vmatpush1.msra.mxu0 0.0
    %3693 = vmatprep.subr.mxu0 0.0
    %3694 = vmatpush1.msra.mxu0 0.0
    %3695 = vmatprep.subr.mxu0 0.0
    %3696 = vmatpush1.msra.mxu0 0.0
    %3697 = vmatprep.subr.mxu0 0.0
    %3698 = vmatpush1.msra.mxu0 0.0
    %3699 = vmatprep.subr.mxu0 0.0
    %3700 = vmatpush1.msra.mxu0 0.0
    %3701 = vmatprep.subr.mxu0 0.0
    %3702 = vmatpush1.msra.mxu0 0.0
    %3703 = vmatprep.subr.mxu0 0.0
    %3704 = vmatpush1.msra.mxu0 0.0
    %3705 = vmatprep.subr.mxu0 0.0
    %3706 = vmatpush1.msra.mxu0 0.0
    %3707 = vmatprep.subr.mxu0 0.0
    %3708 = vmatpush1.msra.mxu0 0.0
    %3709 = vmatprep.subr.mxu0 0.0
    %3710 = vmatpush1.msra.mxu0 0.0
    %3711 = vmatprep.subr.mxu0 0.0
    %3712 = vmatpush1.msra.mxu0 0.0
    %3713 = vmatprep.subr.mxu0 0.0
    %3714 = vmatpush1.msra.mxu0 0.0
    %3715 = vmatprep.subr.mxu0 0.0
    %3716 = vmatpush1.msra.mxu0 0.0
    %3717 = vmatprep.subr.mxu0 0.0
    %3718 = vmatpush1.msra.mxu0 0.0
    %3719 = vmatprep.subr.mxu0 0.0
    %3720 = vmatpush1.msra.mxu0 0.0
    %3721 = vmatprep.subr.mxu0 0.0
    %3722 = vmatpush1.msra.mxu0 0.0
    %3723 = vmatprep.subr.mxu0 0.0
    %3724 = vmatpush1.msra.mxu0 0.0
    %3725 = vmatprep.subr.mxu0 0.0
    %3726 = vmatpush1.msra.mxu0 0.0
    %3727 = vmatprep.subr.mxu0 0.0
    %3728 = vmatpush1.msra.mxu0 0.0
    %3729 = vmatprep.subr.mxu0 0.0
    %3730 = vmatpush1.msra.mxu0 0.0
    %3731 = vmatprep.subr.mxu0 0.0
    %3732 = vmatpush1.msra.mxu0 0.0
    %3733 = vmatprep.mubr.f32.mxu0 0.0
    %3734 = vmatmul.mubr.f32.gmra.mrb[0].mxu0 %v3667
    %v3735 = vpop.f32.mrb[0].mxu0
    %v3736 = vadd.f32 0.0, %v3735
    %v3737 = vpop.f32.mrb[0].mxu0
    %3738 = vdwg.mxu0
    %v3739 = vadd.f32 %v3663, %v3736
    %v3740 = vtanh.pop %v3739
    %v3741 = vxor.u32 %v3739, 2147483648
    %v3742 = vmul.f32 %v3741, 1.442695
    %v3743 = vpow.pop %v3742
    %v3744 = vadd.f32 %v3743, 1.0
    %v3745 = vrcp.pop %v3744
    %v3746 = vmul.f32 1.0, %v3745
    %v3747 = vsel %vm347, %v3740, %v3746
    %v3748 = vmul.f32 %v3747, %v3656
    %3750 = vrot.lane.b32.xlu0 %v3747, 64
    %v3751 = vpop.permute.xlu0 %3750
    %v3753 = vmul.f32 %v3747, %v3751
    %3755 = vrot.lane.b32.xlu0 %v3753, 32
    %v3756 = vpop.permute.xlu0 %3755
    %v3758 = vadd.f32 %v3748, %v3756
    %v3759 = vtanh.pop %v3758
    %3761 = vrot.lane.b32.xlu0 %v3759, 64
    %v3762 = vpop.permute.xlu0 %3761
    %v3764 = vmul.f32 %v3747, %v3762
    %v3765 = vld [vmem:[#allocation2 + $0xc] sm:$0x3]
    %3767 = vrot.lane.b32.xlu0 %v3764, 32
    %v3768 = vpop.permute.xlu0 %3767
    %v3769 = vsel %vm268, %v3768, 0
    %3771 = vmatprep.subr.mxu0 0.0
    %3772 = vmatpush1.msra.mxu0 %v3155
    %3773 = vmatprep.subr.mxu0 0.0
    %3774 = vmatpush1.msra.mxu0 %v3156
    %3775 = vmatprep.subr.mxu0 0.0
    %3776 = vmatpush1.msra.mxu0 %v3157
    %3777 = vmatprep.subr.mxu0 0.0
    %3778 = vmatpush1.msra.mxu0 %v3158
    %3779 = vmatprep.subr.mxu0 0.0
    %3780 = vmatpush1.msra.mxu0 0.0
    %3781 = vmatprep.subr.mxu0 0.0
    %3782 = vmatpush1.msra.mxu0 0.0
    %3783 = vmatprep.subr.mxu0 0.0
    %3784 = vmatpush1.msra.mxu0 0.0
    %3785 = vmatprep.subr.mxu0 0.0
    %3786 = vmatpush1.msra.mxu0 0.0
    %3787 = vmatprep.subr.mxu0 0.0
    %3788 = vmatpush1.msra.mxu0 0.0
    %3789 = vmatprep.subr.mxu0 0.0
    %3790 = vmatpush1.msra.mxu0 0.0
    %3791 = vmatprep.subr.mxu0 0.0
    %3792 = vmatpush1.msra.mxu0 0.0
    %3793 = vmatprep.subr.mxu0 0.0
    %3794 = vmatpush1.msra.mxu0 0.0
    %3795 = vmatprep.subr.mxu0 0.0
    %3796 = vmatpush1.msra.mxu0 0.0
    %3797 = vmatprep.subr.mxu0 0.0
    %3798 = vmatpush1.msra.mxu0 0.0
    %3799 = vmatprep.subr.mxu0 0.0
    %3800 = vmatpush1.msra.mxu0 0.0
    %3801 = vmatprep.subr.mxu0 0.0
    %3802 = vmatpush1.msra.mxu0 0.0
    %3803 = vmatprep.subr.mxu0 0.0
    %3804 = vmatpush1.msra.mxu0 0.0
    %3805 = vmatprep.subr.mxu0 0.0
    %3806 = vmatpush1.msra.mxu0 0.0
    %3807 = vmatprep.subr.mxu0 0.0
    %3808 = vmatpush1.msra.mxu0 0.0
    %3809 = vmatprep.subr.mxu0 0.0
    %3810 = vmatpush1.msra.mxu0 0.0
    %3811 = vmatprep.subr.mxu0 0.0
    %3812 = vmatpush1.msra.mxu0 0.0
    %3813 = vmatprep.subr.mxu0 0.0
    %3814 = vmatpush1.msra.mxu0 0.0
    %3815 = vmatprep.subr.mxu0 0.0
    %3816 = vmatpush1.msra.mxu0 0.0
    %3817 = vmatprep.subr.mxu0 0.0
    %3818 = vmatpush1.msra.mxu0 0.0
    %3819 = vmatprep.subr.mxu0 0.0
    %3820 = vmatpush1.msra.mxu0 0.0
    %3821 = vmatprep.subr.mxu0 0.0
    %3822 = vmatpush1.msra.mxu0 0.0
    %3823 = vmatprep.subr.mxu0 0.0
    %3824 = vmatpush1.msra.mxu0 0.0
    %3825 = vmatprep.subr.mxu0 0.0
    %3826 = vmatpush1.msra.mxu0 0.0
    %3827 = vmatprep.subr.mxu0 0.0
    %3828 = vmatpush1.msra.mxu0 0.0
    %3829 = vmatprep.subr.mxu0 0.0
    %3830 = vmatpush1.msra.mxu0 0.0
    %3831 = vmatprep.subr.mxu0 0.0
    %3832 = vmatpush1.msra.mxu0 0.0
    %3833 = vmatprep.subr.mxu0 0.0
    %3834 = vmatpush1.msra.mxu0 0.0
    %3835 = vmatprep.mubr.f32.mxu0 0.0
    %3836 = vmatmul.mubr.f32.gmra.mrb[0].mxu0 %v3769
    %v3837 = vpop.f32.mrb[0].mxu0
    %v3838 = vadd.f32 0.0, %v3837
    %v3839 = vpop.f32.mrb[0].mxu0
    %3840 = vdwg.mxu0
    %v3841 = vadd.f32 %v3765, %v3838
    %v3842 = vtanh.pop %v3841
    %v3843 = vxor.u32 %v3841, 2147483648
    %v3844 = vmul.f32 %v3843, 1.442695
    %v3845 = vpow.pop %v3844
    %v3846 = vadd.f32 %v3845, 1.0
    %v3847 = vrcp.pop %v3846
    %v3848 = vmul.f32 1.0, %v3847
    %v3849 = vsel %vm347, %v3842, %v3848
    %v3850 = vmul.f32 %v3849, %v3758
    %3852 = vrot.lane.b32.xlu0 %v3849, 64
    %v3853 = vpop.permute.xlu0 %3852
    %v3855 = vmul.f32 %v3849, %v3853
    %3857 = vrot.lane.b32.xlu0 %v3855, 32
    %v3858 = vpop.permute.xlu0 %3857
    %v3860 = vadd.f32 %v3850, %v3858
    %v3861 = vtanh.pop %v3860
    %3863 = vrot.lane.b32.xlu0 %v3861, 64
    %v3864 = vpop.permute.xlu0 %3863
    %v3866 = vmul.f32 %v3849, %v3864
    %v3867 = vld [vmem:[#allocation2 + $0xe] sm:$0x3]
    %3869 = vrot.lane.b32.xlu0 %v3866, 32
    %v3870 = vpop.permute.xlu0 %3869
    %v3871 = vsel %vm268, %v3870, 0
    %3873 = vmatprep.subr.mxu0 0.0
    %3874 = vmatpush1.msra.mxu0 %v3155
    %3875 = vmatprep.subr.mxu0 0.0
    %3876 = vmatpush1.msra.mxu0 %v3156
    %3877 = vmatprep.subr.mxu0 0.0
    %3878 = vmatpush1.msra.mxu0 %v3157
    %3879 = vmatprep.subr.mxu0 0.0
    %3880 = vmatpush1.msra.mxu0 %v3158
    %3881 = vmatprep.subr.mxu0 0.0
    %3882 = vmatpush1.msra.mxu0 0.0
    %3883 = vmatprep.subr.mxu0 0.0
    %3884 = vmatpush1.msra.mxu0 0.0
    %3885 = vmatprep.subr.mxu0 0.0
    %3886 = vmatpush1.msra.mxu0 0.0
    %3887 = vmatprep.subr.mxu0 0.0
    %3888 = vmatpush1.msra.mxu0 0.0
    %3889 = vmatprep.subr.mxu0 0.0
    %3890 = vmatpush1.msra.mxu0 0.0
    %3891 = vmatprep.subr.mxu0 0.0
    %3892 = vmatpush1.msra.mxu0 0.0
    %3893 = vmatprep.subr.mxu0 0.0
    %3894 = vmatpush1.msra.mxu0 0.0
    %3895 = vmatprep.subr.mxu0 0.0
    %3896 = vmatpush1.msra.mxu0 0.0
    %3897 = vmatprep.subr.mxu0 0.0
    %3898 = vmatpush1.msra.mxu0 0.0
    %3899 = vmatprep.subr.mxu0 0.0
    %3900 = vmatpush1.msra.mxu0 0.0
    %3901 = vmatprep.subr.mxu0 0.0
    %3902 = vmatpush1.msra.mxu0 0.0
    %3903 = vmatprep.subr.mxu0 0.0
    %3904 = vmatpush1.msra.mxu0 0.0
    %3905 = vmatprep.subr.mxu0 0.0
    %3906 = vmatpush1.msra.mxu0 0.0
    %3907 = vmatprep.subr.mxu0 0.0
    %3908 = vmatpush1.msra.mxu0 0.0
    %3909 = vmatprep.subr.mxu0 0.0
    %3910 = vmatpush1.msra.mxu0 0.0
    %3911 = vmatprep.subr.mxu0 0.0
    %3912 = vmatpush1.msra.mxu0 0.0
    %3913 = vmatprep.subr.mxu0 0.0
    %3914 = vmatpush1.msra.mxu0 0.0
    %3915 = vmatprep.subr.mxu0 0.0
    %3916 = vmatpush1.msra.mxu0 0.0
    %3917 = vmatprep.subr.mxu0 0.0
    %3918 = vmatpush1.msra.mxu0 0.0
    %3919 = vmatprep.subr.mxu0 0.0
    %3920 = vmatpush1.msra.mxu0 0.0
    %3921 = vmatprep.subr.mxu0 0.0
    %3922 = vmatpush1.msra.mxu0 0.0
    %3923 = vmatprep.subr.mxu0 0.0
    %3924 = vmatpush1.msra.mxu0 0.0
    %3925 = vmatprep.subr.mxu0 0.0
    %3926 = vmatpush1.msra.mxu0 0.0
    %3927 = vmatprep.subr.mxu0 0.0
    %3928 = vmatpush1.msra.mxu0 0.0
    %3929 = vmatprep.subr.mxu0 0.0
    %3930 = vmatpush1.msra.mxu0 0.0
    %3931 = vmatprep.subr.mxu0 0.0
    %3932 = vmatpush1.msra.mxu0 0.0
    %3933 = vmatprep.subr.mxu0 0.0
    %3934 = vmatpush1.msra.mxu0 0.0
    %3935 = vmatprep.subr.mxu0 0.0
    %3936 = vmatpush1.msra.mxu0 0.0
    %3937 = vmatprep.mubr.f32.mxu0 0.0
    %3938 = vmatmul.mubr.f32.gmra.mrb[0].mxu0 %v3871
    %v3939 = vpop.f32.mrb[0].mxu0
    %v3940 = vadd.f32 0.0, %v3939
    %v3941 = vpop.f32.mrb[0].mxu0
    %3942 = vdwg.mxu0
    %v3943 = vadd.f32 %v3867, %v3940
    %v3944 = vtanh.pop %v3943
    %v3945 = vxor.u32 %v3943, 2147483648
    %v3946 = vmul.f32 %v3945, 1.442695
    %v3947 = vpow.pop %v3946
    %v3948 = vadd.f32 %v3947, 1.0
    %v3949 = vrcp.pop %v3948
    %v3950 = vmul.f32 1.0, %v3949
    %v3951 = vsel %vm347, %v3944, %v3950
    %v3952 = vmul.f32 %v3951, %v3860
    %3954 = vrot.lane.b32.xlu0 %v3951, 64
    %v3955 = vpop.permute.xlu0 %3954
    %v3957 = vmul.f32 %v3951, %v3955
    %3959 = vrot.lane.b32.xlu0 %v3957, 32
    %v3960 = vpop.permute.xlu0 %3959
    %v3962 = vadd.f32 %v3952, %v3960
    %v3963 = vtanh.pop %v3962
    %3965 = vrot.lane.b32.xlu0 %v3963, 64
    %v3966 = vpop.permute.xlu0 %3965
    %v3968 = vmul.f32 %v3951, %v3966
    %v3969 = vld [vmem:[%s13] sm:$0x1]
    %v3971 = vlaneseq
    %v3972 = vshrl.u32 %v3971, 7
    %v3973 = vsub.s32 0, %v3972
    %v3974 = vrot.slane %v3969, %v3973
    %3975 = vrot.lane.b32.xlu0 %v3974, 96
    %v3976 = vpop.permute.xlu0 %3975
    %v3978 = vmul.f32 %v3968, %v3976
    %3980 = vrot.lane.b32.xlu0 %v3978, 32
    %v3981 = vpop.permute.xlu0 %3980
    %v3983 = vsel %vm377, %v3981, 0.0
    %3984 = vadd.xlane.f32.xlu0 %v3983
    %v3985 = vpop.xlane.xlu0 %3984
    %v3986 = vld [vmem:[#allocation4] sm:$0x1]
    %v3988 = vlaneseq
    %v3989 = vshrl.u32 %v3988, 7
    %v3990 = vsub.s32 0, %v3989
    %v3991 = vrot.slane %v3986, %v3990
    %v3993 = vadd.f32 %v3985, %v3991
    %vm3994 = vcmask 1024
    %3995 = vst.msk [vmem:[%s15] sm:$0x3] %vm3994, %v3993
    // Predicated region
    $region94: #{lsmt_model_forward.1} parent=1 // pred_check
      _
    $region95: #{lsmt_model_forward.1} parent=1 // pred_check_branch
      %3997 = sbr.rel (0) target = $region97
    $region96: #{lsmt_model_forward.1} parent=1 // pred_region
      _
    $region97: #{lsmt_model_forward.1} parent=1 // pred_fallthru
      _
    // Predicated region
    $region98: #{lsmt_model_forward.1} parent=1 // pred_check
      _
    $region99: #{lsmt_model_forward.1} parent=1 // pred_check_branch
      %3999 = sbr.rel (0) target = $region101
    $region100: #{lsmt_model_forward.1} parent=1 // pred_region
      _
    $region101: #{lsmt_model_forward.1} parent=1 // pred_fallthru
      _
    %4000 = vsyncpa [#allocation6], 1
    %4001 = vsyncpa [#allocation8], 1
    %4002 = vsyncpa [#allocation11], 1
    %4003 = vsyncpa [#allocation14], 1
    %4004 = vsyncpa [#allocation17], 1

</llo_original>
